<compile_context>
chip_gen: v6e
topology: v6e:2x2x1
jax: 0.10.0
libtpu: 0.0.40
codegen_flags: <defaults>
</compile_context>

<pallas_src>
import functools

import jax
import jax.numpy as jnp
from jax import lax
from jax.experimental import pallas as pl
from jax.experimental.pallas import tpu as pltpu


def _aspp_kernel(x_ref, wbig_ref, wpool_ref, bias_ref, o_ref, *, shifts, H, W, D):
    """shifts: static tuple of (oy, ox) spatial offsets for taps 1..NT-1."""
    f32 = jnp.float32
    Cin = x_ref.shape[-1]
    HW = H * W

    x = x_ref[0]                                  # (H, W, Cin) bf16, lane-dense
    xf = x.reshape(HW, Cin)

    # One wide-N MXU matmul covers the 1x1 branch and every in-bounds tap of
    # the dilated 3x3 branches (output projection already folded into weights).
    r_all = jnp.dot(xf, wbig_ref[...], preferred_element_type=f32)   # (HW, NT*D) f32

    # Slice 0 = sum of all zero-shift (center) taps: no roll, no mask.
    # (HW, D) -> (H, W, D) is layout-free here because W % 8 == 0.
    acc = r_all[:, 0:D].reshape(H, W, D)

    # Hoisted index grids + per-offset validity masks (deduplicated at trace
    # time: only 4 distinct row offsets / 4 distinct col offsets here).
    row_idx = lax.broadcasted_iota(jnp.int32, (H, W, D), 0)
    col_idx = lax.broadcasted_iota(jnp.int32, (H, W, D), 1)
    row_ok = {oy: (row_idx >= -oy) & (row_idx < H - oy) for oy in {s[0] for s in shifts}}
    col_ok = {ox: (col_idx >= -ox) & (col_idx < W - ox) for ox in {s[1] for s in shifts}}

    for k, (oy, ox) in enumerate(shifts):
        r = r_all[:, (k + 1) * D:(k + 2) * D]                         # lane-aligned slice
        # out[i,j] = r[i+oy, j+ox] (zero outside).  On the row-major flattened
        # array this is a single sublane rotation by -(oy*W+ox) mod HW; the
        # wrap-around rows/cols are exactly the ones the mask zeroes.
        s = (-(oy * W + ox)) % HW
        if s:
            r = pltpu.roll(r, s, 0)
        r = r.reshape(H, W, D)
        acc = acc + jnp.where(row_ok[oy] & col_ok[ox], r, 0.0)

    # Global-average-pool branch: bilinear upsample from a 1x1 map == broadcast.
    pooled = jnp.mean(xf.astype(f32), axis=0, keepdims=True)          # (1, Cin)
    img = jnp.dot(pooled, wpool_ref[...], preferred_element_type=f32)  # (1, D)
    acc = acc + (img + bias_ref[...]).reshape(1, 1, D)

    o_ref[0] = acc.astype(o_ref.dtype)


def aspp_forward(x_nchw, params):
    """x_nchw: (B, Cin, H, W); params in PyTorch (OIHW) layout. Returns (B, D, H, W)."""
    B, Cin, H, W = x_nchw.shape
    D = params["w_conv"].shape[0]
    f32 = jnp.float32

    # ---------- host-side weight fusion (amortized across calls) ----------
    # Output 1x1 conv as (5D, D); concat order is [img, a1, a6, a12, a18].
    wo = jnp.transpose(params["w_out"].reshape(D, 5 * D), (1, 0)).astype(f32)
    wo_img, wo_1, wo_6, wo_12, wo_18 = (wo[i * D:(i + 1) * D] for i in range(5))

    def cd(w):    # (D, Cin, 1, 1) -> (Cin, D)
        return jnp.transpose(w.reshape(D, Cin), (1, 0)).astype(f32)

    def taps(w):  # (D, Cin, 3, 3) -> (3, 3, Cin, D)
        return jnp.transpose(w, (2, 3, 1, 0)).astype(f32)

    w_pool = cd(params["w_conv"]) @ wo_img                 # (Cin, D)
    w_center = cd(params["w_a1"]) @ wo_1                   # (Cin, D), grows below

    shift_list, shift_weights = [], []
    for d, w3, wo_b in ((6, params["w_a6"], wo_6),
                        (12, params["w_a12"], wo_12),
                        (18, params["w_a18"], wo_18)):
        t = taps(w3)
        for ky in range(3):
            for kx in range(3):
                oy, ox = (ky - 1) * d, (kx - 1) * d
                if abs(oy) >= H or abs(ox) >= W:
                    continue  # padding == dilation -> tap contributes exactly zero
                w_tap = t[ky, kx] @ wo_b                   # fold output projection
                if oy == 0 and ox == 0:
                    w_center = w_center + w_tap            # no shift -> pre-sum
                else:
                    shift_list.append((oy, ox))
                    shift_weights.append(w_tap)

    w_big = jnp.concatenate([w_center] + shift_weights, axis=1)    # (Cin, NT*D)
    n_taps = 1 + len(shift_list)

    # All biases (incl. the pooled branch's) collapse into one (1, D) vector.
    bias = (params["b_conv"].reshape(1, D) @ wo_img
            + params["b_a1"].reshape(1, D) @ wo_1
            + params["b_a6"].reshape(1, D) @ wo_6
            + params["b_a12"].reshape(1, D) @ wo_12
            + params["b_a18"].reshape(1, D) @ wo_18
            + params["b_out"].reshape(1, D)).astype(f32)

    # bf16 operands (f32 accumulation in every dot): ~2x MXU rate, half the DMA.
    x_nhwc = jnp.transpose(x_nchw, (0, 2, 3, 1)).astype(jnp.bfloat16)
    w_big = w_big.astype(jnp.bfloat16)

    kernel = functools.partial(_aspp_kernel, shifts=tuple(shift_list), H=H, W=W, D=D)

    grid_spec = pltpu.PrefetchScalarGridSpec(
        num_scalar_prefetch=0,
        grid=(B,),
        in_specs=[
            pl.BlockSpec((1, H, W, Cin), lambda b: (b, 0, 0, 0)),
            pl.BlockSpec((Cin, n_taps * D), lambda b: (0, 0)),
            pl.BlockSpec((Cin, D), lambda b: (0, 0)),
            pl.BlockSpec((1, D), lambda b: (0, 0)),
        ],
        out_specs=pl.BlockSpec((1, H, W, D), lambda b: (b, 0, 0, 0)),
    )

    # Counts only the taps actually computed (e.g. d=18 is center-only at 16x16).
    cost = pl.CostEstimate(
        flops=(2 * B * H * W * Cin * n_taps * D            # wide tap matmul
               + 2 * B * Cin * D                            # pooled branch matmul
               + B * H * W * D * (len(shift_list) + 2)),    # accumulate adds
        transcendentals=0,
        bytes_accessed=(2 * B * H * W * Cin                 # bf16 input
                        + 2 * Cin * n_taps * D               # bf16 fused weights
                        + 4 * Cin * D + 4 * D                # f32 pool weight + bias
                        + 4 * B * H * W * D),                # f32 output
    )

    out_nhwc = pl.pallas_call(
        kernel,
        out_shape=jax.ShapeDtypeStruct((B, H, W, D), x_nchw.dtype),
        grid_spec=grid_spec,
        compiler_params=pltpu.CompilerParams(dimension_semantics=("parallel",)),
        cost_estimate=cost,
    )(x_nhwc, w_big, w_pool, bias)

    return jnp.transpose(out_nhwc, (0, 3, 1, 2))


def aspp_reference(x, p):
    """Pure-JAX reference (NCHW, lax convolutions) for correctness checking."""
    B, Cin, H, W = x.shape

    def conv(inp, w, b, dilation=1, padding=0):
        out = lax.conv_general_dilated(
            inp, w, window_strides=(1, 1),
            padding=((padding, padding), (padding, padding)),
            rhs_dilation=(dilation, dilation),
            dimension_numbers=("NCHW", "OIHW", "NCHW"))
        return out + b.reshape(1, -1, 1, 1)

    pooled = jnp.mean(x, axis=(2, 3), keepdims=True)
    img = conv(pooled, p["w_conv"], p["b_conv"])
    img = jnp.broadcast_to(img, (B, img.shape[1], H, W))  # bilinear from 1x1 == broadcast
    a1 = conv(x, p["w_a1"], p["b_a1"])
    a6 = conv(x, p["w_a6"], p["b_a6"], dilation=6, padding=6)
    a12 = conv(x, p["w_a12"], p["b_a12"], dilation=12, padding=12)
    a18 = conv(x, p["w_a18"], p["b_a18"], dilation=18, padding=18)
    cat = jnp.concatenate([img, a1, a6, a12, a18], axis=1)
    return conv(cat, p["w_out"], p["b_out"])


def init_params(key, in_channel, depth):
    ks = jax.random.split(key, 12)

    def conv_w(k, shape):
        fan_in = shape[1] * shape[2] * shape[3]
        return jax.random.normal(k, shape, jnp.float32) / jnp.sqrt(fan_in)

    def conv_b(k, d):
        return 0.01 * jax.random.normal(k, (d,), jnp.float32)

    return {
        "w_conv": conv_w(ks[0], (depth, in_channel, 1, 1)), "b_conv": conv_b(ks[1], depth),
        "w_a1":   conv_w(ks[2], (depth, in_channel, 1, 1)), "b_a1":   conv_b(ks[3], depth),
        "w_a6":   conv_w(ks[4], (depth, in_channel, 3, 3)), "b_a6":   conv_b(ks[5], depth),
        "w_a12":  conv_w(ks[6], (depth, in_channel, 3, 3)), "b_a12":  conv_b(ks[7], depth),
        "w_a18":  conv_w(ks[8], (depth, in_channel, 3, 3)), "b_a18":  conv_b(ks[9], depth),
        "w_out":  conv_w(ks[10], (depth, 5 * depth, 1, 1)), "b_out":  conv_b(ks[11], depth),
    }


if __name__ == "__main__":
    key = jax.random.PRNGKey(0)
    # TPU-lane-friendly scale-down of the module defaults (512 -> 128 in,
    # 256 -> 128 depth) so channel dims stay multiples of 128.
    B, Cin, H, W, D = 2, 128, 16, 16, 128

    kx, kp = jax.random.split(key)
    x = jax.random.normal(kx, (B, Cin, H, W), dtype=jnp.float32)
    params = init_params(kp, Cin, D)

    out = jax.block_until_ready(aspp_forward(x, params))
    ref = jax.block_until_ready(aspp_reference(x, params))

    assert out.shape == (B, D, H, W), out.shape
    rel_err = float(jnp.max(jnp.abs(out - ref)) / (jnp.max(jnp.abs(ref)) + 1e-6))
    assert rel_err < 5e-2, f"mismatch vs reference: rel_err={rel_err}"

    print("KERNEL_OK")
</pallas_src>

<mosaic_0001>
module attributes {stable_mosaic.version = 11 : i64} {
  func.func @_aspp_kernel(%arg0: i32, %arg1: memref<1x16x16x128xbf16, #tpu.memory_space<vmem>>, %arg2: memref<128x2176xbf16, #tpu.memory_space<vmem>>, %arg3: memref<128x128xf32, #tpu.memory_space<vmem>>, %arg4: memref<1x128xf32, #tpu.memory_space<vmem>>, %arg5: memref<1x16x16x128xf32, #tpu.memory_space<vmem>>) attributes {dimension_semantics = [#tpu.dimension_semantics<parallel>], iteration_bounds = array<i64: 2>, scalar_prefetch = 0 : i64, scratch_operands = 0 : i64, tpu.core_type = #tpu.core_type<tc>, window_params = [{transform_indices = @transform_0, window_bounds = array<i64: 1, 16, 16, 128>}, {pipeline_mode = #tpu.pipeline_mode<synchronous>, transform_indices = @transform_1, window_bounds = array<i64: 128, 2176>}, {pipeline_mode = #tpu.pipeline_mode<synchronous>, transform_indices = @transform_2, window_bounds = array<i64: 128, 128>}, {pipeline_mode = #tpu.pipeline_mode<synchronous>, transform_indices = @transform_3, window_bounds = array<i64: 1, 128>}, {transform_indices = @transform_4, window_bounds = array<i64: 1, 16, 16, 128>}]} {
    %c0 = arith.constant 0 : index
    %c0_0 = arith.constant 0 : index
    %c0_1 = arith.constant 0 : index
    %c0_2 = arith.constant 0 : index
    %0 = vector.load %arg1[%c0, %c0_0, %c0_1, %c0_2] : memref<1x16x16x128xbf16, #tpu.memory_space<vmem>>, vector<1x16x16x128xbf16>
    %1 = vector.shape_cast %0 : vector<1x16x16x128xbf16> to vector<16x16x128xbf16>
    %2 = vector.shape_cast %1 : vector<16x16x128xbf16> to vector<256x128xbf16>
    %c0_3 = arith.constant 0 : index
    %c0_4 = arith.constant 0 : index
    %3 = vector.load %arg2[%c0_3, %c0_4] : memref<128x2176xbf16, #tpu.memory_space<vmem>>, vector<128x2176xbf16>
    %cst = arith.constant dense<0.000000e+00> : vector<256x2176xf32>
    %4 = tpu.matmul %2, %3, %cst {dimension_numbers = #tpu.dot_dimension_numbers<[1], [0], [0], [1], [0, 0, 1, 1], [], []>} : vector<256x128xbf16>, vector<128x2176xbf16>, vector<256x2176xf32> -> vector<256x2176xf32>
    %5 = vector.extract_strided_slice %4 {offsets = [0, 0], sizes = [256, 128], strides = [1, 1]} : vector<256x2176xf32> to vector<256x128xf32>
    %6 = vector.shape_cast %5 : vector<256x128xf32> to vector<16x16x128xf32>
    %7 = tpu.iota {dimensions = array<i32: 0>} : vector<16x16x128xi32>
    %8 = tpu.iota {dimensions = array<i32: 1>} : vector<16x16x128xi32>
    %c0_i32 = arith.constant 0 : i32
    %9 = vector.broadcast %c0_i32 : i32 to vector<16x16x128xi32>
    %10 = arith.cmpi sge, %7, %9 : vector<16x16x128xi32>
    %c16_i32 = arith.constant 16 : i32
    %11 = vector.broadcast %c16_i32 : i32 to vector<16x16x128xi32>
    %12 = arith.cmpi slt, %7, %11 : vector<16x16x128xi32>
    %13 = arith.andi %10, %12 : vector<16x16x128xi1>
    %c-6_i32 = arith.constant -6 : i32
    %14 = vector.broadcast %c-6_i32 : i32 to vector<16x16x128xi32>
    %15 = arith.cmpi sge, %7, %14 : vector<16x16x128xi32>
    %c10_i32 = arith.constant 10 : i32
    %16 = vector.broadcast %c10_i32 : i32 to vector<16x16x128xi32>
    %17 = arith.cmpi slt, %7, %16 : vector<16x16x128xi32>
    %18 = arith.andi %15, %17 : vector<16x16x128xi1>
    %c-12_i32 = arith.constant -12 : i32
    %19 = vector.broadcast %c-12_i32 : i32 to vector<16x16x128xi32>
    %20 = arith.cmpi sge, %7, %19 : vector<16x16x128xi32>
    %c4_i32 = arith.constant 4 : i32
    %21 = vector.broadcast %c4_i32 : i32 to vector<16x16x128xi32>
    %22 = arith.cmpi slt, %7, %21 : vector<16x16x128xi32>
    %23 = arith.andi %20, %22 : vector<16x16x128xi1>
    %c12_i32 = arith.constant 12 : i32
    %24 = vector.broadcast %c12_i32 : i32 to vector<16x16x128xi32>
    %25 = arith.cmpi sge, %7, %24 : vector<16x16x128xi32>
    %c28_i32 = arith.constant 28 : i32
    %26 = vector.broadcast %c28_i32 : i32 to vector<16x16x128xi32>
    %27 = arith.cmpi slt, %7, %26 : vector<16x16x128xi32>
    %28 = arith.andi %25, %27 : vector<16x16x128xi1>
    %c6_i32 = arith.constant 6 : i32
    %29 = vector.broadcast %c6_i32 : i32 to vector<16x16x128xi32>
    %30 = arith.cmpi sge, %7, %29 : vector<16x16x128xi32>
    %c22_i32 = arith.constant 22 : i32
    %31 = vector.broadcast %c22_i32 : i32 to vector<16x16x128xi32>
    %32 = arith.cmpi slt, %7, %31 : vector<16x16x128xi32>
    %33 = arith.andi %30, %32 : vector<16x16x128xi1>
    %c0_i32_5 = arith.constant 0 : i32
    %34 = vector.broadcast %c0_i32_5 : i32 to vector<16x16x128xi32>
    %35 = arith.cmpi sge, %8, %34 : vector<16x16x128xi32>
    %c16_i32_6 = arith.constant 16 : i32
    %36 = vector.broadcast %c16_i32_6 : i32 to vector<16x16x128xi32>
    %37 = arith.cmpi slt, %8, %36 : vector<16x16x128xi32>
    %38 = arith.andi %35, %37 : vector<16x16x128xi1>
    %c-6_i32_7 = arith.constant -6 : i32
    %39 = vector.broadcast %c-6_i32_7 : i32 to vector<16x16x128xi32>
    %40 = arith.cmpi sge, %8, %39 : vector<16x16x128xi32>
    %c10_i32_8 = arith.constant 10 : i32
    %41 = vector.broadcast %c10_i32_8 : i32 to vector<16x16x128xi32>
    %42 = arith.cmpi slt, %8, %41 : vector<16x16x128xi32>
    %43 = arith.andi %40, %42 : vector<16x16x128xi1>
    %c-12_i32_9 = arith.constant -12 : i32
    %44 = vector.broadcast %c-12_i32_9 : i32 to vector<16x16x128xi32>
    %45 = arith.cmpi sge, %8, %44 : vector<16x16x128xi32>
    %c4_i32_10 = arith.constant 4 : i32
    %46 = vector.broadcast %c4_i32_10 : i32 to vector<16x16x128xi32>
    %47 = arith.cmpi slt, %8, %46 : vector<16x16x128xi32>
    %48 = arith.andi %45, %47 : vector<16x16x128xi1>
    %c12_i32_11 = arith.constant 12 : i32
    %49 = vector.broadcast %c12_i32_11 : i32 to vector<16x16x128xi32>
    %50 = arith.cmpi sge, %8, %49 : vector<16x16x128xi32>
    %c28_i32_12 = arith.constant 28 : i32
    %51 = vector.broadcast %c28_i32_12 : i32 to vector<16x16x128xi32>
    %52 = arith.cmpi slt, %8, %51 : vector<16x16x128xi32>
    %53 = arith.andi %50, %52 : vector<16x16x128xi1>
    %c6_i32_13 = arith.constant 6 : i32
    %54 = vector.broadcast %c6_i32_13 : i32 to vector<16x16x128xi32>
    %55 = arith.cmpi sge, %8, %54 : vector<16x16x128xi32>
    %c22_i32_14 = arith.constant 22 : i32
    %56 = vector.broadcast %c22_i32_14 : i32 to vector<16x16x128xi32>
    %57 = arith.cmpi slt, %8, %56 : vector<16x16x128xi32>
    %58 = arith.andi %55, %57 : vector<16x16x128xi1>
    %59 = vector.extract_strided_slice %4 {offsets = [0, 128], sizes = [256, 128], strides = [1, 1]} : vector<256x2176xf32> to vector<256x128xf32>
    %c102_i32 = arith.constant 102 : i32
    %60 = tpu.dynamic_rotate %59 by %c102_i32 dim 0 : vector<256x128xf32>, i32 -> vector<256x128xf32>
    %61 = vector.shape_cast %60 : vector<256x128xf32> to vector<16x16x128xf32>
    %62 = arith.andi %33, %58 : vector<16x16x128xi1>
    %cst_15 = arith.constant 0.000000e+00 : f32
    %63 = vector.broadcast %cst_15 : f32 to vector<16x16x128xf32>
    %64 = arith.select %62, %61, %63 : vector<16x16x128xi1>, vector<16x16x128xf32>
    %65 = arith.addf %6, %64 : vector<16x16x128xf32>
    %66 = vector.extract_strided_slice %4 {offsets = [0, 256], sizes = [256, 128], strides = [1, 1]} : vector<256x2176xf32> to vector<256x128xf32>
    %c96_i32 = arith.constant 96 : i32
    %67 = tpu.dynamic_rotate %66 by %c96_i32 dim 0 : vector<256x128xf32>, i32 -> vector<256x128xf32>
    %68 = vector.shape_cast %67 : vector<256x128xf32> to vector<16x16x128xf32>
    %69 = arith.andi %33, %38 : vector<16x16x128xi1>
    %cst_16 = arith.constant 0.000000e+00 : f32
    %70 = vector.broadcast %cst_16 : f32 to vector<16x16x128xf32>
    %71 = arith.select %69, %68, %70 : vector<16x16x128xi1>, vector<16x16x128xf32>
    %72 = arith.addf %65, %71 : vector<16x16x128xf32>
    %73 = vector.extract_strided_slice %4 {offsets = [0, 384], sizes = [256, 128], strides = [1, 1]} : vector<256x2176xf32> to vector<256x128xf32>
    %c90_i32 = arith.constant 90 : i32
    %74 = tpu.dynamic_rotate %73 by %c90_i32 dim 0 : vector<256x128xf32>, i32 -> vector<256x128xf32>
    %75 = vector.shape_cast %74 : vector<256x128xf32> to vector<16x16x128xf32>
    %76 = arith.andi %33, %43 : vector<16x16x128xi1>
    %cst_17 = arith.constant 0.000000e+00 : f32
    %77 = vector.broadcast %cst_17 : f32 to vector<16x16x128xf32>
    %78 = arith.select %76, %75, %77 : vector<16x16x128xi1>, vector<16x16x128xf32>
    %79 = arith.addf %72, %78 : vector<16x16x128xf32>
    %80 = vector.extract_strided_slice %4 {offsets = [0, 512], sizes = [256, 128], strides = [1, 1]} : vector<256x2176xf32> to vector<256x128xf32>
    %c6_i32_18 = arith.constant 6 : i32
    %81 = tpu.dynamic_rotate %80 by %c6_i32_18 dim 0 : vector<256x128xf32>, i32 -> vector<256x128xf32>
    %82 = vector.shape_cast %81 : vector<256x128xf32> to vector<16x16x128xf32>
    %83 = arith.andi %13, %58 : vector<16x16x128xi1>
    %cst_19 = arith.constant 0.000000e+00 : f32
    %84 = vector.broadcast %cst_19 : f32 to vector<16x16x128xf32>
    %85 = arith.select %83, %82, %84 : vector<16x16x128xi1>, vector<16x16x128xf32>
    %86 = arith.addf %79, %85 : vector<16x16x128xf32>
    %87 = vector.extract_strided_slice %4 {offsets = [0, 640], sizes = [256, 128], strides = [1, 1]} : vector<256x2176xf32> to vector<256x128xf32>
    %c250_i32 = arith.constant 250 : i32
    %88 = tpu.dynamic_rotate %87 by %c250_i32 dim 0 : vector<256x128xf32>, i32 -> vector<256x128xf32>
    %89 = vector.shape_cast %88 : vector<256x128xf32> to vector<16x16x128xf32>
    %90 = arith.andi %13, %43 : vector<16x16x128xi1>
    %cst_20 = arith.constant 0.000000e+00 : f32
    %91 = vector.broadcast %cst_20 : f32 to vector<16x16x128xf32>
    %92 = arith.select %90, %89, %91 : vector<16x16x128xi1>, vector<16x16x128xf32>
    %93 = arith.addf %86, %92 : vector<16x16x128xf32>
    %94 = vector.extract_strided_slice %4 {offsets = [0, 768], sizes = [256, 128], strides = [1, 1]} : vector<256x2176xf32> to vector<256x128xf32>
    %c166_i32 = arith.constant 166 : i32
    %95 = tpu.dynamic_rotate %94 by %c166_i32 dim 0 : vector<256x128xf32>, i32 -> vector<256x128xf32>
    %96 = vector.shape_cast %95 : vector<256x128xf32> to vector<16x16x128xf32>
    %97 = arith.andi %18, %58 : vector<16x16x128xi1>
    %cst_21 = arith.constant 0.000000e+00 : f32
    %98 = vector.broadcast %cst_21 : f32 to vector<16x16x128xf32>
    %99 = arith.select %97, %96, %98 : vector<16x16x128xi1>, vector<16x16x128xf32>
    %100 = arith.addf %93, %99 : vector<16x16x128xf32>
    %101 = vector.extract_strided_slice %4 {offsets = [0, 896], sizes = [256, 128], strides = [1, 1]} : vector<256x2176xf32> to vector<256x128xf32>
    %c160_i32 = arith.constant 160 : i32
    %102 = tpu.dynamic_rotate %101 by %c160_i32 dim 0 : vector<256x128xf32>, i32 -> vector<256x128xf32>
    %103 = vector.shape_cast %102 : vector<256x128xf32> to vector<16x16x128xf32>
    %104 = arith.andi %18, %38 : vector<16x16x128xi1>
    %cst_22 = arith.constant 0.000000e+00 : f32
    %105 = vector.broadcast %cst_22 : f32 to vector<16x16x128xf32>
    %106 = arith.select %104, %103, %105 : vector<16x16x128xi1>, vector<16x16x128xf32>
    %107 = arith.addf %100, %106 : vector<16x16x128xf32>
    %108 = vector.extract_strided_slice %4 {offsets = [0, 1024], sizes = [256, 128], strides = [1, 1]} : vector<256x2176xf32> to vector<256x128xf32>
    %c154_i32 = arith.constant 154 : i32
    %109 = tpu.dynamic_rotate %108 by %c154_i32 dim 0 : vector<256x128xf32>, i32 -> vector<256x128xf32>
    %110 = vector.shape_cast %109 : vector<256x128xf32> to vector<16x16x128xf32>
    %111 = arith.andi %18, %43 : vector<16x16x128xi1>
    %cst_23 = arith.constant 0.000000e+00 : f32
    %112 = vector.broadcast %cst_23 : f32 to vector<16x16x128xf32>
    %113 = arith.select %111, %110, %112 : vector<16x16x128xi1>, vector<16x16x128xf32>
    %114 = arith.addf %107, %113 : vector<16x16x128xf32>
    %115 = vector.extract_strided_slice %4 {offsets = [0, 1152], sizes = [256, 128], strides = [1, 1]} : vector<256x2176xf32> to vector<256x128xf32>
    %c204_i32 = arith.constant 204 : i32
    %116 = tpu.dynamic_rotate %115 by %c204_i32 dim 0 : vector<256x128xf32>, i32 -> vector<256x128xf32>
    %117 = vector.shape_cast %116 : vector<256x128xf32> to vector<16x16x128xf32>
    %118 = arith.andi %28, %53 : vector<16x16x128xi1>
    %cst_24 = arith.constant 0.000000e+00 : f32
    %119 = vector.broadcast %cst_24 : f32 to vector<16x16x128xf32>
    %120 = arith.select %118, %117, %119 : vector<16x16x128xi1>, vector<16x16x128xf32>
    %121 = arith.addf %114, %120 : vector<16x16x128xf32>
    %122 = vector.extract_strided_slice %4 {offsets = [0, 1280], sizes = [256, 128], strides = [1, 1]} : vector<256x2176xf32> to vector<256x128xf32>
    %c192_i32 = arith.constant 192 : i32
    %123 = tpu.dynamic_rotate %122 by %c192_i32 dim 0 : vector<256x128xf32>, i32 -> vector<256x128xf32>
    %124 = vector.shape_cast %123 : vector<256x128xf32> to vector<16x16x128xf32>
    %125 = arith.andi %28, %38 : vector<16x16x128xi1>
    %cst_25 = arith.constant 0.000000e+00 : f32
    %126 = vector.broadcast %cst_25 : f32 to vector<16x16x128xf32>
    %127 = arith.select %125, %124, %126 : vector<16x16x128xi1>, vector<16x16x128xf32>
    %128 = arith.addf %121, %127 : vector<16x16x128xf32>
    %129 = vector.extract_strided_slice %4 {offsets = [0, 1408], sizes = [256, 128], strides = [1, 1]} : vector<256x2176xf32> to vector<256x128xf32>
    %c180_i32 = arith.constant 180 : i32
    %130 = tpu.dynamic_rotate %129 by %c180_i32 dim 0 : vector<256x128xf32>, i32 -> vector<256x128xf32>
    %131 = vector.shape_cast %130 : vector<256x128xf32> to vector<16x16x128xf32>
    %132 = arith.andi %28, %48 : vector<16x16x128xi1>
    %cst_26 = arith.constant 0.000000e+00 : f32
    %133 = vector.broadcast %cst_26 : f32 to vector<16x16x128xf32>
    %134 = arith.select %132, %131, %133 : vector<16x16x128xi1>, vector<16x16x128xf32>
    %135 = arith.addf %128, %134 : vector<16x16x128xf32>
    %136 = vector.extract_strided_slice %4 {offsets = [0, 1536], sizes = [256, 128], strides = [1, 1]} : vector<256x2176xf32> to vector<256x128xf32>
    %c12_i32_27 = arith.constant 12 : i32
    %137 = tpu.dynamic_rotate %136 by %c12_i32_27 dim 0 : vector<256x128xf32>, i32 -> vector<256x128xf32>
    %138 = vector.shape_cast %137 : vector<256x128xf32> to vector<16x16x128xf32>
    %139 = arith.andi %13, %53 : vector<16x16x128xi1>
    %cst_28 = arith.constant 0.000000e+00 : f32
    %140 = vector.broadcast %cst_28 : f32 to vector<16x16x128xf32>
    %141 = arith.select %139, %138, %140 : vector<16x16x128xi1>, vector<16x16x128xf32>
    %142 = arith.addf %135, %141 : vector<16x16x128xf32>
    %143 = vector.extract_strided_slice %4 {offsets = [0, 1664], sizes = [256, 128], strides = [1, 1]} : vector<256x2176xf32> to vector<256x128xf32>
    %c244_i32 = arith.constant 244 : i32
    %144 = tpu.dynamic_rotate %143 by %c244_i32 dim 0 : vector<256x128xf32>, i32 -> vector<256x128xf32>
    %145 = vector.shape_cast %144 : vector<256x128xf32> to vector<16x16x128xf32>
    %146 = arith.andi %13, %48 : vector<16x16x128xi1>
    %cst_29 = arith.constant 0.000000e+00 : f32
    %147 = vector.broadcast %cst_29 : f32 to vector<16x16x128xf32>
    %148 = arith.select %146, %145, %147 : vector<16x16x128xi1>, vector<16x16x128xf32>
    %149 = arith.addf %142, %148 : vector<16x16x128xf32>
    %150 = vector.extract_strided_slice %4 {offsets = [0, 1792], sizes = [256, 128], strides = [1, 1]} : vector<256x2176xf32> to vector<256x128xf32>
    %c76_i32 = arith.constant 76 : i32
    %151 = tpu.dynamic_rotate %150 by %c76_i32 dim 0 : vector<256x128xf32>, i32 -> vector<256x128xf32>
    %152 = vector.shape_cast %151 : vector<256x128xf32> to vector<16x16x128xf32>
    %153 = arith.andi %23, %53 : vector<16x16x128xi1>
    %cst_30 = arith.constant 0.000000e+00 : f32
    %154 = vector.broadcast %cst_30 : f32 to vector<16x16x128xf32>
    %155 = arith.select %153, %152, %154 : vector<16x16x128xi1>, vector<16x16x128xf32>
    %156 = arith.addf %149, %155 : vector<16x16x128xf32>
    %157 = vector.extract_strided_slice %4 {offsets = [0, 1920], sizes = [256, 128], strides = [1, 1]} : vector<256x2176xf32> to vector<256x128xf32>
    %c64_i32 = arith.constant 64 : i32
    %158 = tpu.dynamic_rotate %157 by %c64_i32 dim 0 : vector<256x128xf32>, i32 -> vector<256x128xf32>
    %159 = vector.shape_cast %158 : vector<256x128xf32> to vector<16x16x128xf32>
    %160 = arith.andi %23, %38 : vector<16x16x128xi1>
    %cst_31 = arith.constant 0.000000e+00 : f32
    %161 = vector.broadcast %cst_31 : f32 to vector<16x16x128xf32>
    %162 = arith.select %160, %159, %161 : vector<16x16x128xi1>, vector<16x16x128xf32>
    %163 = arith.addf %156, %162 : vector<16x16x128xf32>
    %164 = vector.extract_strided_slice %4 {offsets = [0, 2048], sizes = [256, 128], strides = [1, 1]} : vector<256x2176xf32> to vector<256x128xf32>
    %c52_i32 = arith.constant 52 : i32
    %165 = tpu.dynamic_rotate %164 by %c52_i32 dim 0 : vector<256x128xf32>, i32 -> vector<256x128xf32>
    %166 = vector.shape_cast %165 : vector<256x128xf32> to vector<16x16x128xf32>
    %167 = arith.andi %23, %48 : vector<16x16x128xi1>
    %cst_32 = arith.constant 0.000000e+00 : f32
    %168 = vector.broadcast %cst_32 : f32 to vector<16x16x128xf32>
    %169 = arith.select %167, %166, %168 : vector<16x16x128xi1>, vector<16x16x128xf32>
    %170 = arith.addf %163, %169 : vector<16x16x128xf32>
    %171 = arith.extf %2 : vector<256x128xbf16> to vector<256x128xf32>
    %cst_33 = arith.constant dense<0.000000e+00> : vector<128xf32>
    %172 = vector.multi_reduction <add>, %171, %cst_33 [0] : vector<256x128xf32> to vector<128xf32>
    %173 = vector.shape_cast %172 : vector<128xf32> to vector<1x128xf32>
    %cst_34 = arith.constant 2.560000e+02 : f32
    %174 = vector.broadcast %cst_34 : f32 to vector<1x128xf32>
    %175 = arith.divf %173, %174 : vector<1x128xf32>
    %c0_35 = arith.constant 0 : index
    %c0_36 = arith.constant 0 : index
    %176 = vector.load %arg3[%c0_35, %c0_36] : memref<128x128xf32, #tpu.memory_space<vmem>>, vector<128x128xf32>
    %cst_37 = arith.constant dense<0.000000e+00> : vector<1x128xf32>
    %177 = tpu.matmul %175, %176, %cst_37 {dimension_numbers = #tpu.dot_dimension_numbers<[1], [0], [0], [1], [0, 0, 1, 1], [], []>} : vector<1x128xf32>, vector<128x128xf32>, vector<1x128xf32> -> vector<1x128xf32>
    %c0_38 = arith.constant 0 : index
    %c0_39 = arith.constant 0 : index
    %178 = vector.load %arg4[%c0_38, %c0_39] : memref<1x128xf32, #tpu.memory_space<vmem>>, vector<1x128xf32>
    %179 = arith.addf %177, %178 : vector<1x128xf32>
    %180 = vector.shape_cast %179 : vector<1x128xf32> to vector<1x1x128xf32>
    %181 = vector.broadcast %180 : vector<1x1x128xf32> to vector<16x16x128xf32>
    %182 = arith.addf %170, %181 : vector<16x16x128xf32>
    %c0_40 = arith.constant 0 : index
    %c0_41 = arith.constant 0 : index
    %c0_42 = arith.constant 0 : index
    %c0_43 = arith.constant 0 : index
    %183 = vector.load %arg5[%c0_40, %c0_41, %c0_42, %c0_43] : memref<1x16x16x128xf32, #tpu.memory_space<vmem>>, vector<1x16x16x128xf32>
    %184 = vector.shape_cast %183 : vector<1x16x16x128xf32> to vector<16x16x128xf32>
    %185 = vector.shape_cast %182 : vector<16x16x128xf32> to vector<1x16x16x128xf32>
    tpu.vector_store %arg5[%c0_40, %c0_41, %c0_42, %c0_43], %185 {strides = array<i32>} : memref<1x16x16x128xf32, #tpu.memory_space<vmem>>, vector<1x16x16x128xf32>,
    return
  }
  func.func @transform_0(%arg0: i32) -> (i32, i32, i32, i32) {
    %c0_i32 = arith.constant 0 : i32
    %c0_i32_0 = arith.constant 0 : i32
    %c0_i32_1 = arith.constant 0 : i32
    %c0_i32_2 = arith.constant 0 : i32
    return %arg0, %c0_i32, %c0_i32_0, %c0_i32_1 : i32, i32, i32, i32
  }
  func.func @transform_1(%arg0: i32) -> (i32, i32) {
    %c0_i32 = arith.constant 0 : i32
    %c0_i32_0 = arith.constant 0 : i32
    %c0_i32_1 = arith.constant 0 : i32
    return %c0_i32, %c0_i32_0 : i32, i32
  }
  func.func @transform_2(%arg0: i32) -> (i32, i32) {
    %c0_i32 = arith.constant 0 : i32
    %c0_i32_0 = arith.constant 0 : i32
    %c0_i32_1 = arith.constant 0 : i32
    return %c0_i32, %c0_i32_0 : i32, i32
  }
  func.func @transform_3(%arg0: i32) -> (i32, i32) {
    %c0_i32 = arith.constant 0 : i32
    %c0_i32_0 = arith.constant 0 : i32
    %c0_i32_1 = arith.constant 0 : i32
    return %c0_i32, %c0_i32_0 : i32, i32
  }
  func.func @transform_4(%arg0: i32) -> (i32, i32, i32, i32) {
    %c0_i32 = arith.constant 0 : i32
    %c0_i32_0 = arith.constant 0 : i32
    %c0_i32_1 = arith.constant 0 : i32
    %c0_i32_2 = arith.constant 0 : i32
    return %arg0, %c0_i32, %c0_i32_0, %c0_i32_1 : i32, i32, i32, i32
  }
}

</mosaic_0001>

<llo_original>
// kernel: tpu_custom_call.1
$region0: #{tpu_custom_call.1}
  #allocation0 [shape = 'u32[]', space=smem, size = 0x4, offset = 0x4, fixed_abs, tag = 'smem constant byte address 0x4 - core index']
  #allocation1 [shape = 'u32[144,128]{1,0:T(1,128)}', space=vmem, size = 0x12000, scoped, tag = 'internal scratch']
  %s0 = inlined_call_operand.hbm [shape: bf16[2,16,16,128], index: 0, kind: input, shape index: {}]
  %s1 = inlined_call_operand.hbm [shape: bf16[128,2176], index: 1, kind: input, shape index: {}]
  %s2 = inlined_call_operand.hbm [shape: f32[128,128], index: 2, kind: input, shape index: {}]
  %s3 = inlined_call_operand.vmem [shape: f32[1,128], index: 3, kind: input, shape index: {}]
  %s4 = inlined_call_operand.hbm [shape: f32[2,16,16,128], index: 4, kind: output, shape index: {}]
  %s5 = sld [smem:[#allocation0]]
  $region61: #{tpu_custom_call.1} parent=0
    _
  %s7 = ssub.s32 1, %s5
  %s8 = scalar_select 0, %s7, %s5
  $region1: #{tpu_custom_call.1} parent=0
    #allocation2 [shape = 'u8[131072]{0}', space=vmem, size = 0x20000, scoped, tag = 'input window, operand 0']
    #allocation3 [shape = 's32[2]{0}', space=sflag, size = 0x8, scoped, tag = 'scoped memory for tpu_custom_call.1']
    #allocation4 [shape = 's32[2]{0}', space=sflag, size = 0x8, scoped, tag = 'scoped memory for tpu_custom_call.1']
    #allocation5 [shape = 'u8[557056]{0}', space=vmem, size = 0x88000, scoped, tag = 'input window, operand 1, single buffered']
    #allocation6 [shape = 's32[1]{0}', space=sflag, size = 0x4, scoped, tag = 'scoped memory for tpu_custom_call.1']
    #allocation7 [shape = 'u8[65536]{0}', space=vmem, size = 0x10000, scoped, tag = 'input window, operand 2, single buffered']
    #allocation8 [shape = 'u8[262144]{0}', space=vmem, size = 0x40000, scoped, tag = 'output window, operand 0']
    %9 = vsyncpa [#allocation3], 0
    %s10 = scalar_lea.sflag [#allocation3], 1
    %11 = vsyncpa %s10, 0
    %12 = vsyncpa [#allocation6], 0
    %13 = vsyncpa [#allocation4], 0
    %s14 = scalar_lea.sflag [#allocation4], 1
    %15 = vsyncpa %s14, 0
    loop: start=0, step=1, limit=4
    $region2: #{tpu_custom_call.1} parent=1 // loop_pre_header
      _
    $region3: #{tpu_custom_call.1} parent=1 // loop_header
      %s17 = sphi 0, %s21
      %p18 = scmp.ge.s32.totalorder %s17, 4
      %s27 = sphi 0, %s29
      %s30 = sphi 0, %s27
      %s31 = sphi 0, %s30
      %s47 = sphi 0, %s31
      %s51 = sphi 0, %s51
      %s53 = sphi 0, %s51
      %s54 = sphi 0, %s53
      %s68 = sphi 0, %s54
      %s72 = sphi 0, %s72
      %s74 = sphi 0, %s72
      %s75 = sphi 0, %s74
      %s89 = sphi 0, %s75
      %s93 = sphi 0, %s93
      %s95 = sphi 0, %s93
      %s96 = sphi 0, %s95
      %s110 = sphi 0, %s96
      %s116 = sphi 0, %s118
      %s119 = sphi 0, %s116
      %s120 = sphi 0, %s119
      %s136 = sphi 0, %s120
    $region4: #{tpu_custom_call.1} parent=1 // loop_header_branch
      %20 = sbr.rel (%p18) target = $region8
    $region5: #{tpu_custom_call.1} parent=1 // loop_body
      %s22 = ssub.s32 %s17, 1
      %s23 = ssub.s32 %s17, 2
      %s24 = sadd.s32 %s17, 1
      %s25 = ssub.s32 %s17, %s24
      %p26 = scmp.eq.s32.totalorder %s25, 0
      %s28 = sadd.s32 %s27, 1
      %s29 = scalar_select %p26, %s27, %s28
      %p32 = pneg %p26
      %p33 = scmp.eq.s32.totalorder %s17, 1
      %p34 = por %p32, %p33
      %p35 = scmp.ne.s32.totalorder %s27, %s30
      %p36 = scmp.eq.s32.totalorder %s17, 0
      %p37 = por %p35, %p36
      %p38 = scmp.ne.s32.totalorder %s27, %s30
      %p39 = scmp.eq.s32.totalorder %s22, 1
      %p40 = por %p38, %p39
      %p41 = scmp.ne.s32.totalorder %s30, %s31
      %p42 = scmp.eq.s32.totalorder %s22, 0
      %p43 = por %p41, %p42
      %p44 = scmp.ne.s32.totalorder %s30, %s31
      %p45 = scmp.eq.s32.totalorder %s23, 1
      %p46 = por %p44, %p45
      %p48 = scmp.ne.s32.totalorder %s31, %s47
      %p49 = scmp.eq.s32.totalorder %s23, 0
      %p50 = por %p48, %p49
      %s52 = sadd.s32 %s51, 1
      %p55 = scmp.eq.s32.totalorder %s17, 1
      %p56 = scmp.ne.s32.totalorder %s51, %s53
      %p57 = scmp.eq.s32.totalorder %s17, 0
      %p58 = por %p56, %p57
      %p59 = scmp.ne.s32.totalorder %s51, %s53
      %p60 = scmp.eq.s32.totalorder %s22, 1
      %p61 = por %p59, %p60
      %p62 = scmp.ne.s32.totalorder %s53, %s54
      %p63 = scmp.eq.s32.totalorder %s22, 0
      %p64 = por %p62, %p63
      %p65 = scmp.ne.s32.totalorder %s53, %s54
      %p66 = scmp.eq.s32.totalorder %s23, 1
      %p67 = por %p65, %p66
      %p69 = scmp.ne.s32.totalorder %s54, %s68
      %p70 = scmp.eq.s32.totalorder %s23, 0
      %p71 = por %p69, %p70
      %s73 = sadd.s32 %s72, 1
      %p76 = scmp.eq.s32.totalorder %s17, 1
      %p77 = scmp.ne.s32.totalorder %s72, %s74
      %p78 = scmp.eq.s32.totalorder %s17, 0
      %p79 = por %p77, %p78
      %p80 = scmp.ne.s32.totalorder %s72, %s74
      %p81 = scmp.eq.s32.totalorder %s22, 1
      %p82 = por %p80, %p81
      %p83 = scmp.ne.s32.totalorder %s74, %s75
      %p84 = scmp.eq.s32.totalorder %s22, 0
      %p85 = por %p83, %p84
      %p86 = scmp.ne.s32.totalorder %s74, %s75
      %p87 = scmp.eq.s32.totalorder %s23, 1
      %p88 = por %p86, %p87
      %p90 = scmp.ne.s32.totalorder %s75, %s89
      %p91 = scmp.eq.s32.totalorder %s23, 0
      %p92 = por %p90, %p91
      %s94 = sadd.s32 %s93, 1
      %p97 = scmp.eq.s32.totalorder %s17, 1
      %p98 = scmp.ne.s32.totalorder %s93, %s95
      %p99 = scmp.eq.s32.totalorder %s17, 0
      %p100 = por %p98, %p99
      %p101 = scmp.ne.s32.totalorder %s93, %s95
      %p102 = scmp.eq.s32.totalorder %s22, 1
      %p103 = por %p101, %p102
      %p104 = scmp.ne.s32.totalorder %s95, %s96
      %p105 = scmp.eq.s32.totalorder %s22, 0
      %p106 = por %p104, %p105
      %p107 = scmp.ne.s32.totalorder %s95, %s96
      %p108 = scmp.eq.s32.totalorder %s23, 1
      %p109 = por %p107, %p108
      %p111 = scmp.ne.s32.totalorder %s96, %s110
      %p112 = scmp.eq.s32.totalorder %s23, 0
      %p113 = por %p111, %p112
      %s114 = ssub.s32 %s17, %s24
      %p115 = scmp.eq.s32.totalorder %s114, 0
      %s117 = sadd.s32 %s116, 1
      %s118 = scalar_select %p115, %s116, %s117
      %p121 = pneg %p115
      %p122 = scmp.eq.s32.totalorder %s17, 1
      %p123 = por %p121, %p122
      %p124 = scmp.ne.s32.totalorder %s116, %s119
      %p125 = scmp.eq.s32.totalorder %s17, 0
      %p126 = por %p124, %p125
      %p127 = scmp.ne.s32.totalorder %s116, %s119
      %p128 = scmp.eq.s32.totalorder %s22, 1
      %p129 = por %p127, %p128
      %p130 = scmp.ne.s32.totalorder %s119, %s120
      %p131 = scmp.eq.s32.totalorder %s22, 0
      %p132 = por %p130, %p131
      %p133 = scmp.ne.s32.totalorder %s119, %s120
      %p134 = scmp.eq.s32.totalorder %s23, 1
      %p135 = por %p133, %p134
      %p137 = scmp.ne.s32.totalorder %s120, %s136
      %p138 = scmp.eq.s32.totalorder %s23, 0
      %p139 = por %p137, %p138
      %p140 = scmp.le.s32.totalorder 1, %s17
      %p141 = scmp.lt.s32.totalorder %s17, 3
      %p142 = pnand %p140, %p141
      %p143 = pneg %p142
      // Predicated region
      $region9: #{tpu_custom_call.1} parent=5 // pred_check
        _
      $region10: #{tpu_custom_call.1} parent=5 // pred_check_branch
        %145 = sbr.rel (%p142) target = $region12
      $region11: #{tpu_custom_call.1} parent=5 // pred_region
        %s146 = ssub.s32 %s17, 1
        // Predicated region
        $region13: #{tpu_custom_call.1} parent=11 // pred_check
          %p147 = pneg %p64
        $region14: #{tpu_custom_call.1} parent=11 // pred_check_branch
          %149 = sbr.rel (%p147) target = $region16
        $region15: #{tpu_custom_call.1} parent=11 // pred_region
          %s151 = ssub.s32 17408, 17408
          %152 = vsyncadd [#allocation6], %s151
          %s153 = sshll.u32 [#allocation5], 4
          %s154 = int_to_ptr.vmem [resolvable:$true] %s153
          %159 = dma.hbm_to_vmem [thread:$0]  %s1, 17408, %s154, [#allocation6], 1088, 1088, 68
        $region16: #{tpu_custom_call.1} parent=11 // pred_fallthru
          _
        // Predicated region
        $region17: #{tpu_custom_call.1} parent=11 // pred_check
          %p160 = pneg %p85
        $region18: #{tpu_custom_call.1} parent=11 // pred_check_branch
          %162 = sbr.rel (%p160) target = $region20
        $region19: #{tpu_custom_call.1} parent=11 // pred_region
          %s164 = ssub.s32 2048, 2048
          %165 = vsyncadd [#allocation6], %s164
          %s166 = sshll.u32 [#allocation7], 4
          %s167 = int_to_ptr.vmem [resolvable:$true] %s166
          %172 = dma.hbm_to_vmem [thread:$0]  %s2, 2048, %s167, [#allocation6], 128, 128, 8
        $region20: #{tpu_custom_call.1} parent=11 // pred_fallthru
          _
        // Predicated region
        $region21: #{tpu_custom_call.1} parent=11 // pred_check
          %p173 = pneg %p106
        $region22: #{tpu_custom_call.1} parent=11 // pred_check_branch
          %175 = sbr.rel (%p173) target = $region24
        $region23: #{tpu_custom_call.1} parent=11 // pred_region
          _
        $region24: #{tpu_custom_call.1} parent=11 // pred_fallthru
          _
      $region12: #{tpu_custom_call.1} parent=5 // pred_fallthru
        _
      %p176 = scmp.lt.s32.totalorder %s17, 2
      // Predicated region
      $region25: #{tpu_custom_call.1} parent=5 // pred_check
        %p177 = pneg %p176
      $region26: #{tpu_custom_call.1} parent=5 // pred_check_branch
        %179 = sbr.rel (%p177) target = $region28
      $region27: #{tpu_custom_call.1} parent=5 // pred_region
        // Predicated region
        $region29: #{tpu_custom_call.1} parent=27 // pred_check
          %p180 = pneg %p37
        $region30: #{tpu_custom_call.1} parent=27 // pred_check_branch
          %182 = sbr.rel (%p180) target = $region32
        $region31: #{tpu_custom_call.1} parent=27 // pred_region
          %s183 = sand.u32 %s27, 1
          %s184 = scalar_lea.sflag [#allocation3], %s183
          %s185 = sand.u32 %s27, 1
          %s186 = smul.addr %s185, 128
          %s187 = scalar_lea.vmem [#allocation2], %s186
          %s189 = ssub.s32 2048, 2048
          %190 = vsyncadd %s184, %s189
          %s191 = smul.addr %s17, 32
          %s192 = smul.addr %s191, 64
          %s193 = scalar_lea.hbm %s0, %s192
          %s194 = sshll.u32 %s187, 4
          %s195 = int_to_ptr.vmem [resolvable:$true] %s194
          %200 = dma.hbm_to_vmem [thread:$0]  %s193, 2048, %s195, %s184, 64, 64, 4
        $region32: #{tpu_custom_call.1} parent=27 // pred_fallthru
          _
      $region28: #{tpu_custom_call.1} parent=5 // pred_fallthru
        _
      %p201 = scmp.le.s32.totalorder 1, %s17
      %p202 = scmp.lt.s32.totalorder %s17, 3
      %p203 = pnand %p201, %p202
      %p204 = pneg %p203
      // Predicated region
      $region33: #{tpu_custom_call.1} parent=5 // pred_check
        _
      $region34: #{tpu_custom_call.1} parent=5 // pred_check_branch
        %206 = sbr.rel (%p203) target = $region36
      $region35: #{tpu_custom_call.1} parent=5 // pred_region
        %s207 = ssub.s32 %s17, 1
        %s208 = sand.u32 %s30, 1
        %s209 = scalar_lea.sflag [#allocation3], %s208
        %s210 = sand.u32 %s30, 1
        %s211 = smul.addr %s210, 128
        %s212 = scalar_lea.vmem [#allocation2], %s211
        // Predicated region
        $region37: #{tpu_custom_call.1} parent=35 // pred_check
          %p213 = pneg %p43
        $region38: #{tpu_custom_call.1} parent=35 // pred_check_branch
          %215 = sbr.rel (%p213) target = $region40
        $region39: #{tpu_custom_call.1} parent=35 // pred_region
          %216 = dma.done %s209, 2048
        $region40: #{tpu_custom_call.1} parent=35 // pred_fallthru
          _
        // Predicated region
        $region41: #{tpu_custom_call.1} parent=35 // pred_check
          %p217 = pneg %p64
        $region42: #{tpu_custom_call.1} parent=35 // pred_check_branch
          %219 = sbr.rel (%p217) target = $region44
        $region43: #{tpu_custom_call.1} parent=35 // pred_region
          %220 = dma.done [#allocation6], 17408
        $region44: #{tpu_custom_call.1} parent=35 // pred_fallthru
          _
        // Predicated region
        $region45: #{tpu_custom_call.1} parent=35 // pred_check
          %p221 = pneg %p85
        $region46: #{tpu_custom_call.1} parent=35 // pred_check_branch
          %223 = sbr.rel (%p221) target = $region48
        $region47: #{tpu_custom_call.1} parent=35 // pred_region
          %224 = dma.done [#allocation6], 2048
        $region48: #{tpu_custom_call.1} parent=35 // pred_fallthru
          _
        %s225 = sand.u32 %s30, 1
        %s226 = scalar_lea.sflag [#allocation3], %s225
        %s227 = sand.u32 %s30, 1
        %s228 = smul.addr %s227, 128
        %s229 = scalar_lea.vmem [#allocation2], %s228
        %p230 = pneg %p43
        %p231 = pneg %p40
        %p232 = pneg %p64
        %p233 = pneg %p61
        %p234 = pneg %p85
        %p235 = pneg %p82
        %p236 = pneg %p106
        %p237 = pneg %p103
        %p238 = pneg %p132
        %p239 = pneg %p129
        %s240 = sand.u32 %s119, 1
        %s241 = scalar_lea.sflag [#allocation4], %s240
        %s242 = sand.u32 %s119, 1
        %s243 = smul.addr %s242, 256
        %s244 = scalar_lea.vmem [#allocation8], %s243
        %v246 = vld [vmem:[%s212] sm:$0xf]
        %v247 = vld [vmem:[%s212 + $0x4] sm:$0xf]
        %v248 = vld [vmem:[%s212 + $0x8] sm:$0xf]
        %v249 = vld [vmem:[%s212 + $0xc] sm:$0xf]
        %v250 = vld [vmem:[%s212 + $0x10] sm:$0xf]
        %v251 = vld [vmem:[%s212 + $0x14] sm:$0xf]
        %v252 = vld [vmem:[%s212 + $0x18] sm:$0xf]
        %v253 = vld [vmem:[%s212 + $0x1c] sm:$0xf]
        %v254 = vld [vmem:[%s212 + $0x20] sm:$0xf]
        %v255 = vld [vmem:[%s212 + $0x24] sm:$0xf]
        %v256 = vld [vmem:[%s212 + $0x28] sm:$0xf]
        %v257 = vld [vmem:[%s212 + $0x2c] sm:$0xf]
        %v258 = vld [vmem:[%s212 + $0x30] sm:$0xf]
        %v259 = vld [vmem:[%s212 + $0x34] sm:$0xf]
        %v260 = vld [vmem:[%s212 + $0x38] sm:$0xf]
        %v261 = vld [vmem:[%s212 + $0x3c] sm:$0xf]
        %v262 = vld [vmem:[%s212 + $0x40] sm:$0xf]
        %v263 = vld [vmem:[%s212 + $0x44] sm:$0xf]
        %v264 = vld [vmem:[%s212 + $0x48] sm:$0xf]
        %v265 = vld [vmem:[%s212 + $0x4c] sm:$0xf]
        %v266 = vld [vmem:[%s212 + $0x50] sm:$0xf]
        %v267 = vld [vmem:[%s212 + $0x54] sm:$0xf]
        %v268 = vld [vmem:[%s212 + $0x58] sm:$0xf]
        %v269 = vld [vmem:[%s212 + $0x5c] sm:$0xf]
        %v270 = vld [vmem:[%s212 + $0x60] sm:$0xf]
        %v271 = vld [vmem:[%s212 + $0x64] sm:$0xf]
        %v272 = vld [vmem:[%s212 + $0x68] sm:$0xf]
        %v273 = vld [vmem:[%s212 + $0x6c] sm:$0xf]
        %v274 = vld [vmem:[%s212 + $0x70] sm:$0xf]
        %v275 = vld [vmem:[%s212 + $0x74] sm:$0xf]
        %v276 = vld [vmem:[%s212 + $0x78] sm:$0xf]
        %v277 = vld [vmem:[%s212 + $0x7c] sm:$0xf]
        %v278 = vld [vmem:[#allocation5] sm:$0xff]
        %v279 = vld [vmem:[#allocation5 + $0x8] sm:$0xff]
        %v280 = vld [vmem:[#allocation5 + $0x10] sm:$0xff]
        %v281 = vld [vmem:[#allocation5 + $0x18] sm:$0xff]
        %v282 = vld [vmem:[#allocation5 + $0x20] sm:$0xff]
        %v283 = vld [vmem:[#allocation5 + $0x28] sm:$0xff]
        %v284 = vld [vmem:[#allocation5 + $0x30] sm:$0xff]
        %v285 = vld [vmem:[#allocation5 + $0x38] sm:$0xff]
        %v286 = vld [vmem:[#allocation5 + $0x40] sm:$0xf]
        %v287 = vld [vmem:[#allocation5 + $0x44] sm:$0xff]
        %v288 = vld [vmem:[#allocation5 + $0x4c] sm:$0xff]
        %v289 = vld [vmem:[#allocation5 + $0x54] sm:$0xff]
        %v290 = vld [vmem:[#allocation5 + $0x5c] sm:$0xff]
        %v291 = vld [vmem:[#allocation5 + $0x64] sm:$0xff]
        %v292 = vld [vmem:[#allocation5 + $0x6c] sm:$0xff]
        %v293 = vld [vmem:[#allocation5 + $0x74] sm:$0xff]
        %v294 = vld [vmem:[#allocation5 + $0x7c] sm:$0xff]
        %v295 = vld [vmem:[#allocation5 + $0x84] sm:$0xf]
        %v296 = vld [vmem:[#allocation5 + $0x88] sm:$0xff]
        %v297 = vld [vmem:[#allocation5 + $0x90] sm:$0xff]
        %v298 = vld [vmem:[#allocation5 + $0x98] sm:$0xff]
        %v299 = vld [vmem:[#allocation5 + $0xa0] sm:$0xff]
        %v300 = vld [vmem:[#allocation5 + $0xa8] sm:$0xff]
        %v301 = vld [vmem:[#allocation5 + $0xb0] sm:$0xff]
        %v302 = vld [vmem:[#allocation5 + $0xb8] sm:$0xff]
        %v303 = vld [vmem:[#allocation5 + $0xc0] sm:$0xff]
        %v304 = vld [vmem:[#allocation5 + $0xc8] sm:$0xf]
        %v305 = vld [vmem:[#allocation5 + $0xcc] sm:$0xff]
        %v306 = vld [vmem:[#allocation5 + $0xd4] sm:$0xff]
        %v307 = vld [vmem:[#allocation5 + $0xdc] sm:$0xff]
        %v308 = vld [vmem:[#allocation5 + $0xe4] sm:$0xff]
        %v309 = vld [vmem:[#allocation5 + $0xec] sm:$0xff]
        %v310 = vld [vmem:[#allocation5 + $0xf4] sm:$0xff]
        %v311 = vld [vmem:[#allocation5 + $0xfc] sm:$0xff]
        %v312 = vld [vmem:[#allocation5 + $0x104] sm:$0xff]
        %v313 = vld [vmem:[#allocation5 + $0x10c] sm:$0xf]
        %v314 = vld [vmem:[#allocation5 + $0x110] sm:$0xff]
        %v315 = vld [vmem:[#allocation5 + $0x118] sm:$0xff]
        %v316 = vld [vmem:[#allocation5 + $0x120] sm:$0xff]
        %v317 = vld [vmem:[#allocation5 + $0x128] sm:$0xff]
        %v318 = vld [vmem:[#allocation5 + $0x130] sm:$0xff]
        %v319 = vld [vmem:[#allocation5 + $0x138] sm:$0xff]
        %v320 = vld [vmem:[#allocation5 + $0x140] sm:$0xff]
        %v321 = vld [vmem:[#allocation5 + $0x148] sm:$0xff]
        %v322 = vld [vmem:[#allocation5 + $0x150] sm:$0xf]
        %v323 = vld [vmem:[#allocation5 + $0x154] sm:$0xff]
        %v324 = vld [vmem:[#allocation5 + $0x15c] sm:$0xff]
        %v325 = vld [vmem:[#allocation5 + $0x164] sm:$0xff]
        %v326 = vld [vmem:[#allocation5 + $0x16c] sm:$0xff]
        %v327 = vld [vmem:[#allocation5 + $0x174] sm:$0xff]
        %v328 = vld [vmem:[#allocation5 + $0x17c] sm:$0xff]
        %v329 = vld [vmem:[#allocation5 + $0x184] sm:$0xff]
        %v330 = vld [vmem:[#allocation5 + $0x18c] sm:$0xff]
        %v331 = vld [vmem:[#allocation5 + $0x194] sm:$0xf]
        %v332 = vld [vmem:[#allocation5 + $0x198] sm:$0xff]
        %v333 = vld [vmem:[#allocation5 + $0x1a0] sm:$0xff]
        %v334 = vld [vmem:[#allocation5 + $0x1a8] sm:$0xff]
        %v335 = vld [vmem:[#allocation5 + $0x1b0] sm:$0xff]
        %v336 = vld [vmem:[#allocation5 + $0x1b8] sm:$0xff]
        %v337 = vld [vmem:[#allocation5 + $0x1c0] sm:$0xff]
        %v338 = vld [vmem:[#allocation5 + $0x1c8] sm:$0xff]
        %v339 = vld [vmem:[#allocation5 + $0x1d0] sm:$0xff]
        %v340 = vld [vmem:[#allocation5 + $0x1d8] sm:$0xf]
        %v341 = vld [vmem:[#allocation5 + $0x1dc] sm:$0xff]
        %v342 = vld [vmem:[#allocation5 + $0x1e4] sm:$0xff]
        %v343 = vld [vmem:[#allocation5 + $0x1ec] sm:$0xff]
        %v344 = vld [vmem:[#allocation5 + $0x1f4] sm:$0xff]
        %v345 = vld [vmem:[#allocation5 + $0x1fc] sm:$0xff]
        %v346 = vld [vmem:[#allocation5 + $0x204] sm:$0xff]
        %v347 = vld [vmem:[#allocation5 + $0x20c] sm:$0xff]
        %v348 = vld [vmem:[#allocation5 + $0x214] sm:$0xff]
        %v349 = vld [vmem:[#allocation5 + $0x21c] sm:$0xf]
        %v350 = vld [vmem:[#allocation5 + $0x220] sm:$0xff]
        %v351 = vld [vmem:[#allocation5 + $0x228] sm:$0xff]
        %v352 = vld [vmem:[#allocation5 + $0x230] sm:$0xff]
        %v353 = vld [vmem:[#allocation5 + $0x238] sm:$0xff]
        %v354 = vld [vmem:[#allocation5 + $0x240] sm:$0xff]
        %v355 = vld [vmem:[#allocation5 + $0x248] sm:$0xff]
        %v356 = vld [vmem:[#allocation5 + $0x250] sm:$0xff]
        %v357 = vld [vmem:[#allocation5 + $0x258] sm:$0xff]
        %v358 = vld [vmem:[#allocation5 + $0x260] sm:$0xf]
        %v359 = vld [vmem:[#allocation5 + $0x264] sm:$0xff]
        %v360 = vld [vmem:[#allocation5 + $0x26c] sm:$0xff]
        %v361 = vld [vmem:[#allocation5 + $0x274] sm:$0xff]
        %v362 = vld [vmem:[#allocation5 + $0x27c] sm:$0xff]
        %v363 = vld [vmem:[#allocation5 + $0x284] sm:$0xff]
        %v364 = vld [vmem:[#allocation5 + $0x28c] sm:$0xff]
        %v365 = vld [vmem:[#allocation5 + $0x294] sm:$0xff]
        %v366 = vld [vmem:[#allocation5 + $0x29c] sm:$0xff]
        %v367 = vld [vmem:[#allocation5 + $0x2a4] sm:$0xf]
        %v368 = vld [vmem:[#allocation5 + $0x2a8] sm:$0xff]
        %v369 = vld [vmem:[#allocation5 + $0x2b0] sm:$0xff]
        %v370 = vld [vmem:[#allocation5 + $0x2b8] sm:$0xff]
        %v371 = vld [vmem:[#allocation5 + $0x2c0] sm:$0xff]
        %v372 = vld [vmem:[#allocation5 + $0x2c8] sm:$0xff]
        %v373 = vld [vmem:[#allocation5 + $0x2d0] sm:$0xff]
        %v374 = vld [vmem:[#allocation5 + $0x2d8] sm:$0xff]
        %v375 = vld [vmem:[#allocation5 + $0x2e0] sm:$0xff]
        %v376 = vld [vmem:[#allocation5 + $0x2e8] sm:$0xf]
        %v377 = vld [vmem:[#allocation5 + $0x2ec] sm:$0xff]
        %v378 = vld [vmem:[#allocation5 + $0x2f4] sm:$0xff]
        %v379 = vld [vmem:[#allocation5 + $0x2fc] sm:$0xff]
        %v380 = vld [vmem:[#allocation5 + $0x304] sm:$0xff]
        %v381 = vld [vmem:[#allocation5 + $0x30c] sm:$0xff]
        %v382 = vld [vmem:[#allocation5 + $0x314] sm:$0xff]
        %v383 = vld [vmem:[#allocation5 + $0x31c] sm:$0xff]
        %v384 = vld [vmem:[#allocation5 + $0x324] sm:$0xff]
        %v385 = vld [vmem:[#allocation5 + $0x32c] sm:$0xf]
        %v386 = vld [vmem:[#allocation5 + $0x330] sm:$0xff]
        %v387 = vld [vmem:[#allocation5 + $0x338] sm:$0xff]
        %v388 = vld [vmem:[#allocation5 + $0x340] sm:$0xff]
        %v389 = vld [vmem:[#allocation5 + $0x348] sm:$0xff]
        %v390 = vld [vmem:[#allocation5 + $0x350] sm:$0xff]
        %v391 = vld [vmem:[#allocation5 + $0x358] sm:$0xff]
        %v392 = vld [vmem:[#allocation5 + $0x360] sm:$0xff]
        %v393 = vld [vmem:[#allocation5 + $0x368] sm:$0xff]
        %v394 = vld [vmem:[#allocation5 + $0x370] sm:$0xf]
        %v395 = vld [vmem:[#allocation5 + $0x374] sm:$0xff]
        %v396 = vld [vmem:[#allocation5 + $0x37c] sm:$0xff]
        %v397 = vld [vmem:[#allocation5 + $0x384] sm:$0xff]
        %v398 = vld [vmem:[#allocation5 + $0x38c] sm:$0xff]
        %v399 = vld [vmem:[#allocation5 + $0x394] sm:$0xff]
        %v400 = vld [vmem:[#allocation5 + $0x39c] sm:$0xff]
        %v401 = vld [vmem:[#allocation5 + $0x3a4] sm:$0xff]
        %v402 = vld [vmem:[#allocation5 + $0x3ac] sm:$0xff]
        %v403 = vld [vmem:[#allocation5 + $0x3b4] sm:$0xf]
        %v404 = vld [vmem:[#allocation5 + $0x3b8] sm:$0xff]
        %v405 = vld [vmem:[#allocation5 + $0x3c0] sm:$0xff]
        %v406 = vld [vmem:[#allocation5 + $0x3c8] sm:$0xff]
        %v407 = vld [vmem:[#allocation5 + $0x3d0] sm:$0xff]
        %v408 = vld [vmem:[#allocation5 + $0x3d8] sm:$0xff]
        %v409 = vld [vmem:[#allocation5 + $0x3e0] sm:$0xff]
        %v410 = vld [vmem:[#allocation5 + $0x3e8] sm:$0xff]
        %v411 = vld [vmem:[#allocation5 + $0x3f0] sm:$0xff]
        %v412 = vld [vmem:[#allocation5 + $0x3f8] sm:$0xf]
        %v413 = vld [vmem:[#allocation5 + $0x3fc] sm:$0xff]
        %v414 = vld [vmem:[#allocation5 + $0x404] sm:$0xff]
        %v415 = vld [vmem:[#allocation5 + $0x40c] sm:$0xff]
        %v416 = vld [vmem:[#allocation5 + $0x414] sm:$0xff]
        %v417 = vld [vmem:[#allocation5 + $0x41c] sm:$0xff]
        %v418 = vld [vmem:[#allocation5 + $0x424] sm:$0xff]
        %v419 = vld [vmem:[#allocation5 + $0x42c] sm:$0xff]
        %v420 = vld [vmem:[#allocation5 + $0x434] sm:$0xff]
        %v421 = vld [vmem:[#allocation5 + $0x43c] sm:$0xf]
        %v454 = vunpack.c.l.b16 %v246
        %v455 = vunpack.c.l.b16 %v247
        %v456 = vunpack.c.l.b16 %v248
        %v457 = vunpack.c.l.b16 %v249
        %v458 = vunpack.c.l.b16 %v250
        %v459 = vunpack.c.l.b16 %v251
        %v460 = vunpack.c.l.b16 %v252
        %v461 = vunpack.c.l.b16 %v253
        %v462 = vunpack.c.l.b16 %v254
        %v463 = vunpack.c.l.b16 %v255
        %v464 = vunpack.c.l.b16 %v256
        %v465 = vunpack.c.l.b16 %v257
        %v466 = vunpack.c.l.b16 %v258
        %v467 = vunpack.c.l.b16 %v259
        %v468 = vunpack.c.l.b16 %v260
        %v469 = vunpack.c.l.b16 %v261
        %v470 = vunpack.c.l.b16 %v262
        %v471 = vunpack.c.l.b16 %v263
        %v472 = vunpack.c.l.b16 %v264
        %v473 = vunpack.c.l.b16 %v265
        %v474 = vunpack.c.l.b16 %v266
        %v475 = vunpack.c.l.b16 %v267
        %v476 = vunpack.c.l.b16 %v268
        %v477 = vunpack.c.l.b16 %v269
        %v478 = vunpack.c.l.b16 %v270
        %v479 = vunpack.c.l.b16 %v271
        %v480 = vunpack.c.l.b16 %v272
        %v481 = vunpack.c.l.b16 %v273
        %v482 = vunpack.c.l.b16 %v274
        %v483 = vunpack.c.l.b16 %v275
        %v484 = vunpack.c.l.b16 %v276
        %v485 = vunpack.c.l.b16 %v277
        %v486 = vpack.c.b16 %v455, %v454
        %v487 = vpack.c.b16 %v457, %v456
        %v488 = vpack.c.b16 %v459, %v458
        %v489 = vpack.c.b16 %v461, %v460
        %v490 = vpack.c.b16 %v463, %v462
        %v491 = vpack.c.b16 %v465, %v464
        %v492 = vpack.c.b16 %v467, %v466
        %v493 = vpack.c.b16 %v469, %v468
        %v494 = vpack.c.b16 %v471, %v470
        %v495 = vpack.c.b16 %v473, %v472
        %v496 = vpack.c.b16 %v475, %v474
        %v497 = vpack.c.b16 %v477, %v476
        %v498 = vpack.c.b16 %v479, %v478
        %v499 = vpack.c.b16 %v481, %v480
        %v500 = vpack.c.b16 %v483, %v482
        %v501 = vpack.c.b16 %v485, %v484
        %v662 = vunpack.c.l.b16 %v278
        %v663 = vunpack.c.h.b16 %v278
        %v664 = vunpack.c.l.b16 %v279
        %v665 = vunpack.c.h.b16 %v279
        %v666 = vunpack.c.l.b16 %v280
        %v667 = vunpack.c.h.b16 %v280
        %v668 = vunpack.c.l.b16 %v281
        %v669 = vunpack.c.h.b16 %v281
        %v670 = vunpack.c.l.b16 %v282
        %v671 = vunpack.c.h.b16 %v282
        %v672 = vunpack.c.l.b16 %v283
        %v673 = vunpack.c.h.b16 %v283
        %v674 = vunpack.c.l.b16 %v284
        %v675 = vunpack.c.h.b16 %v284
        %v676 = vunpack.c.l.b16 %v285
        %v677 = vunpack.c.h.b16 %v285
        %v678 = vunpack.c.l.b16 %v286
        %v679 = vunpack.c.l.b16 %v287
        %v680 = vunpack.c.h.b16 %v287
        %v681 = vunpack.c.l.b16 %v288
        %v682 = vunpack.c.h.b16 %v288
        %v683 = vunpack.c.l.b16 %v289
        %v684 = vunpack.c.h.b16 %v289
        %v685 = vunpack.c.l.b16 %v290
        %v686 = vunpack.c.h.b16 %v290
        %v687 = vunpack.c.l.b16 %v291
        %v688 = vunpack.c.h.b16 %v291
        %v689 = vunpack.c.l.b16 %v292
        %v690 = vunpack.c.h.b16 %v292
        %v691 = vunpack.c.l.b16 %v293
        %v692 = vunpack.c.h.b16 %v293
        %v693 = vunpack.c.l.b16 %v294
        %v694 = vunpack.c.h.b16 %v294
        %v695 = vunpack.c.l.b16 %v295
        %v696 = vunpack.c.l.b16 %v296
        %v697 = vunpack.c.h.b16 %v296
        %v698 = vunpack.c.l.b16 %v297
        %v699 = vunpack.c.h.b16 %v297
        %v700 = vunpack.c.l.b16 %v298
        %v701 = vunpack.c.h.b16 %v298
        %v702 = vunpack.c.l.b16 %v299
        %v703 = vunpack.c.h.b16 %v299
        %v704 = vunpack.c.l.b16 %v300
        %v705 = vunpack.c.h.b16 %v300
        %v706 = vunpack.c.l.b16 %v301
        %v707 = vunpack.c.h.b16 %v301
        %v708 = vunpack.c.l.b16 %v302
        %v709 = vunpack.c.h.b16 %v302
        %v710 = vunpack.c.l.b16 %v303
        %v711 = vunpack.c.h.b16 %v303
        %v712 = vunpack.c.l.b16 %v304
        %v713 = vunpack.c.l.b16 %v305
        %v714 = vunpack.c.h.b16 %v305
        %v715 = vunpack.c.l.b16 %v306
        %v716 = vunpack.c.h.b16 %v306
        %v717 = vunpack.c.l.b16 %v307
        %v718 = vunpack.c.h.b16 %v307
        %v719 = vunpack.c.l.b16 %v308
        %v720 = vunpack.c.h.b16 %v308
        %v721 = vunpack.c.l.b16 %v309
        %v722 = vunpack.c.h.b16 %v309
        %v723 = vunpack.c.l.b16 %v310
        %v724 = vunpack.c.h.b16 %v310
        %v725 = vunpack.c.l.b16 %v311
        %v726 = vunpack.c.h.b16 %v311
        %v727 = vunpack.c.l.b16 %v312
        %v728 = vunpack.c.h.b16 %v312
        %v729 = vunpack.c.l.b16 %v313
        %v730 = vunpack.c.l.b16 %v314
        %v731 = vunpack.c.h.b16 %v314
        %v732 = vunpack.c.l.b16 %v315
        %v733 = vunpack.c.h.b16 %v315
        %v734 = vunpack.c.l.b16 %v316
        %v735 = vunpack.c.h.b16 %v316
        %v736 = vunpack.c.l.b16 %v317
        %v737 = vunpack.c.h.b16 %v317
        %v738 = vunpack.c.l.b16 %v318
        %v739 = vunpack.c.h.b16 %v318
        %v740 = vunpack.c.l.b16 %v319
        %v741 = vunpack.c.h.b16 %v319
        %v742 = vunpack.c.l.b16 %v320
        %v743 = vunpack.c.h.b16 %v320
        %v744 = vunpack.c.l.b16 %v321
        %v745 = vunpack.c.h.b16 %v321
        %v746 = vunpack.c.l.b16 %v322
        %v747 = vunpack.c.l.b16 %v323
        %v748 = vunpack.c.h.b16 %v323
        %v749 = vunpack.c.l.b16 %v324
        %v750 = vunpack.c.h.b16 %v324
        %v751 = vunpack.c.l.b16 %v325
        %v752 = vunpack.c.h.b16 %v325
        %v753 = vunpack.c.l.b16 %v326
        %v754 = vunpack.c.h.b16 %v326
        %v755 = vunpack.c.l.b16 %v327
        %v756 = vunpack.c.h.b16 %v327
        %v757 = vunpack.c.l.b16 %v328
        %v758 = vunpack.c.h.b16 %v328
        %v759 = vunpack.c.l.b16 %v329
        %v760 = vunpack.c.h.b16 %v329
        %v761 = vunpack.c.l.b16 %v330
        %v762 = vunpack.c.h.b16 %v330
        %v763 = vunpack.c.l.b16 %v331
        %v764 = vunpack.c.l.b16 %v332
        %v765 = vunpack.c.h.b16 %v332
        %v766 = vunpack.c.l.b16 %v333
        %v767 = vunpack.c.h.b16 %v333
        %v768 = vunpack.c.l.b16 %v334
        %v769 = vunpack.c.h.b16 %v334
        %v770 = vunpack.c.l.b16 %v335
        %v771 = vunpack.c.h.b16 %v335
        %v772 = vunpack.c.l.b16 %v336
        %v773 = vunpack.c.h.b16 %v336
        %v774 = vunpack.c.l.b16 %v337
        %v775 = vunpack.c.h.b16 %v337
        %v776 = vunpack.c.l.b16 %v338
        %v777 = vunpack.c.h.b16 %v338
        %v778 = vunpack.c.l.b16 %v339
        %v779 = vunpack.c.h.b16 %v339
        %v780 = vunpack.c.l.b16 %v340
        %v781 = vunpack.c.l.b16 %v341
        %v782 = vunpack.c.h.b16 %v341
        %v783 = vunpack.c.l.b16 %v342
        %v784 = vunpack.c.h.b16 %v342
        %v785 = vunpack.c.l.b16 %v343
        %v786 = vunpack.c.h.b16 %v343
        %v787 = vunpack.c.l.b16 %v344
        %v788 = vunpack.c.h.b16 %v344
        %v789 = vunpack.c.l.b16 %v345
        %v790 = vunpack.c.h.b16 %v345
        %v791 = vunpack.c.l.b16 %v346
        %v792 = vunpack.c.h.b16 %v346
        %v793 = vunpack.c.l.b16 %v347
        %v794 = vunpack.c.h.b16 %v347
        %v795 = vunpack.c.l.b16 %v348
        %v796 = vunpack.c.h.b16 %v348
        %v797 = vunpack.c.l.b16 %v349
        %v798 = vunpack.c.l.b16 %v350
        %v799 = vunpack.c.h.b16 %v350
        %v800 = vunpack.c.l.b16 %v351
        %v801 = vunpack.c.h.b16 %v351
        %v802 = vunpack.c.l.b16 %v352
        %v803 = vunpack.c.h.b16 %v352
        %v804 = vunpack.c.l.b16 %v353
        %v805 = vunpack.c.h.b16 %v353
        %v806 = vunpack.c.l.b16 %v354
        %v807 = vunpack.c.h.b16 %v354
        %v808 = vunpack.c.l.b16 %v355
        %v809 = vunpack.c.h.b16 %v355
        %v810 = vunpack.c.l.b16 %v356
        %v811 = vunpack.c.h.b16 %v356
        %v812 = vunpack.c.l.b16 %v357
        %v813 = vunpack.c.h.b16 %v357
        %v814 = vunpack.c.l.b16 %v358
        %v815 = vunpack.c.l.b16 %v359
        %v816 = vunpack.c.h.b16 %v359
        %v817 = vunpack.c.l.b16 %v360
        %v818 = vunpack.c.h.b16 %v360
        %v819 = vunpack.c.l.b16 %v361
        %v820 = vunpack.c.h.b16 %v361
        %v821 = vunpack.c.l.b16 %v362
        %v822 = vunpack.c.h.b16 %v362
        %v823 = vunpack.c.l.b16 %v363
        %v824 = vunpack.c.h.b16 %v363
        %v825 = vunpack.c.l.b16 %v364
        %v826 = vunpack.c.h.b16 %v364
        %v827 = vunpack.c.l.b16 %v365
        %v828 = vunpack.c.h.b16 %v365
        %v829 = vunpack.c.l.b16 %v366
        %v830 = vunpack.c.h.b16 %v366
        %v831 = vunpack.c.l.b16 %v367
        %v832 = vunpack.c.l.b16 %v368
        %v833 = vunpack.c.h.b16 %v368
        %v834 = vunpack.c.l.b16 %v369
        %v835 = vunpack.c.h.b16 %v369
        %v836 = vunpack.c.l.b16 %v370
        %v837 = vunpack.c.h.b16 %v370
        %v838 = vunpack.c.l.b16 %v371
        %v839 = vunpack.c.h.b16 %v371
        %v840 = vunpack.c.l.b16 %v372
        %v841 = vunpack.c.h.b16 %v372
        %v842 = vunpack.c.l.b16 %v373
        %v843 = vunpack.c.h.b16 %v373
        %v844 = vunpack.c.l.b16 %v374
        %v845 = vunpack.c.h.b16 %v374
        %v846 = vunpack.c.l.b16 %v375
        %v847 = vunpack.c.h.b16 %v375
        %v848 = vunpack.c.l.b16 %v376
        %v849 = vunpack.c.l.b16 %v377
        %v850 = vunpack.c.h.b16 %v377
        %v851 = vunpack.c.l.b16 %v378
        %v852 = vunpack.c.h.b16 %v378
        %v853 = vunpack.c.l.b16 %v379
        %v854 = vunpack.c.h.b16 %v379
        %v855 = vunpack.c.l.b16 %v380
        %v856 = vunpack.c.h.b16 %v380
        %v857 = vunpack.c.l.b16 %v381
        %v858 = vunpack.c.h.b16 %v381
        %v859 = vunpack.c.l.b16 %v382
        %v860 = vunpack.c.h.b16 %v382
        %v861 = vunpack.c.l.b16 %v383
        %v862 = vunpack.c.h.b16 %v383
        %v863 = vunpack.c.l.b16 %v384
        %v864 = vunpack.c.h.b16 %v384
        %v865 = vunpack.c.l.b16 %v385
        %v866 = vunpack.c.l.b16 %v386
        %v867 = vunpack.c.h.b16 %v386
        %v868 = vunpack.c.l.b16 %v387
        %v869 = vunpack.c.h.b16 %v387
        %v870 = vunpack.c.l.b16 %v388
        %v871 = vunpack.c.h.b16 %v388
        %v872 = vunpack.c.l.b16 %v389
        %v873 = vunpack.c.h.b16 %v389
        %v874 = vunpack.c.l.b16 %v390
        %v875 = vunpack.c.h.b16 %v390
        %v876 = vunpack.c.l.b16 %v391
        %v877 = vunpack.c.h.b16 %v391
        %v878 = vunpack.c.l.b16 %v392
        %v879 = vunpack.c.h.b16 %v392
        %v880 = vunpack.c.l.b16 %v393
        %v881 = vunpack.c.h.b16 %v393
        %v882 = vunpack.c.l.b16 %v394
        %v883 = vunpack.c.l.b16 %v395
        %v884 = vunpack.c.h.b16 %v395
        %v885 = vunpack.c.l.b16 %v396
        %v886 = vunpack.c.h.b16 %v396
        %v887 = vunpack.c.l.b16 %v397
        %v888 = vunpack.c.h.b16 %v397
        %v889 = vunpack.c.l.b16 %v398
        %v890 = vunpack.c.h.b16 %v398
        %v891 = vunpack.c.l.b16 %v399
        %v892 = vunpack.c.h.b16 %v399
        %v893 = vunpack.c.l.b16 %v400
        %v894 = vunpack.c.h.b16 %v400
        %v895 = vunpack.c.l.b16 %v401
        %v896 = vunpack.c.h.b16 %v401
        %v897 = vunpack.c.l.b16 %v402
        %v898 = vunpack.c.h.b16 %v402
        %v899 = vunpack.c.l.b16 %v403
        %v900 = vunpack.c.l.b16 %v404
        %v901 = vunpack.c.h.b16 %v404
        %v902 = vunpack.c.l.b16 %v405
        %v903 = vunpack.c.h.b16 %v405
        %v904 = vunpack.c.l.b16 %v406
        %v905 = vunpack.c.h.b16 %v406
        %v906 = vunpack.c.l.b16 %v407
        %v907 = vunpack.c.h.b16 %v407
        %v908 = vunpack.c.l.b16 %v408
        %v909 = vunpack.c.h.b16 %v408
        %v910 = vunpack.c.l.b16 %v409
        %v911 = vunpack.c.h.b16 %v409
        %v912 = vunpack.c.l.b16 %v410
        %v913 = vunpack.c.h.b16 %v410
        %v914 = vunpack.c.l.b16 %v411
        %v915 = vunpack.c.h.b16 %v411
        %v916 = vunpack.c.l.b16 %v412
        %v917 = vunpack.c.l.b16 %v413
        %v918 = vunpack.c.h.b16 %v413
        %v919 = vunpack.c.l.b16 %v414
        %v920 = vunpack.c.h.b16 %v414
        %v921 = vunpack.c.l.b16 %v415
        %v922 = vunpack.c.h.b16 %v415
        %v923 = vunpack.c.l.b16 %v416
        %v924 = vunpack.c.h.b16 %v416
        %v925 = vunpack.c.l.b16 %v417
        %v926 = vunpack.c.h.b16 %v417
        %v927 = vunpack.c.l.b16 %v418
        %v928 = vunpack.c.h.b16 %v418
        %v929 = vunpack.c.l.b16 %v419
        %v930 = vunpack.c.h.b16 %v419
        %v931 = vunpack.c.l.b16 %v420
        %v932 = vunpack.c.h.b16 %v420
        %v933 = vunpack.c.l.b16 %v421
        %v934 = vpack.c.b16 %v679, %v662
        %v935 = vpack.c.b16 %v680, %v663
        %v936 = vpack.c.b16 %v681, %v664
        %v937 = vpack.c.b16 %v682, %v665
        %v938 = vpack.c.b16 %v683, %v666
        %v939 = vpack.c.b16 %v684, %v667
        %v940 = vpack.c.b16 %v685, %v668
        %v941 = vpack.c.b16 %v686, %v669
        %v942 = vpack.c.b16 %v687, %v670
        %v943 = vpack.c.b16 %v688, %v671
        %v944 = vpack.c.b16 %v689, %v672
        %v945 = vpack.c.b16 %v690, %v673
        %v946 = vpack.c.b16 %v691, %v674
        %v947 = vpack.c.b16 %v692, %v675
        %v948 = vpack.c.b16 %v693, %v676
        %v949 = vpack.c.b16 %v694, %v677
        %v950 = vpack.c.b16 %v695, %v678
        %v951 = vpack.c.b16 %v713, %v696
        %v952 = vpack.c.b16 %v714, %v697
        %v953 = vpack.c.b16 %v715, %v698
        %v954 = vpack.c.b16 %v716, %v699
        %v955 = vpack.c.b16 %v717, %v700
        %v956 = vpack.c.b16 %v718, %v701
        %v957 = vpack.c.b16 %v719, %v702
        %v958 = vpack.c.b16 %v720, %v703
        %v959 = vpack.c.b16 %v721, %v704
        %v960 = vpack.c.b16 %v722, %v705
        %v961 = vpack.c.b16 %v723, %v706
        %v962 = vpack.c.b16 %v724, %v707
        %v963 = vpack.c.b16 %v725, %v708
        %v964 = vpack.c.b16 %v726, %v709
        %v965 = vpack.c.b16 %v727, %v710
        %v966 = vpack.c.b16 %v728, %v711
        %v967 = vpack.c.b16 %v729, %v712
        %v968 = vpack.c.b16 %v747, %v730
        %v969 = vpack.c.b16 %v748, %v731
        %v970 = vpack.c.b16 %v749, %v732
        %v971 = vpack.c.b16 %v750, %v733
        %v972 = vpack.c.b16 %v751, %v734
        %v973 = vpack.c.b16 %v752, %v735
        %v974 = vpack.c.b16 %v753, %v736
        %v975 = vpack.c.b16 %v754, %v737
        %v976 = vpack.c.b16 %v755, %v738
        %v977 = vpack.c.b16 %v756, %v739
        %v978 = vpack.c.b16 %v757, %v740
        %v979 = vpack.c.b16 %v758, %v741
        %v980 = vpack.c.b16 %v759, %v742
        %v981 = vpack.c.b16 %v760, %v743
        %v982 = vpack.c.b16 %v761, %v744
        %v983 = vpack.c.b16 %v762, %v745
        %v984 = vpack.c.b16 %v763, %v746
        %v985 = vpack.c.b16 %v781, %v764
        %v986 = vpack.c.b16 %v782, %v765
        %v987 = vpack.c.b16 %v783, %v766
        %v988 = vpack.c.b16 %v784, %v767
        %v989 = vpack.c.b16 %v785, %v768
        %v990 = vpack.c.b16 %v786, %v769
        %v991 = vpack.c.b16 %v787, %v770
        %v992 = vpack.c.b16 %v788, %v771
        %v993 = vpack.c.b16 %v789, %v772
        %v994 = vpack.c.b16 %v790, %v773
        %v995 = vpack.c.b16 %v791, %v774
        %v996 = vpack.c.b16 %v792, %v775
        %v997 = vpack.c.b16 %v793, %v776
        %v998 = vpack.c.b16 %v794, %v777
        %v999 = vpack.c.b16 %v795, %v778
        %v1000 = vpack.c.b16 %v796, %v779
        %v1001 = vpack.c.b16 %v797, %v780
        %v1002 = vpack.c.b16 %v815, %v798
        %v1003 = vpack.c.b16 %v816, %v799
        %v1004 = vpack.c.b16 %v817, %v800
        %v1005 = vpack.c.b16 %v818, %v801
        %v1006 = vpack.c.b16 %v819, %v802
        %v1007 = vpack.c.b16 %v820, %v803
        %v1008 = vpack.c.b16 %v821, %v804
        %v1009 = vpack.c.b16 %v822, %v805
        %v1010 = vpack.c.b16 %v823, %v806
        %v1011 = vpack.c.b16 %v824, %v807
        %v1012 = vpack.c.b16 %v825, %v808
        %v1013 = vpack.c.b16 %v826, %v809
        %v1014 = vpack.c.b16 %v827, %v810
        %v1015 = vpack.c.b16 %v828, %v811
        %v1016 = vpack.c.b16 %v829, %v812
        %v1017 = vpack.c.b16 %v830, %v813
        %v1018 = vpack.c.b16 %v831, %v814
        %v1019 = vpack.c.b16 %v849, %v832
        %v1020 = vpack.c.b16 %v850, %v833
        %v1021 = vpack.c.b16 %v851, %v834
        %v1022 = vpack.c.b16 %v852, %v835
        %v1023 = vpack.c.b16 %v853, %v836
        %v1024 = vpack.c.b16 %v854, %v837
        %v1025 = vpack.c.b16 %v855, %v838
        %v1026 = vpack.c.b16 %v856, %v839
        %v1027 = vpack.c.b16 %v857, %v840
        %v1028 = vpack.c.b16 %v858, %v841
        %v1029 = vpack.c.b16 %v859, %v842
        %v1030 = vpack.c.b16 %v860, %v843
        %v1031 = vpack.c.b16 %v861, %v844
        %v1032 = vpack.c.b16 %v862, %v845
        %v1033 = vpack.c.b16 %v863, %v846
        %v1034 = vpack.c.b16 %v864, %v847
        %v1035 = vpack.c.b16 %v865, %v848
        %v1036 = vpack.c.b16 %v883, %v866
        %v1037 = vpack.c.b16 %v884, %v867
        %v1038 = vpack.c.b16 %v885, %v868
        %v1039 = vpack.c.b16 %v886, %v869
        %v1040 = vpack.c.b16 %v887, %v870
        %v1041 = vpack.c.b16 %v888, %v871
        %v1042 = vpack.c.b16 %v889, %v872
        %v1043 = vpack.c.b16 %v890, %v873
        %v1044 = vpack.c.b16 %v891, %v874
        %v1045 = vpack.c.b16 %v892, %v875
        %v1046 = vpack.c.b16 %v893, %v876
        %v1047 = vpack.c.b16 %v894, %v877
        %v1048 = vpack.c.b16 %v895, %v878
        %v1049 = vpack.c.b16 %v896, %v879
        %v1050 = vpack.c.b16 %v897, %v880
        %v1051 = vpack.c.b16 %v898, %v881
        %v1052 = vpack.c.b16 %v899, %v882
        %v1053 = vpack.c.b16 %v917, %v900
        %v1054 = vpack.c.b16 %v918, %v901
        %v1055 = vpack.c.b16 %v919, %v902
        %v1056 = vpack.c.b16 %v920, %v903
        %v1057 = vpack.c.b16 %v921, %v904
        %v1058 = vpack.c.b16 %v922, %v905
        %v1059 = vpack.c.b16 %v923, %v906
        %v1060 = vpack.c.b16 %v924, %v907
        %v1061 = vpack.c.b16 %v925, %v908
        %v1062 = vpack.c.b16 %v926, %v909
        %v1063 = vpack.c.b16 %v927, %v910
        %v1064 = vpack.c.b16 %v928, %v911
        %v1065 = vpack.c.b16 %v929, %v912
        %v1066 = vpack.c.b16 %v930, %v913
        %v1067 = vpack.c.b16 %v931, %v914
        %v1068 = vpack.c.b16 %v932, %v915
        %v1069 = vpack.c.b16 %v933, %v916
        %1206 = vmatprep.subr.bf16.mxu0 %v1054
        %1207 = vmatpush1.bf16.msra.mxu0 %v1053
        %1208 = vmatprep.subr.bf16.mxu0 %v1037
        %1209 = vmatpush1.bf16.msra.mxu0 %v1036
        %1210 = vmatprep.subr.bf16.mxu0 %v1020
        %1211 = vmatpush1.bf16.msra.mxu0 %v1019
        %1212 = vmatprep.subr.bf16.mxu0 %v1003
        %1213 = vmatpush1.bf16.msra.mxu0 %v1002
        %1214 = vmatprep.subr.bf16.mxu0 %v986
        %1215 = vmatpush1.bf16.msra.mxu0 %v985
        %1216 = vmatprep.subr.bf16.mxu0 %v969
        %1217 = vmatpush1.bf16.msra.mxu0 %v968
        %1218 = vmatprep.subr.bf16.mxu0 %v952
        %1219 = vmatpush1.bf16.msra.mxu0 %v951
        %1220 = vmatprep.subr.bf16.mxu0 %v935
        %1221 = vmatpush1.bf16.msra.mxu0 %v934
        %1222 = vmatprep.subr.bf16.mxu0 0
        %1223 = vmatpush2.bf16.msra.mxu0 0
        %1224 = vmatprep.subr.bf16.mxu0 0
        %1225 = vmatpush2.bf16.msra.mxu0 0
        %1226 = vmatprep.subr.bf16.mxu0 0
        %1227 = vmatpush2.bf16.msra.mxu0 0
        %1228 = vmatprep.subr.bf16.mxu0 0
        %1229 = vmatpush2.bf16.msra.mxu0 0
        %1230 = vmatprep.subr.bf16.mxu0 0
        %1231 = vmatpush2.bf16.msra.mxu0 0
        %1232 = vmatprep.subr.bf16.mxu0 0
        %1233 = vmatpush2.bf16.msra.mxu0 0
        %1234 = vmatprep.subr.bf16.mxu0 0
        %1235 = vmatpush2.bf16.msra.mxu0 0
        %1236 = vmatprep.subr.bf16.mxu0 0
        %1237 = vmatpush2.bf16.msra.mxu0 0
        %1238 = vmatprep.mubr.bf16.mxu0 0
        %1239 = vmatmul.mubr.bf16.gmra.mxu0 %v486
        %v1240 = vpop.f32.mrf.mxu0
        %v1241 = vadd.f32 0.0, %v1240
        %v1242 = vpop.f32.mrf.mxu0
        %v1243 = vadd.f32 0.0, %v1242
        %v1244 = vpop.f32.mrf.mxu0
        %v1245 = vadd.f32 0.0, %v1244
        %v1246 = vpop.f32.mrf.mxu0
        %v1247 = vadd.f32 0.0, %v1246
        %1248 = vmatprep.mubr.bf16.mxu0 0
        %1249 = vmatmul.mubr.bf16.gmra.mxu0 %v487
        %v1250 = vpop.f32.mrf.mxu0
        %v1251 = vadd.f32 0.0, %v1250
        %v1252 = vpop.f32.mrf.mxu0
        %v1253 = vadd.f32 0.0, %v1252
        %v1254 = vpop.f32.mrf.mxu0
        %v1255 = vadd.f32 0.0, %v1254
        %v1256 = vpop.f32.mrf.mxu0
        %v1257 = vadd.f32 0.0, %v1256
        %1258 = vmatprep.mubr.bf16.mxu0 0
        %1259 = vmatmul.mubr.bf16.gmra.mxu0 %v488
        %v1260 = vpop.f32.mrf.mxu0
        %v1261 = vadd.f32 0.0, %v1260
        %v1262 = vpop.f32.mrf.mxu0
        %v1263 = vadd.f32 0.0, %v1262
        %v1264 = vpop.f32.mrf.mxu0
        %v1265 = vadd.f32 0.0, %v1264
        %v1266 = vpop.f32.mrf.mxu0
        %v1267 = vadd.f32 0.0, %v1266
        %1268 = vmatprep.mubr.bf16.mxu0 0
        %1269 = vmatmul.mubr.bf16.gmra.mxu0 %v489
        %v1270 = vpop.f32.mrf.mxu0
        %v1271 = vadd.f32 0.0, %v1270
        %v1272 = vpop.f32.mrf.mxu0
        %v1273 = vadd.f32 0.0, %v1272
        %v1274 = vpop.f32.mrf.mxu0
        %v1275 = vadd.f32 0.0, %v1274
        %v1276 = vpop.f32.mrf.mxu0
        %v1277 = vadd.f32 0.0, %v1276
        %1278 = vmatprep.mubr.bf16.mxu0 0
        %1279 = vmatmul.mubr.bf16.gmra.mxu0 %v490
        %v1280 = vpop.f32.mrf.mxu0
        %v1281 = vadd.f32 0.0, %v1280
        %v1282 = vpop.f32.mrf.mxu0
        %v1283 = vadd.f32 0.0, %v1282
        %v1284 = vpop.f32.mrf.mxu0
        %v1285 = vadd.f32 0.0, %v1284
        %v1286 = vpop.f32.mrf.mxu0
        %v1287 = vadd.f32 0.0, %v1286
        %1288 = vmatprep.mubr.bf16.mxu0 0
        %1289 = vmatmul.mubr.bf16.gmra.mxu0 %v491
        %v1290 = vpop.f32.mrf.mxu0
        %v1291 = vadd.f32 0.0, %v1290
        %v1292 = vpop.f32.mrf.mxu0
        %v1293 = vadd.f32 0.0, %v1292
        %v1294 = vpop.f32.mrf.mxu0
        %v1295 = vadd.f32 0.0, %v1294
        %v1296 = vpop.f32.mrf.mxu0
        %v1297 = vadd.f32 0.0, %v1296
        %1298 = vmatprep.mubr.bf16.mxu0 0
        %1299 = vmatmul.mubr.bf16.gmra.mxu0 %v492
        %v1300 = vpop.f32.mrf.mxu0
        %v1301 = vadd.f32 0.0, %v1300
        %v1302 = vpop.f32.mrf.mxu0
        %v1303 = vadd.f32 0.0, %v1302
        %v1304 = vpop.f32.mrf.mxu0
        %v1305 = vadd.f32 0.0, %v1304
        %v1306 = vpop.f32.mrf.mxu0
        %v1307 = vadd.f32 0.0, %v1306
        %1308 = vmatprep.mubr.bf16.mxu0 0
        %1309 = vmatmul.mubr.bf16.gmra.mxu0 %v493
        %v1310 = vpop.f32.mrf.mxu0
        %v1311 = vadd.f32 0.0, %v1310
        %v1312 = vpop.f32.mrf.mxu0
        %v1313 = vadd.f32 0.0, %v1312
        %v1314 = vpop.f32.mrf.mxu0
        %v1315 = vadd.f32 0.0, %v1314
        %v1316 = vpop.f32.mrf.mxu0
        %v1317 = vadd.f32 0.0, %v1316
        %1318 = vmatprep.mubr.bf16.mxu0 0
        %1319 = vmatmul.mubr.bf16.gmra.mxu0 %v494
        %v1320 = vpop.f32.mrf.mxu0
        %v1321 = vadd.f32 0.0, %v1320
        %v1322 = vpop.f32.mrf.mxu0
        %v1323 = vadd.f32 0.0, %v1322
        %v1324 = vpop.f32.mrf.mxu0
        %v1325 = vadd.f32 0.0, %v1324
        %v1326 = vpop.f32.mrf.mxu0
        %v1327 = vadd.f32 0.0, %v1326
        %1328 = vmatprep.mubr.bf16.mxu0 0
        %1329 = vmatmul.mubr.bf16.gmra.mxu0 %v495
        %v1330 = vpop.f32.mrf.mxu0
        %v1331 = vadd.f32 0.0, %v1330
        %v1332 = vpop.f32.mrf.mxu0
        %v1333 = vadd.f32 0.0, %v1332
        %v1334 = vpop.f32.mrf.mxu0
        %v1335 = vadd.f32 0.0, %v1334
        %v1336 = vpop.f32.mrf.mxu0
        %v1337 = vadd.f32 0.0, %v1336
        %1338 = vmatprep.mubr.bf16.mxu0 0
        %1339 = vmatmul.mubr.bf16.gmra.mxu0 %v496
        %v1340 = vpop.f32.mrf.mxu0
        %v1341 = vadd.f32 0.0, %v1340
        %v1342 = vpop.f32.mrf.mxu0
        %v1343 = vadd.f32 0.0, %v1342
        %v1344 = vpop.f32.mrf.mxu0
        %v1345 = vadd.f32 0.0, %v1344
        %v1346 = vpop.f32.mrf.mxu0
        %v1347 = vadd.f32 0.0, %v1346
        %1348 = vmatprep.mubr.bf16.mxu0 0
        %1349 = vmatmul.mubr.bf16.gmra.mxu0 %v497
        %v1350 = vpop.f32.mrf.mxu0
        %v1351 = vadd.f32 0.0, %v1350
        %v1352 = vpop.f32.mrf.mxu0
        %v1353 = vadd.f32 0.0, %v1352
        %v1354 = vpop.f32.mrf.mxu0
        %v1355 = vadd.f32 0.0, %v1354
        %v1356 = vpop.f32.mrf.mxu0
        %v1357 = vadd.f32 0.0, %v1356
        %1358 = vmatprep.mubr.bf16.mxu0 0
        %1359 = vmatmul.mubr.bf16.gmra.mxu0 %v498
        %v1360 = vpop.f32.mrf.mxu0
        %v1361 = vadd.f32 0.0, %v1360
        %v1362 = vpop.f32.mrf.mxu0
        %v1363 = vadd.f32 0.0, %v1362
        %v1364 = vpop.f32.mrf.mxu0
        %v1365 = vadd.f32 0.0, %v1364
        %v1366 = vpop.f32.mrf.mxu0
        %v1367 = vadd.f32 0.0, %v1366
        %1368 = vmatprep.mubr.bf16.mxu0 0
        %1369 = vmatmul.mubr.bf16.gmra.mxu0 %v499
        %v1370 = vpop.f32.mrf.mxu0
        %v1371 = vadd.f32 0.0, %v1370
        %v1372 = vpop.f32.mrf.mxu0
        %v1373 = vadd.f32 0.0, %v1372
        %v1374 = vpop.f32.mrf.mxu0
        %v1375 = vadd.f32 0.0, %v1374
        %v1376 = vpop.f32.mrf.mxu0
        %v1377 = vadd.f32 0.0, %v1376
        %1378 = vmatprep.mubr.bf16.mxu0 0
        %1379 = vmatmul.mubr.bf16.gmra.mxu0 %v500
        %v1380 = vpop.f32.mrf.mxu0
        %v1381 = vadd.f32 0.0, %v1380
        %v1382 = vpop.f32.mrf.mxu0
        %v1383 = vadd.f32 0.0, %v1382
        %v1384 = vpop.f32.mrf.mxu0
        %v1385 = vadd.f32 0.0, %v1384
        %v1386 = vpop.f32.mrf.mxu0
        %v1387 = vadd.f32 0.0, %v1386
        %1388 = vmatprep.mubr.bf16.mxu0 0
        %1389 = vmatmul.mubr.bf16.gmra.mxu0 %v501
        %v1390 = vpop.f32.mrf.mxu0
        %v1391 = vadd.f32 0.0, %v1390
        %v1392 = vpop.f32.mrf.mxu0
        %v1393 = vadd.f32 0.0, %v1392
        %v1394 = vpop.f32.mrf.mxu0
        %v1395 = vadd.f32 0.0, %v1394
        %v1396 = vpop.f32.mrf.mxu0
        %v1397 = vadd.f32 0.0, %v1396
        %1398 = vdwg.mxu0
        %1399 = vmatprep.subr.bf16.mxu0 %v1056
        %1400 = vmatpush1.bf16.msra.mxu0 %v1055
        %1401 = vmatprep.subr.bf16.mxu0 %v1039
        %1402 = vmatpush1.bf16.msra.mxu0 %v1038
        %1403 = vmatprep.subr.bf16.mxu0 %v1022
        %1404 = vmatpush1.bf16.msra.mxu0 %v1021
        %1405 = vmatprep.subr.bf16.mxu0 %v1005
        %1406 = vmatpush1.bf16.msra.mxu0 %v1004
        %1407 = vmatprep.subr.bf16.mxu0 %v988
        %1408 = vmatpush1.bf16.msra.mxu0 %v987
        %1409 = vmatprep.subr.bf16.mxu0 %v971
        %1410 = vmatpush1.bf16.msra.mxu0 %v970
        %1411 = vmatprep.subr.bf16.mxu0 %v954
        %1412 = vmatpush1.bf16.msra.mxu0 %v953
        %1413 = vmatprep.subr.bf16.mxu0 %v937
        %1414 = vmatpush1.bf16.msra.mxu0 %v936
        %1415 = vmatprep.subr.bf16.mxu0 0
        %1416 = vmatpush2.bf16.msra.mxu0 0
        %1417 = vmatprep.subr.bf16.mxu0 0
        %1418 = vmatpush2.bf16.msra.mxu0 0
        %1419 = vmatprep.subr.bf16.mxu0 0
        %1420 = vmatpush2.bf16.msra.mxu0 0
        %1421 = vmatprep.subr.bf16.mxu0 0
        %1422 = vmatpush2.bf16.msra.mxu0 0
        %1423 = vmatprep.subr.bf16.mxu0 0
        %1424 = vmatpush2.bf16.msra.mxu0 0
        %1425 = vmatprep.subr.bf16.mxu0 0
        %1426 = vmatpush2.bf16.msra.mxu0 0
        %1427 = vmatprep.subr.bf16.mxu0 0
        %1428 = vmatpush2.bf16.msra.mxu0 0
        %1429 = vmatprep.subr.bf16.mxu0 0
        %1430 = vmatpush2.bf16.msra.mxu0 0
        %1431 = vmatprep.mubr.bf16.mxu0 0
        %1432 = vmatmul.mubr.bf16.gmra.mxu0 %v486
        %v1433 = vpop.f32.mrf.mxu0
        %v1434 = vadd.f32 0.0, %v1433
        %v1435 = vpop.f32.mrf.mxu0
        %v1436 = vadd.f32 0.0, %v1435
        %v1437 = vpop.f32.mrf.mxu0
        %v1438 = vadd.f32 0.0, %v1437
        %v1439 = vpop.f32.mrf.mxu0
        %v1440 = vadd.f32 0.0, %v1439
        %1441 = vmatprep.mubr.bf16.mxu0 0
        %1442 = vmatmul.mubr.bf16.gmra.mxu0 %v487
        %v1443 = vpop.f32.mrf.mxu0
        %v1444 = vadd.f32 0.0, %v1443
        %v1445 = vpop.f32.mrf.mxu0
        %v1446 = vadd.f32 0.0, %v1445
        %v1447 = vpop.f32.mrf.mxu0
        %v1448 = vadd.f32 0.0, %v1447
        %v1449 = vpop.f32.mrf.mxu0
        %v1450 = vadd.f32 0.0, %v1449
        %1451 = vmatprep.mubr.bf16.mxu0 0
        %1452 = vmatmul.mubr.bf16.gmra.mxu0 %v488
        %v1453 = vpop.f32.mrf.mxu0
        %v1454 = vadd.f32 0.0, %v1453
        %v1455 = vpop.f32.mrf.mxu0
        %v1456 = vadd.f32 0.0, %v1455
        %v1457 = vpop.f32.mrf.mxu0
        %v1458 = vadd.f32 0.0, %v1457
        %v1459 = vpop.f32.mrf.mxu0
        %v1460 = vadd.f32 0.0, %v1459
        %1461 = vmatprep.mubr.bf16.mxu0 0
        %1462 = vmatmul.mubr.bf16.gmra.mxu0 %v489
        %v1463 = vpop.f32.mrf.mxu0
        %v1464 = vadd.f32 0.0, %v1463
        %v1465 = vpop.f32.mrf.mxu0
        %v1466 = vadd.f32 0.0, %v1465
        %v1467 = vpop.f32.mrf.mxu0
        %v1468 = vadd.f32 0.0, %v1467
        %v1469 = vpop.f32.mrf.mxu0
        %v1470 = vadd.f32 0.0, %v1469
        %1471 = vmatprep.mubr.bf16.mxu0 0
        %1472 = vmatmul.mubr.bf16.gmra.mxu0 %v490
        %v1473 = vpop.f32.mrf.mxu0
        %v1474 = vadd.f32 0.0, %v1473
        %v1475 = vpop.f32.mrf.mxu0
        %v1476 = vadd.f32 0.0, %v1475
        %v1477 = vpop.f32.mrf.mxu0
        %v1478 = vadd.f32 0.0, %v1477
        %v1479 = vpop.f32.mrf.mxu0
        %v1480 = vadd.f32 0.0, %v1479
        %1481 = vmatprep.mubr.bf16.mxu0 0
        %1482 = vmatmul.mubr.bf16.gmra.mxu0 %v491
        %v1483 = vpop.f32.mrf.mxu0
        %v1484 = vadd.f32 0.0, %v1483
        %v1485 = vpop.f32.mrf.mxu0
        %v1486 = vadd.f32 0.0, %v1485
        %v1487 = vpop.f32.mrf.mxu0
        %v1488 = vadd.f32 0.0, %v1487
        %v1489 = vpop.f32.mrf.mxu0
        %v1490 = vadd.f32 0.0, %v1489
        %1491 = vmatprep.mubr.bf16.mxu0 0
        %1492 = vmatmul.mubr.bf16.gmra.mxu0 %v492
        %v1493 = vpop.f32.mrf.mxu0
        %v1494 = vadd.f32 0.0, %v1493
        %v1495 = vpop.f32.mrf.mxu0
        %v1496 = vadd.f32 0.0, %v1495
        %v1497 = vpop.f32.mrf.mxu0
        %v1498 = vadd.f32 0.0, %v1497
        %v1499 = vpop.f32.mrf.mxu0
        %v1500 = vadd.f32 0.0, %v1499
        %1501 = vmatprep.mubr.bf16.mxu0 0
        %1502 = vmatmul.mubr.bf16.gmra.mxu0 %v493
        %v1503 = vpop.f32.mrf.mxu0
        %v1504 = vadd.f32 0.0, %v1503
        %v1505 = vpop.f32.mrf.mxu0
        %v1506 = vadd.f32 0.0, %v1505
        %v1507 = vpop.f32.mrf.mxu0
        %v1508 = vadd.f32 0.0, %v1507
        %v1509 = vpop.f32.mrf.mxu0
        %v1510 = vadd.f32 0.0, %v1509
        %1511 = vmatprep.mubr.bf16.mxu0 0
        %1512 = vmatmul.mubr.bf16.gmra.mxu0 %v494
        %v1513 = vpop.f32.mrf.mxu0
        %v1514 = vadd.f32 0.0, %v1513
        %v1515 = vpop.f32.mrf.mxu0
        %v1516 = vadd.f32 0.0, %v1515
        %v1517 = vpop.f32.mrf.mxu0
        %v1518 = vadd.f32 0.0, %v1517
        %v1519 = vpop.f32.mrf.mxu0
        %v1520 = vadd.f32 0.0, %v1519
        %1521 = vmatprep.mubr.bf16.mxu0 0
        %1522 = vmatmul.mubr.bf16.gmra.mxu0 %v495
        %v1523 = vpop.f32.mrf.mxu0
        %v1524 = vadd.f32 0.0, %v1523
        %v1525 = vpop.f32.mrf.mxu0
        %v1526 = vadd.f32 0.0, %v1525
        %v1527 = vpop.f32.mrf.mxu0
        %v1528 = vadd.f32 0.0, %v1527
        %v1529 = vpop.f32.mrf.mxu0
        %v1530 = vadd.f32 0.0, %v1529
        %1531 = vmatprep.mubr.bf16.mxu0 0
        %1532 = vmatmul.mubr.bf16.gmra.mxu0 %v496
        %v1533 = vpop.f32.mrf.mxu0
        %v1534 = vadd.f32 0.0, %v1533
        %v1535 = vpop.f32.mrf.mxu0
        %v1536 = vadd.f32 0.0, %v1535
        %v1537 = vpop.f32.mrf.mxu0
        %v1538 = vadd.f32 0.0, %v1537
        %v1539 = vpop.f32.mrf.mxu0
        %v1540 = vadd.f32 0.0, %v1539
        %1541 = vmatprep.mubr.bf16.mxu0 0
        %1542 = vmatmul.mubr.bf16.gmra.mxu0 %v497
        %v1543 = vpop.f32.mrf.mxu0
        %v1544 = vadd.f32 0.0, %v1543
        %v1545 = vpop.f32.mrf.mxu0
        %v1546 = vadd.f32 0.0, %v1545
        %v1547 = vpop.f32.mrf.mxu0
        %v1548 = vadd.f32 0.0, %v1547
        %v1549 = vpop.f32.mrf.mxu0
        %v1550 = vadd.f32 0.0, %v1549
        %1551 = vmatprep.mubr.bf16.mxu0 0
        %1552 = vmatmul.mubr.bf16.gmra.mxu0 %v498
        %v1553 = vpop.f32.mrf.mxu0
        %v1554 = vadd.f32 0.0, %v1553
        %v1555 = vpop.f32.mrf.mxu0
        %v1556 = vadd.f32 0.0, %v1555
        %v1557 = vpop.f32.mrf.mxu0
        %v1558 = vadd.f32 0.0, %v1557
        %v1559 = vpop.f32.mrf.mxu0
        %v1560 = vadd.f32 0.0, %v1559
        %1561 = vmatprep.mubr.bf16.mxu0 0
        %1562 = vmatmul.mubr.bf16.gmra.mxu0 %v499
        %v1563 = vpop.f32.mrf.mxu0
        %v1564 = vadd.f32 0.0, %v1563
        %v1565 = vpop.f32.mrf.mxu0
        %v1566 = vadd.f32 0.0, %v1565
        %v1567 = vpop.f32.mrf.mxu0
        %v1568 = vadd.f32 0.0, %v1567
        %v1569 = vpop.f32.mrf.mxu0
        %v1570 = vadd.f32 0.0, %v1569
        %1571 = vmatprep.mubr.bf16.mxu0 0
        %1572 = vmatmul.mubr.bf16.gmra.mxu0 %v500
        %v1573 = vpop.f32.mrf.mxu0
        %v1574 = vadd.f32 0.0, %v1573
        %v1575 = vpop.f32.mrf.mxu0
        %v1576 = vadd.f32 0.0, %v1575
        %v1577 = vpop.f32.mrf.mxu0
        %v1578 = vadd.f32 0.0, %v1577
        %v1579 = vpop.f32.mrf.mxu0
        %v1580 = vadd.f32 0.0, %v1579
        %1581 = vmatprep.mubr.bf16.mxu0 0
        %1582 = vmatmul.mubr.bf16.gmra.mxu0 %v501
        %v1583 = vpop.f32.mrf.mxu0
        %v1584 = vadd.f32 0.0, %v1583
        %v1585 = vpop.f32.mrf.mxu0
        %v1586 = vadd.f32 0.0, %v1585
        %v1587 = vpop.f32.mrf.mxu0
        %v1588 = vadd.f32 0.0, %v1587
        %v1589 = vpop.f32.mrf.mxu0
        %v1590 = vadd.f32 0.0, %v1589
        %1591 = vdwg.mxu0
        %1592 = vmatprep.subr.bf16.mxu0 %v1058
        %1593 = vmatpush1.bf16.msra.mxu0 %v1057
        %1594 = vmatprep.subr.bf16.mxu0 %v1041
        %1595 = vmatpush1.bf16.msra.mxu0 %v1040
        %1596 = vmatprep.subr.bf16.mxu0 %v1024
        %1597 = vmatpush1.bf16.msra.mxu0 %v1023
        %1598 = vmatprep.subr.bf16.mxu0 %v1007
        %1599 = vmatpush1.bf16.msra.mxu0 %v1006
        %1600 = vmatprep.subr.bf16.mxu0 %v990
        %1601 = vmatpush1.bf16.msra.mxu0 %v989
        %1602 = vmatprep.subr.bf16.mxu0 %v973
        %1603 = vmatpush1.bf16.msra.mxu0 %v972
        %1604 = vmatprep.subr.bf16.mxu0 %v956
        %1605 = vmatpush1.bf16.msra.mxu0 %v955
        %1606 = vmatprep.subr.bf16.mxu0 %v939
        %1607 = vmatpush1.bf16.msra.mxu0 %v938
        %1608 = vmatprep.subr.bf16.mxu0 0
        %1609 = vmatpush2.bf16.msra.mxu0 0
        %1610 = vmatprep.subr.bf16.mxu0 0
        %1611 = vmatpush2.bf16.msra.mxu0 0
        %1612 = vmatprep.subr.bf16.mxu0 0
        %1613 = vmatpush2.bf16.msra.mxu0 0
        %1614 = vmatprep.subr.bf16.mxu0 0
        %1615 = vmatpush2.bf16.msra.mxu0 0
        %1616 = vmatprep.subr.bf16.mxu0 0
        %1617 = vmatpush2.bf16.msra.mxu0 0
        %1618 = vmatprep.subr.bf16.mxu0 0
        %1619 = vmatpush2.bf16.msra.mxu0 0
        %1620 = vmatprep.subr.bf16.mxu0 0
        %1621 = vmatpush2.bf16.msra.mxu0 0
        %1622 = vmatprep.subr.bf16.mxu0 0
        %1623 = vmatpush2.bf16.msra.mxu0 0
        %1624 = vmatprep.mubr.bf16.mxu0 0
        %1625 = vmatmul.mubr.bf16.gmra.mxu0 %v486
        %v1626 = vpop.f32.mrf.mxu0
        %v1627 = vadd.f32 0.0, %v1626
        %v1628 = vpop.f32.mrf.mxu0
        %v1629 = vadd.f32 0.0, %v1628
        %v1630 = vpop.f32.mrf.mxu0
        %v1631 = vadd.f32 0.0, %v1630
        %v1632 = vpop.f32.mrf.mxu0
        %v1633 = vadd.f32 0.0, %v1632
        %1634 = vmatprep.mubr.bf16.mxu0 0
        %1635 = vmatmul.mubr.bf16.gmra.mxu0 %v487
        %v1636 = vpop.f32.mrf.mxu0
        %v1637 = vadd.f32 0.0, %v1636
        %v1638 = vpop.f32.mrf.mxu0
        %v1639 = vadd.f32 0.0, %v1638
        %v1640 = vpop.f32.mrf.mxu0
        %v1641 = vadd.f32 0.0, %v1640
        %v1642 = vpop.f32.mrf.mxu0
        %v1643 = vadd.f32 0.0, %v1642
        %1644 = vmatprep.mubr.bf16.mxu0 0
        %1645 = vmatmul.mubr.bf16.gmra.mxu0 %v488
        %v1646 = vpop.f32.mrf.mxu0
        %v1647 = vadd.f32 0.0, %v1646
        %v1648 = vpop.f32.mrf.mxu0
        %v1649 = vadd.f32 0.0, %v1648
        %v1650 = vpop.f32.mrf.mxu0
        %v1651 = vadd.f32 0.0, %v1650
        %v1652 = vpop.f32.mrf.mxu0
        %v1653 = vadd.f32 0.0, %v1652
        %1654 = vmatprep.mubr.bf16.mxu0 0
        %1655 = vmatmul.mubr.bf16.gmra.mxu0 %v489
        %v1656 = vpop.f32.mrf.mxu0
        %v1657 = vadd.f32 0.0, %v1656
        %v1658 = vpop.f32.mrf.mxu0
        %v1659 = vadd.f32 0.0, %v1658
        %v1660 = vpop.f32.mrf.mxu0
        %v1661 = vadd.f32 0.0, %v1660
        %v1662 = vpop.f32.mrf.mxu0
        %v1663 = vadd.f32 0.0, %v1662
        %1664 = vmatprep.mubr.bf16.mxu0 0
        %1665 = vmatmul.mubr.bf16.gmra.mxu0 %v490
        %v1666 = vpop.f32.mrf.mxu0
        %v1667 = vadd.f32 0.0, %v1666
        %v1668 = vpop.f32.mrf.mxu0
        %v1669 = vadd.f32 0.0, %v1668
        %v1670 = vpop.f32.mrf.mxu0
        %v1671 = vadd.f32 0.0, %v1670
        %v1672 = vpop.f32.mrf.mxu0
        %v1673 = vadd.f32 0.0, %v1672
        %1674 = vmatprep.mubr.bf16.mxu0 0
        %1675 = vmatmul.mubr.bf16.gmra.mxu0 %v491
        %v1676 = vpop.f32.mrf.mxu0
        %v1677 = vadd.f32 0.0, %v1676
        %v1678 = vpop.f32.mrf.mxu0
        %v1679 = vadd.f32 0.0, %v1678
        %v1680 = vpop.f32.mrf.mxu0
        %v1681 = vadd.f32 0.0, %v1680
        %v1682 = vpop.f32.mrf.mxu0
        %v1683 = vadd.f32 0.0, %v1682
        %1684 = vmatprep.mubr.bf16.mxu0 0
        %1685 = vmatmul.mubr.bf16.gmra.mxu0 %v492
        %v1686 = vpop.f32.mrf.mxu0
        %v1687 = vadd.f32 0.0, %v1686
        %v1688 = vpop.f32.mrf.mxu0
        %v1689 = vadd.f32 0.0, %v1688
        %v1690 = vpop.f32.mrf.mxu0
        %v1691 = vadd.f32 0.0, %v1690
        %v1692 = vpop.f32.mrf.mxu0
        %v1693 = vadd.f32 0.0, %v1692
        %1694 = vmatprep.mubr.bf16.mxu0 0
        %1695 = vmatmul.mubr.bf16.gmra.mxu0 %v493
        %v1696 = vpop.f32.mrf.mxu0
        %v1697 = vadd.f32 0.0, %v1696
        %v1698 = vpop.f32.mrf.mxu0
        %v1699 = vadd.f32 0.0, %v1698
        %v1700 = vpop.f32.mrf.mxu0
        %v1701 = vadd.f32 0.0, %v1700
        %v1702 = vpop.f32.mrf.mxu0
        %v1703 = vadd.f32 0.0, %v1702
        %1704 = vmatprep.mubr.bf16.mxu0 0
        %1705 = vmatmul.mubr.bf16.gmra.mxu0 %v494
        %v1706 = vpop.f32.mrf.mxu0
        %v1707 = vadd.f32 0.0, %v1706
        %v1708 = vpop.f32.mrf.mxu0
        %v1709 = vadd.f32 0.0, %v1708
        %v1710 = vpop.f32.mrf.mxu0
        %v1711 = vadd.f32 0.0, %v1710
        %v1712 = vpop.f32.mrf.mxu0
        %v1713 = vadd.f32 0.0, %v1712
        %1714 = vmatprep.mubr.bf16.mxu0 0
        %1715 = vmatmul.mubr.bf16.gmra.mxu0 %v495
        %v1716 = vpop.f32.mrf.mxu0
        %v1717 = vadd.f32 0.0, %v1716
        %v1718 = vpop.f32.mrf.mxu0
        %v1719 = vadd.f32 0.0, %v1718
        %v1720 = vpop.f32.mrf.mxu0
        %v1721 = vadd.f32 0.0, %v1720
        %v1722 = vpop.f32.mrf.mxu0
        %v1723 = vadd.f32 0.0, %v1722
        %1724 = vmatprep.mubr.bf16.mxu0 0
        %1725 = vmatmul.mubr.bf16.gmra.mxu0 %v496
        %v1726 = vpop.f32.mrf.mxu0
        %v1727 = vadd.f32 0.0, %v1726
        %v1728 = vpop.f32.mrf.mxu0
        %v1729 = vadd.f32 0.0, %v1728
        %v1730 = vpop.f32.mrf.mxu0
        %v1731 = vadd.f32 0.0, %v1730
        %v1732 = vpop.f32.mrf.mxu0
        %v1733 = vadd.f32 0.0, %v1732
        %1734 = vmatprep.mubr.bf16.mxu0 0
        %1735 = vmatmul.mubr.bf16.gmra.mxu0 %v497
        %v1736 = vpop.f32.mrf.mxu0
        %v1737 = vadd.f32 0.0, %v1736
        %v1738 = vpop.f32.mrf.mxu0
        %v1739 = vadd.f32 0.0, %v1738
        %v1740 = vpop.f32.mrf.mxu0
        %v1741 = vadd.f32 0.0, %v1740
        %v1742 = vpop.f32.mrf.mxu0
        %v1743 = vadd.f32 0.0, %v1742
        %1744 = vmatprep.mubr.bf16.mxu0 0
        %1745 = vmatmul.mubr.bf16.gmra.mxu0 %v498
        %v1746 = vpop.f32.mrf.mxu0
        %v1747 = vadd.f32 0.0, %v1746
        %v1748 = vpop.f32.mrf.mxu0
        %v1749 = vadd.f32 0.0, %v1748
        %v1750 = vpop.f32.mrf.mxu0
        %v1751 = vadd.f32 0.0, %v1750
        %v1752 = vpop.f32.mrf.mxu0
        %v1753 = vadd.f32 0.0, %v1752
        %1754 = vmatprep.mubr.bf16.mxu0 0
        %1755 = vmatmul.mubr.bf16.gmra.mxu0 %v499
        %v1756 = vpop.f32.mrf.mxu0
        %v1757 = vadd.f32 0.0, %v1756
        %v1758 = vpop.f32.mrf.mxu0
        %v1759 = vadd.f32 0.0, %v1758
        %v1760 = vpop.f32.mrf.mxu0
        %v1761 = vadd.f32 0.0, %v1760
        %v1762 = vpop.f32.mrf.mxu0
        %v1763 = vadd.f32 0.0, %v1762
        %1764 = vmatprep.mubr.bf16.mxu0 0
        %1765 = vmatmul.mubr.bf16.gmra.mxu0 %v500
        %v1766 = vpop.f32.mrf.mxu0
        %v1767 = vadd.f32 0.0, %v1766
        %v1768 = vpop.f32.mrf.mxu0
        %v1769 = vadd.f32 0.0, %v1768
        %v1770 = vpop.f32.mrf.mxu0
        %v1771 = vadd.f32 0.0, %v1770
        %v1772 = vpop.f32.mrf.mxu0
        %v1773 = vadd.f32 0.0, %v1772
        %1774 = vmatprep.mubr.bf16.mxu0 0
        %1775 = vmatmul.mubr.bf16.gmra.mxu0 %v501
        %v1776 = vpop.f32.mrf.mxu0
        %v1777 = vadd.f32 0.0, %v1776
        %v1778 = vpop.f32.mrf.mxu0
        %v1779 = vadd.f32 0.0, %v1778
        %v1780 = vpop.f32.mrf.mxu0
        %v1781 = vadd.f32 0.0, %v1780
        %v1782 = vpop.f32.mrf.mxu0
        %v1783 = vadd.f32 0.0, %v1782
        %1784 = vdwg.mxu0
        %1785 = vmatprep.subr.bf16.mxu0 %v1060
        %1786 = vmatpush1.bf16.msra.mxu0 %v1059
        %1787 = vmatprep.subr.bf16.mxu0 %v1043
        %1788 = vmatpush1.bf16.msra.mxu0 %v1042
        %1789 = vmatprep.subr.bf16.mxu0 %v1026
        %1790 = vmatpush1.bf16.msra.mxu0 %v1025
        %1791 = vmatprep.subr.bf16.mxu0 %v1009
        %1792 = vmatpush1.bf16.msra.mxu0 %v1008
        %1793 = vmatprep.subr.bf16.mxu0 %v992
        %1794 = vmatpush1.bf16.msra.mxu0 %v991
        %1795 = vmatprep.subr.bf16.mxu0 %v975
        %1796 = vmatpush1.bf16.msra.mxu0 %v974
        %1797 = vmatprep.subr.bf16.mxu0 %v958
        %1798 = vmatpush1.bf16.msra.mxu0 %v957
        %1799 = vmatprep.subr.bf16.mxu0 %v941
        %1800 = vmatpush1.bf16.msra.mxu0 %v940
        %1801 = vmatprep.subr.bf16.mxu0 0
        %1802 = vmatpush2.bf16.msra.mxu0 0
        %1803 = vmatprep.subr.bf16.mxu0 0
        %1804 = vmatpush2.bf16.msra.mxu0 0
        %1805 = vmatprep.subr.bf16.mxu0 0
        %1806 = vmatpush2.bf16.msra.mxu0 0
        %1807 = vmatprep.subr.bf16.mxu0 0
        %1808 = vmatpush2.bf16.msra.mxu0 0
        %1809 = vmatprep.subr.bf16.mxu0 0
        %1810 = vmatpush2.bf16.msra.mxu0 0
        %1811 = vmatprep.subr.bf16.mxu0 0
        %1812 = vmatpush2.bf16.msra.mxu0 0
        %1813 = vmatprep.subr.bf16.mxu0 0
        %1814 = vmatpush2.bf16.msra.mxu0 0
        %1815 = vmatprep.subr.bf16.mxu0 0
        %1816 = vmatpush2.bf16.msra.mxu0 0
        %1817 = vmatprep.mubr.bf16.mxu0 0
        %1818 = vmatmul.mubr.bf16.gmra.mxu0 %v486
        %v1819 = vpop.f32.mrf.mxu0
        %v1820 = vadd.f32 0.0, %v1819
        %v1821 = vpop.f32.mrf.mxu0
        %v1822 = vadd.f32 0.0, %v1821
        %v1823 = vpop.f32.mrf.mxu0
        %v1824 = vadd.f32 0.0, %v1823
        %v1825 = vpop.f32.mrf.mxu0
        %v1826 = vadd.f32 0.0, %v1825
        %1827 = vmatprep.mubr.bf16.mxu0 0
        %1828 = vmatmul.mubr.bf16.gmra.mxu0 %v487
        %v1829 = vpop.f32.mrf.mxu0
        %v1830 = vadd.f32 0.0, %v1829
        %v1831 = vpop.f32.mrf.mxu0
        %v1832 = vadd.f32 0.0, %v1831
        %v1833 = vpop.f32.mrf.mxu0
        %v1834 = vadd.f32 0.0, %v1833
        %v1835 = vpop.f32.mrf.mxu0
        %v1836 = vadd.f32 0.0, %v1835
        %1837 = vmatprep.mubr.bf16.mxu0 0
        %1838 = vmatmul.mubr.bf16.gmra.mxu0 %v488
        %v1839 = vpop.f32.mrf.mxu0
        %v1840 = vadd.f32 0.0, %v1839
        %v1841 = vpop.f32.mrf.mxu0
        %v1842 = vadd.f32 0.0, %v1841
        %v1843 = vpop.f32.mrf.mxu0
        %v1844 = vadd.f32 0.0, %v1843
        %v1845 = vpop.f32.mrf.mxu0
        %v1846 = vadd.f32 0.0, %v1845
        %1847 = vmatprep.mubr.bf16.mxu0 0
        %1848 = vmatmul.mubr.bf16.gmra.mxu0 %v489
        %v1849 = vpop.f32.mrf.mxu0
        %v1850 = vadd.f32 0.0, %v1849
        %v1851 = vpop.f32.mrf.mxu0
        %v1852 = vadd.f32 0.0, %v1851
        %v1853 = vpop.f32.mrf.mxu0
        %v1854 = vadd.f32 0.0, %v1853
        %v1855 = vpop.f32.mrf.mxu0
        %v1856 = vadd.f32 0.0, %v1855
        %1857 = vmatprep.mubr.bf16.mxu0 0
        %1858 = vmatmul.mubr.bf16.gmra.mxu0 %v490
        %v1859 = vpop.f32.mrf.mxu0
        %v1860 = vadd.f32 0.0, %v1859
        %v1861 = vpop.f32.mrf.mxu0
        %v1862 = vadd.f32 0.0, %v1861
        %v1863 = vpop.f32.mrf.mxu0
        %v1864 = vadd.f32 0.0, %v1863
        %v1865 = vpop.f32.mrf.mxu0
        %v1866 = vadd.f32 0.0, %v1865
        %1867 = vmatprep.mubr.bf16.mxu0 0
        %1868 = vmatmul.mubr.bf16.gmra.mxu0 %v491
        %v1869 = vpop.f32.mrf.mxu0
        %v1870 = vadd.f32 0.0, %v1869
        %v1871 = vpop.f32.mrf.mxu0
        %v1872 = vadd.f32 0.0, %v1871
        %v1873 = vpop.f32.mrf.mxu0
        %v1874 = vadd.f32 0.0, %v1873
        %v1875 = vpop.f32.mrf.mxu0
        %v1876 = vadd.f32 0.0, %v1875
        %1877 = vmatprep.mubr.bf16.mxu0 0
        %1878 = vmatmul.mubr.bf16.gmra.mxu0 %v492
        %v1879 = vpop.f32.mrf.mxu0
        %v1880 = vadd.f32 0.0, %v1879
        %v1881 = vpop.f32.mrf.mxu0
        %v1882 = vadd.f32 0.0, %v1881
        %v1883 = vpop.f32.mrf.mxu0
        %v1884 = vadd.f32 0.0, %v1883
        %v1885 = vpop.f32.mrf.mxu0
        %v1886 = vadd.f32 0.0, %v1885
        %1887 = vmatprep.mubr.bf16.mxu0 0
        %1888 = vmatmul.mubr.bf16.gmra.mxu0 %v493
        %v1889 = vpop.f32.mrf.mxu0
        %v1890 = vadd.f32 0.0, %v1889
        %v1891 = vpop.f32.mrf.mxu0
        %v1892 = vadd.f32 0.0, %v1891
        %v1893 = vpop.f32.mrf.mxu0
        %v1894 = vadd.f32 0.0, %v1893
        %v1895 = vpop.f32.mrf.mxu0
        %v1896 = vadd.f32 0.0, %v1895
        %1897 = vmatprep.mubr.bf16.mxu0 0
        %1898 = vmatmul.mubr.bf16.gmra.mxu0 %v494
        %v1899 = vpop.f32.mrf.mxu0
        %v1900 = vadd.f32 0.0, %v1899
        %v1901 = vpop.f32.mrf.mxu0
        %v1902 = vadd.f32 0.0, %v1901
        %v1903 = vpop.f32.mrf.mxu0
        %v1904 = vadd.f32 0.0, %v1903
        %v1905 = vpop.f32.mrf.mxu0
        %v1906 = vadd.f32 0.0, %v1905
        %1907 = vmatprep.mubr.bf16.mxu0 0
        %1908 = vmatmul.mubr.bf16.gmra.mxu0 %v495
        %v1909 = vpop.f32.mrf.mxu0
        %v1910 = vadd.f32 0.0, %v1909
        %v1911 = vpop.f32.mrf.mxu0
        %v1912 = vadd.f32 0.0, %v1911
        %v1913 = vpop.f32.mrf.mxu0
        %v1914 = vadd.f32 0.0, %v1913
        %v1915 = vpop.f32.mrf.mxu0
        %v1916 = vadd.f32 0.0, %v1915
        %1917 = vmatprep.mubr.bf16.mxu0 0
        %1918 = vmatmul.mubr.bf16.gmra.mxu0 %v496
        %v1919 = vpop.f32.mrf.mxu0
        %v1920 = vadd.f32 0.0, %v1919
        %v1921 = vpop.f32.mrf.mxu0
        %v1922 = vadd.f32 0.0, %v1921
        %v1923 = vpop.f32.mrf.mxu0
        %v1924 = vadd.f32 0.0, %v1923
        %v1925 = vpop.f32.mrf.mxu0
        %v1926 = vadd.f32 0.0, %v1925
        %1927 = vmatprep.mubr.bf16.mxu0 0
        %1928 = vmatmul.mubr.bf16.gmra.mxu0 %v497
        %v1929 = vpop.f32.mrf.mxu0
        %v1930 = vadd.f32 0.0, %v1929
        %v1931 = vpop.f32.mrf.mxu0
        %v1932 = vadd.f32 0.0, %v1931
        %v1933 = vpop.f32.mrf.mxu0
        %v1934 = vadd.f32 0.0, %v1933
        %v1935 = vpop.f32.mrf.mxu0
        %v1936 = vadd.f32 0.0, %v1935
        %1937 = vmatprep.mubr.bf16.mxu0 0
        %1938 = vmatmul.mubr.bf16.gmra.mxu0 %v498
        %v1939 = vpop.f32.mrf.mxu0
        %v1940 = vadd.f32 0.0, %v1939
        %v1941 = vpop.f32.mrf.mxu0
        %v1942 = vadd.f32 0.0, %v1941
        %v1943 = vpop.f32.mrf.mxu0
        %v1944 = vadd.f32 0.0, %v1943
        %v1945 = vpop.f32.mrf.mxu0
        %v1946 = vadd.f32 0.0, %v1945
        %1947 = vmatprep.mubr.bf16.mxu0 0
        %1948 = vmatmul.mubr.bf16.gmra.mxu0 %v499
        %v1949 = vpop.f32.mrf.mxu0
        %v1950 = vadd.f32 0.0, %v1949
        %v1951 = vpop.f32.mrf.mxu0
        %v1952 = vadd.f32 0.0, %v1951
        %v1953 = vpop.f32.mrf.mxu0
        %v1954 = vadd.f32 0.0, %v1953
        %v1955 = vpop.f32.mrf.mxu0
        %v1956 = vadd.f32 0.0, %v1955
        %1957 = vmatprep.mubr.bf16.mxu0 0
        %1958 = vmatmul.mubr.bf16.gmra.mxu0 %v500
        %v1959 = vpop.f32.mrf.mxu0
        %v1960 = vadd.f32 0.0, %v1959
        %v1961 = vpop.f32.mrf.mxu0
        %v1962 = vadd.f32 0.0, %v1961
        %v1963 = vpop.f32.mrf.mxu0
        %v1964 = vadd.f32 0.0, %v1963
        %v1965 = vpop.f32.mrf.mxu0
        %v1966 = vadd.f32 0.0, %v1965
        %1967 = vmatprep.mubr.bf16.mxu0 0
        %1968 = vmatmul.mubr.bf16.gmra.mxu0 %v501
        %v1969 = vpop.f32.mrf.mxu0
        %v1970 = vadd.f32 0.0, %v1969
        %v1971 = vpop.f32.mrf.mxu0
        %v1972 = vadd.f32 0.0, %v1971
        %v1973 = vpop.f32.mrf.mxu0
        %v1974 = vadd.f32 0.0, %v1973
        %v1975 = vpop.f32.mrf.mxu0
        %v1976 = vadd.f32 0.0, %v1975
        %1977 = vdwg.mxu0
        %1978 = vmatprep.subr.bf16.mxu0 %v1062
        %1979 = vmatpush1.bf16.msra.mxu0 %v1061
        %1980 = vmatprep.subr.bf16.mxu0 %v1045
        %1981 = vmatpush1.bf16.msra.mxu0 %v1044
        %1982 = vmatprep.subr.bf16.mxu0 %v1028
        %1983 = vmatpush1.bf16.msra.mxu0 %v1027
        %1984 = vmatprep.subr.bf16.mxu0 %v1011
        %1985 = vmatpush1.bf16.msra.mxu0 %v1010
        %1986 = vmatprep.subr.bf16.mxu0 %v994
        %1987 = vmatpush1.bf16.msra.mxu0 %v993
        %1988 = vmatprep.subr.bf16.mxu0 %v977
        %1989 = vmatpush1.bf16.msra.mxu0 %v976
        %1990 = vmatprep.subr.bf16.mxu0 %v960
        %1991 = vmatpush1.bf16.msra.mxu0 %v959
        %1992 = vmatprep.subr.bf16.mxu0 %v943
        %1993 = vmatpush1.bf16.msra.mxu0 %v942
        %1994 = vmatprep.subr.bf16.mxu0 0
        %1995 = vmatpush2.bf16.msra.mxu0 0
        %1996 = vmatprep.subr.bf16.mxu0 0
        %1997 = vmatpush2.bf16.msra.mxu0 0
        %1998 = vmatprep.subr.bf16.mxu0 0
        %1999 = vmatpush2.bf16.msra.mxu0 0
        %2000 = vmatprep.subr.bf16.mxu0 0
        %2001 = vmatpush2.bf16.msra.mxu0 0
        %2002 = vmatprep.subr.bf16.mxu0 0
        %2003 = vmatpush2.bf16.msra.mxu0 0
        %2004 = vmatprep.subr.bf16.mxu0 0
        %2005 = vmatpush2.bf16.msra.mxu0 0
        %2006 = vmatprep.subr.bf16.mxu0 0
        %2007 = vmatpush2.bf16.msra.mxu0 0
        %2008 = vmatprep.subr.bf16.mxu0 0
        %2009 = vmatpush2.bf16.msra.mxu0 0
        %2010 = vmatprep.mubr.bf16.mxu0 0
        %2011 = vmatmul.mubr.bf16.gmra.mxu0 %v486
        %v2012 = vpop.f32.mrf.mxu0
        %v2013 = vadd.f32 0.0, %v2012
        %v2014 = vpop.f32.mrf.mxu0
        %v2015 = vadd.f32 0.0, %v2014
        %v2016 = vpop.f32.mrf.mxu0
        %v2017 = vadd.f32 0.0, %v2016
        %v2018 = vpop.f32.mrf.mxu0
        %v2019 = vadd.f32 0.0, %v2018
        %2020 = vmatprep.mubr.bf16.mxu0 0
        %2021 = vmatmul.mubr.bf16.gmra.mxu0 %v487
        %v2022 = vpop.f32.mrf.mxu0
        %v2023 = vadd.f32 0.0, %v2022
        %v2024 = vpop.f32.mrf.mxu0
        %v2025 = vadd.f32 0.0, %v2024
        %v2026 = vpop.f32.mrf.mxu0
        %v2027 = vadd.f32 0.0, %v2026
        %v2028 = vpop.f32.mrf.mxu0
        %v2029 = vadd.f32 0.0, %v2028
        %2030 = vmatprep.mubr.bf16.mxu0 0
        %2031 = vmatmul.mubr.bf16.gmra.mxu0 %v488
        %v2032 = vpop.f32.mrf.mxu0
        %v2033 = vadd.f32 0.0, %v2032
        %v2034 = vpop.f32.mrf.mxu0
        %v2035 = vadd.f32 0.0, %v2034
        %v2036 = vpop.f32.mrf.mxu0
        %v2037 = vadd.f32 0.0, %v2036
        %v2038 = vpop.f32.mrf.mxu0
        %v2039 = vadd.f32 0.0, %v2038
        %2040 = vmatprep.mubr.bf16.mxu0 0
        %2041 = vmatmul.mubr.bf16.gmra.mxu0 %v489
        %v2042 = vpop.f32.mrf.mxu0
        %v2043 = vadd.f32 0.0, %v2042
        %v2044 = vpop.f32.mrf.mxu0
        %v2045 = vadd.f32 0.0, %v2044
        %v2046 = vpop.f32.mrf.mxu0
        %v2047 = vadd.f32 0.0, %v2046
        %v2048 = vpop.f32.mrf.mxu0
        %v2049 = vadd.f32 0.0, %v2048
        %2050 = vmatprep.mubr.bf16.mxu0 0
        %2051 = vmatmul.mubr.bf16.gmra.mxu0 %v490
        %v2052 = vpop.f32.mrf.mxu0
        %v2053 = vadd.f32 0.0, %v2052
        %v2054 = vpop.f32.mrf.mxu0
        %v2055 = vadd.f32 0.0, %v2054
        %v2056 = vpop.f32.mrf.mxu0
        %v2057 = vadd.f32 0.0, %v2056
        %v2058 = vpop.f32.mrf.mxu0
        %v2059 = vadd.f32 0.0, %v2058
        %2060 = vmatprep.mubr.bf16.mxu0 0
        %2061 = vmatmul.mubr.bf16.gmra.mxu0 %v491
        %v2062 = vpop.f32.mrf.mxu0
        %v2063 = vadd.f32 0.0, %v2062
        %v2064 = vpop.f32.mrf.mxu0
        %v2065 = vadd.f32 0.0, %v2064
        %v2066 = vpop.f32.mrf.mxu0
        %v2067 = vadd.f32 0.0, %v2066
        %v2068 = vpop.f32.mrf.mxu0
        %v2069 = vadd.f32 0.0, %v2068
        %2070 = vmatprep.mubr.bf16.mxu0 0
        %2071 = vmatmul.mubr.bf16.gmra.mxu0 %v492
        %v2072 = vpop.f32.mrf.mxu0
        %v2073 = vadd.f32 0.0, %v2072
        %v2074 = vpop.f32.mrf.mxu0
        %v2075 = vadd.f32 0.0, %v2074
        %v2076 = vpop.f32.mrf.mxu0
        %v2077 = vadd.f32 0.0, %v2076
        %v2078 = vpop.f32.mrf.mxu0
        %v2079 = vadd.f32 0.0, %v2078
        %2080 = vmatprep.mubr.bf16.mxu0 0
        %2081 = vmatmul.mubr.bf16.gmra.mxu0 %v493
        %v2082 = vpop.f32.mrf.mxu0
        %v2083 = vadd.f32 0.0, %v2082
        %v2084 = vpop.f32.mrf.mxu0
        %v2085 = vadd.f32 0.0, %v2084
        %v2086 = vpop.f32.mrf.mxu0
        %v2087 = vadd.f32 0.0, %v2086
        %v2088 = vpop.f32.mrf.mxu0
        %v2089 = vadd.f32 0.0, %v2088
        %2090 = vmatprep.mubr.bf16.mxu0 0
        %2091 = vmatmul.mubr.bf16.gmra.mxu0 %v494
        %v2092 = vpop.f32.mrf.mxu0
        %v2093 = vadd.f32 0.0, %v2092
        %v2094 = vpop.f32.mrf.mxu0
        %v2095 = vadd.f32 0.0, %v2094
        %v2096 = vpop.f32.mrf.mxu0
        %v2097 = vadd.f32 0.0, %v2096
        %v2098 = vpop.f32.mrf.mxu0
        %v2099 = vadd.f32 0.0, %v2098
        %2100 = vmatprep.mubr.bf16.mxu0 0
        %2101 = vmatmul.mubr.bf16.gmra.mxu0 %v495
        %v2102 = vpop.f32.mrf.mxu0
        %v2103 = vadd.f32 0.0, %v2102
        %v2104 = vpop.f32.mrf.mxu0
        %v2105 = vadd.f32 0.0, %v2104
        %v2106 = vpop.f32.mrf.mxu0
        %v2107 = vadd.f32 0.0, %v2106
        %v2108 = vpop.f32.mrf.mxu0
        %v2109 = vadd.f32 0.0, %v2108
        %2110 = vmatprep.mubr.bf16.mxu0 0
        %2111 = vmatmul.mubr.bf16.gmra.mxu0 %v496
        %v2112 = vpop.f32.mrf.mxu0
        %v2113 = vadd.f32 0.0, %v2112
        %v2114 = vpop.f32.mrf.mxu0
        %v2115 = vadd.f32 0.0, %v2114
        %v2116 = vpop.f32.mrf.mxu0
        %v2117 = vadd.f32 0.0, %v2116
        %v2118 = vpop.f32.mrf.mxu0
        %v2119 = vadd.f32 0.0, %v2118
        %2120 = vmatprep.mubr.bf16.mxu0 0
        %2121 = vmatmul.mubr.bf16.gmra.mxu0 %v497
        %v2122 = vpop.f32.mrf.mxu0
        %v2123 = vadd.f32 0.0, %v2122
        %v2124 = vpop.f32.mrf.mxu0
        %v2125 = vadd.f32 0.0, %v2124
        %v2126 = vpop.f32.mrf.mxu0
        %v2127 = vadd.f32 0.0, %v2126
        %v2128 = vpop.f32.mrf.mxu0
        %v2129 = vadd.f32 0.0, %v2128
        %2130 = vmatprep.mubr.bf16.mxu0 0
        %2131 = vmatmul.mubr.bf16.gmra.mxu0 %v498
        %v2132 = vpop.f32.mrf.mxu0
        %v2133 = vadd.f32 0.0, %v2132
        %v2134 = vpop.f32.mrf.mxu0
        %v2135 = vadd.f32 0.0, %v2134
        %v2136 = vpop.f32.mrf.mxu0
        %v2137 = vadd.f32 0.0, %v2136
        %v2138 = vpop.f32.mrf.mxu0
        %v2139 = vadd.f32 0.0, %v2138
        %2140 = vmatprep.mubr.bf16.mxu0 0
        %2141 = vmatmul.mubr.bf16.gmra.mxu0 %v499
        %v2142 = vpop.f32.mrf.mxu0
        %v2143 = vadd.f32 0.0, %v2142
        %v2144 = vpop.f32.mrf.mxu0
        %v2145 = vadd.f32 0.0, %v2144
        %v2146 = vpop.f32.mrf.mxu0
        %v2147 = vadd.f32 0.0, %v2146
        %v2148 = vpop.f32.mrf.mxu0
        %v2149 = vadd.f32 0.0, %v2148
        %2150 = vmatprep.mubr.bf16.mxu0 0
        %2151 = vmatmul.mubr.bf16.gmra.mxu0 %v500
        %v2152 = vpop.f32.mrf.mxu0
        %v2153 = vadd.f32 0.0, %v2152
        %v2154 = vpop.f32.mrf.mxu0
        %v2155 = vadd.f32 0.0, %v2154
        %v2156 = vpop.f32.mrf.mxu0
        %v2157 = vadd.f32 0.0, %v2156
        %v2158 = vpop.f32.mrf.mxu0
        %v2159 = vadd.f32 0.0, %v2158
        %2160 = vmatprep.mubr.bf16.mxu0 0
        %2161 = vmatmul.mubr.bf16.gmra.mxu0 %v501
        %v2162 = vpop.f32.mrf.mxu0
        %v2163 = vadd.f32 0.0, %v2162
        %v2164 = vpop.f32.mrf.mxu0
        %v2165 = vadd.f32 0.0, %v2164
        %v2166 = vpop.f32.mrf.mxu0
        %v2167 = vadd.f32 0.0, %v2166
        %v2168 = vpop.f32.mrf.mxu0
        %v2169 = vadd.f32 0.0, %v2168
        %2170 = vdwg.mxu0
        %2171 = vmatprep.subr.bf16.mxu0 %v1064
        %2172 = vmatpush1.bf16.msra.mxu0 %v1063
        %2173 = vmatprep.subr.bf16.mxu0 %v1047
        %2174 = vmatpush1.bf16.msra.mxu0 %v1046
        %2175 = vmatprep.subr.bf16.mxu0 %v1030
        %2176 = vmatpush1.bf16.msra.mxu0 %v1029
        %2177 = vmatprep.subr.bf16.mxu0 %v1013
        %2178 = vmatpush1.bf16.msra.mxu0 %v1012
        %2179 = vmatprep.subr.bf16.mxu0 %v996
        %2180 = vmatpush1.bf16.msra.mxu0 %v995
        %2181 = vmatprep.subr.bf16.mxu0 %v979
        %2182 = vmatpush1.bf16.msra.mxu0 %v978
        %2183 = vmatprep.subr.bf16.mxu0 %v962
        %2184 = vmatpush1.bf16.msra.mxu0 %v961
        %2185 = vmatprep.subr.bf16.mxu0 %v945
        %2186 = vmatpush1.bf16.msra.mxu0 %v944
        %2187 = vmatprep.subr.bf16.mxu0 0
        %2188 = vmatpush2.bf16.msra.mxu0 0
        %2189 = vmatprep.subr.bf16.mxu0 0
        %2190 = vmatpush2.bf16.msra.mxu0 0
        %2191 = vmatprep.subr.bf16.mxu0 0
        %2192 = vmatpush2.bf16.msra.mxu0 0
        %2193 = vmatprep.subr.bf16.mxu0 0
        %2194 = vmatpush2.bf16.msra.mxu0 0
        %2195 = vmatprep.subr.bf16.mxu0 0
        %2196 = vmatpush2.bf16.msra.mxu0 0
        %2197 = vmatprep.subr.bf16.mxu0 0
        %2198 = vmatpush2.bf16.msra.mxu0 0
        %2199 = vmatprep.subr.bf16.mxu0 0
        %2200 = vmatpush2.bf16.msra.mxu0 0
        %2201 = vmatprep.subr.bf16.mxu0 0
        %2202 = vmatpush2.bf16.msra.mxu0 0
        %2203 = vmatprep.mubr.bf16.mxu0 0
        %2204 = vmatmul.mubr.bf16.gmra.mxu0 %v486
        %v2205 = vpop.f32.mrf.mxu0
        %v2206 = vadd.f32 0.0, %v2205
        %v2207 = vpop.f32.mrf.mxu0
        %v2208 = vadd.f32 0.0, %v2207
        %v2209 = vpop.f32.mrf.mxu0
        %v2210 = vadd.f32 0.0, %v2209
        %v2211 = vpop.f32.mrf.mxu0
        %v2212 = vadd.f32 0.0, %v2211
        %2213 = vmatprep.mubr.bf16.mxu0 0
        %2214 = vmatmul.mubr.bf16.gmra.mxu0 %v487
        %v2215 = vpop.f32.mrf.mxu0
        %v2216 = vadd.f32 0.0, %v2215
        %v2217 = vpop.f32.mrf.mxu0
        %v2218 = vadd.f32 0.0, %v2217
        %v2219 = vpop.f32.mrf.mxu0
        %v2220 = vadd.f32 0.0, %v2219
        %v2221 = vpop.f32.mrf.mxu0
        %v2222 = vadd.f32 0.0, %v2221
        %2223 = vmatprep.mubr.bf16.mxu0 0
        %2224 = vmatmul.mubr.bf16.gmra.mxu0 %v488
        %v2225 = vpop.f32.mrf.mxu0
        %v2226 = vadd.f32 0.0, %v2225
        %v2227 = vpop.f32.mrf.mxu0
        %v2228 = vadd.f32 0.0, %v2227
        %v2229 = vpop.f32.mrf.mxu0
        %v2230 = vadd.f32 0.0, %v2229
        %v2231 = vpop.f32.mrf.mxu0
        %v2232 = vadd.f32 0.0, %v2231
        %2233 = vmatprep.mubr.bf16.mxu0 0
        %2234 = vmatmul.mubr.bf16.gmra.mxu0 %v489
        %v2235 = vpop.f32.mrf.mxu0
        %v2236 = vadd.f32 0.0, %v2235
        %v2237 = vpop.f32.mrf.mxu0
        %v2238 = vadd.f32 0.0, %v2237
        %v2239 = vpop.f32.mrf.mxu0
        %v2240 = vadd.f32 0.0, %v2239
        %v2241 = vpop.f32.mrf.mxu0
        %v2242 = vadd.f32 0.0, %v2241
        %2243 = vmatprep.mubr.bf16.mxu0 0
        %2244 = vmatmul.mubr.bf16.gmra.mxu0 %v490
        %v2245 = vpop.f32.mrf.mxu0
        %v2246 = vadd.f32 0.0, %v2245
        %v2247 = vpop.f32.mrf.mxu0
        %v2248 = vadd.f32 0.0, %v2247
        %v2249 = vpop.f32.mrf.mxu0
        %v2250 = vadd.f32 0.0, %v2249
        %v2251 = vpop.f32.mrf.mxu0
        %v2252 = vadd.f32 0.0, %v2251
        %2253 = vmatprep.mubr.bf16.mxu0 0
        %2254 = vmatmul.mubr.bf16.gmra.mxu0 %v491
        %v2255 = vpop.f32.mrf.mxu0
        %v2256 = vadd.f32 0.0, %v2255
        %v2257 = vpop.f32.mrf.mxu0
        %v2258 = vadd.f32 0.0, %v2257
        %v2259 = vpop.f32.mrf.mxu0
        %v2260 = vadd.f32 0.0, %v2259
        %v2261 = vpop.f32.mrf.mxu0
        %v2262 = vadd.f32 0.0, %v2261
        %2263 = vmatprep.mubr.bf16.mxu0 0
        %2264 = vmatmul.mubr.bf16.gmra.mxu0 %v492
        %v2265 = vpop.f32.mrf.mxu0
        %v2266 = vadd.f32 0.0, %v2265
        %v2267 = vpop.f32.mrf.mxu0
        %v2268 = vadd.f32 0.0, %v2267
        %v2269 = vpop.f32.mrf.mxu0
        %v2270 = vadd.f32 0.0, %v2269
        %v2271 = vpop.f32.mrf.mxu0
        %v2272 = vadd.f32 0.0, %v2271
        %2273 = vmatprep.mubr.bf16.mxu0 0
        %2274 = vmatmul.mubr.bf16.gmra.mxu0 %v493
        %v2275 = vpop.f32.mrf.mxu0
        %v2276 = vadd.f32 0.0, %v2275
        %v2277 = vpop.f32.mrf.mxu0
        %v2278 = vadd.f32 0.0, %v2277
        %v2279 = vpop.f32.mrf.mxu0
        %v2280 = vadd.f32 0.0, %v2279
        %v2281 = vpop.f32.mrf.mxu0
        %v2282 = vadd.f32 0.0, %v2281
        %2283 = vmatprep.mubr.bf16.mxu0 0
        %2284 = vmatmul.mubr.bf16.gmra.mxu0 %v494
        %v2285 = vpop.f32.mrf.mxu0
        %v2286 = vadd.f32 0.0, %v2285
        %v2287 = vpop.f32.mrf.mxu0
        %v2288 = vadd.f32 0.0, %v2287
        %v2289 = vpop.f32.mrf.mxu0
        %v2290 = vadd.f32 0.0, %v2289
        %v2291 = vpop.f32.mrf.mxu0
        %v2292 = vadd.f32 0.0, %v2291
        %2293 = vmatprep.mubr.bf16.mxu0 0
        %2294 = vmatmul.mubr.bf16.gmra.mxu0 %v495
        %v2295 = vpop.f32.mrf.mxu0
        %v2296 = vadd.f32 0.0, %v2295
        %v2297 = vpop.f32.mrf.mxu0
        %v2298 = vadd.f32 0.0, %v2297
        %v2299 = vpop.f32.mrf.mxu0
        %v2300 = vadd.f32 0.0, %v2299
        %v2301 = vpop.f32.mrf.mxu0
        %v2302 = vadd.f32 0.0, %v2301
        %2303 = vmatprep.mubr.bf16.mxu0 0
        %2304 = vmatmul.mubr.bf16.gmra.mxu0 %v496
        %v2305 = vpop.f32.mrf.mxu0
        %v2306 = vadd.f32 0.0, %v2305
        %v2307 = vpop.f32.mrf.mxu0
        %v2308 = vadd.f32 0.0, %v2307
        %v2309 = vpop.f32.mrf.mxu0
        %v2310 = vadd.f32 0.0, %v2309
        %v2311 = vpop.f32.mrf.mxu0
        %v2312 = vadd.f32 0.0, %v2311
        %2313 = vmatprep.mubr.bf16.mxu0 0
        %2314 = vmatmul.mubr.bf16.gmra.mxu0 %v497
        %v2315 = vpop.f32.mrf.mxu0
        %v2316 = vadd.f32 0.0, %v2315
        %v2317 = vpop.f32.mrf.mxu0
        %v2318 = vadd.f32 0.0, %v2317
        %v2319 = vpop.f32.mrf.mxu0
        %v2320 = vadd.f32 0.0, %v2319
        %v2321 = vpop.f32.mrf.mxu0
        %v2322 = vadd.f32 0.0, %v2321
        %2323 = vmatprep.mubr.bf16.mxu0 0
        %2324 = vmatmul.mubr.bf16.gmra.mxu0 %v498
        %v2325 = vpop.f32.mrf.mxu0
        %v2326 = vadd.f32 0.0, %v2325
        %v2327 = vpop.f32.mrf.mxu0
        %v2328 = vadd.f32 0.0, %v2327
        %v2329 = vpop.f32.mrf.mxu0
        %v2330 = vadd.f32 0.0, %v2329
        %v2331 = vpop.f32.mrf.mxu0
        %v2332 = vadd.f32 0.0, %v2331
        %2333 = vmatprep.mubr.bf16.mxu0 0
        %2334 = vmatmul.mubr.bf16.gmra.mxu0 %v499
        %v2335 = vpop.f32.mrf.mxu0
        %v2336 = vadd.f32 0.0, %v2335
        %v2337 = vpop.f32.mrf.mxu0
        %v2338 = vadd.f32 0.0, %v2337
        %v2339 = vpop.f32.mrf.mxu0
        %v2340 = vadd.f32 0.0, %v2339
        %v2341 = vpop.f32.mrf.mxu0
        %v2342 = vadd.f32 0.0, %v2341
        %2343 = vmatprep.mubr.bf16.mxu0 0
        %2344 = vmatmul.mubr.bf16.gmra.mxu0 %v500
        %v2345 = vpop.f32.mrf.mxu0
        %v2346 = vadd.f32 0.0, %v2345
        %v2347 = vpop.f32.mrf.mxu0
        %v2348 = vadd.f32 0.0, %v2347
        %v2349 = vpop.f32.mrf.mxu0
        %v2350 = vadd.f32 0.0, %v2349
        %v2351 = vpop.f32.mrf.mxu0
        %v2352 = vadd.f32 0.0, %v2351
        %2353 = vmatprep.mubr.bf16.mxu0 0
        %2354 = vmatmul.mubr.bf16.gmra.mxu0 %v501
        %v2355 = vpop.f32.mrf.mxu0
        %v2356 = vadd.f32 0.0, %v2355
        %v2357 = vpop.f32.mrf.mxu0
        %v2358 = vadd.f32 0.0, %v2357
        %v2359 = vpop.f32.mrf.mxu0
        %v2360 = vadd.f32 0.0, %v2359
        %v2361 = vpop.f32.mrf.mxu0
        %v2362 = vadd.f32 0.0, %v2361
        %2363 = vdwg.mxu0
        %2364 = vmatprep.subr.bf16.mxu0 %v1066
        %2365 = vmatpush1.bf16.msra.mxu0 %v1065
        %2366 = vmatprep.subr.bf16.mxu0 %v1049
        %2367 = vmatpush1.bf16.msra.mxu0 %v1048
        %2368 = vmatprep.subr.bf16.mxu0 %v1032
        %2369 = vmatpush1.bf16.msra.mxu0 %v1031
        %2370 = vmatprep.subr.bf16.mxu0 %v1015
        %2371 = vmatpush1.bf16.msra.mxu0 %v1014
        %2372 = vmatprep.subr.bf16.mxu0 %v998
        %2373 = vmatpush1.bf16.msra.mxu0 %v997
        %2374 = vmatprep.subr.bf16.mxu0 %v981
        %2375 = vmatpush1.bf16.msra.mxu0 %v980
        %2376 = vmatprep.subr.bf16.mxu0 %v964
        %2377 = vmatpush1.bf16.msra.mxu0 %v963
        %2378 = vmatprep.subr.bf16.mxu0 %v947
        %2379 = vmatpush1.bf16.msra.mxu0 %v946
        %2380 = vmatprep.subr.bf16.mxu0 0
        %2381 = vmatpush2.bf16.msra.mxu0 0
        %2382 = vmatprep.subr.bf16.mxu0 0
        %2383 = vmatpush2.bf16.msra.mxu0 0
        %2384 = vmatprep.subr.bf16.mxu0 0
        %2385 = vmatpush2.bf16.msra.mxu0 0
        %2386 = vmatprep.subr.bf16.mxu0 0
        %2387 = vmatpush2.bf16.msra.mxu0 0
        %2388 = vmatprep.subr.bf16.mxu0 0
        %2389 = vmatpush2.bf16.msra.mxu0 0
        %2390 = vmatprep.subr.bf16.mxu0 0
        %2391 = vmatpush2.bf16.msra.mxu0 0
        %2392 = vmatprep.subr.bf16.mxu0 0
        %2393 = vmatpush2.bf16.msra.mxu0 0
        %2394 = vmatprep.subr.bf16.mxu0 0
        %2395 = vmatpush2.bf16.msra.mxu0 0
        %2396 = vmatprep.mubr.bf16.mxu0 0
        %2397 = vmatmul.mubr.bf16.gmra.mxu0 %v486
        %v2398 = vpop.f32.mrf.mxu0
        %v2399 = vadd.f32 0.0, %v2398
        %v2400 = vpop.f32.mrf.mxu0
        %v2401 = vadd.f32 0.0, %v2400
        %v2402 = vpop.f32.mrf.mxu0
        %v2403 = vadd.f32 0.0, %v2402
        %v2404 = vpop.f32.mrf.mxu0
        %v2405 = vadd.f32 0.0, %v2404
        %2406 = vmatprep.mubr.bf16.mxu0 0
        %2407 = vmatmul.mubr.bf16.gmra.mxu0 %v487
        %v2408 = vpop.f32.mrf.mxu0
        %v2409 = vadd.f32 0.0, %v2408
        %v2410 = vpop.f32.mrf.mxu0
        %v2411 = vadd.f32 0.0, %v2410
        %v2412 = vpop.f32.mrf.mxu0
        %v2413 = vadd.f32 0.0, %v2412
        %v2414 = vpop.f32.mrf.mxu0
        %v2415 = vadd.f32 0.0, %v2414
        %2416 = vmatprep.mubr.bf16.mxu0 0
        %2417 = vmatmul.mubr.bf16.gmra.mxu0 %v488
        %v2418 = vpop.f32.mrf.mxu0
        %v2419 = vadd.f32 0.0, %v2418
        %v2420 = vpop.f32.mrf.mxu0
        %v2421 = vadd.f32 0.0, %v2420
        %v2422 = vpop.f32.mrf.mxu0
        %v2423 = vadd.f32 0.0, %v2422
        %v2424 = vpop.f32.mrf.mxu0
        %v2425 = vadd.f32 0.0, %v2424
        %2426 = vmatprep.mubr.bf16.mxu0 0
        %2427 = vmatmul.mubr.bf16.gmra.mxu0 %v489
        %v2428 = vpop.f32.mrf.mxu0
        %v2429 = vadd.f32 0.0, %v2428
        %v2430 = vpop.f32.mrf.mxu0
        %v2431 = vadd.f32 0.0, %v2430
        %v2432 = vpop.f32.mrf.mxu0
        %v2433 = vadd.f32 0.0, %v2432
        %v2434 = vpop.f32.mrf.mxu0
        %v2435 = vadd.f32 0.0, %v2434
        %2436 = vmatprep.mubr.bf16.mxu0 0
        %2437 = vmatmul.mubr.bf16.gmra.mxu0 %v490
        %v2438 = vpop.f32.mrf.mxu0
        %v2439 = vadd.f32 0.0, %v2438
        %v2440 = vpop.f32.mrf.mxu0
        %v2441 = vadd.f32 0.0, %v2440
        %v2442 = vpop.f32.mrf.mxu0
        %v2443 = vadd.f32 0.0, %v2442
        %v2444 = vpop.f32.mrf.mxu0
        %v2445 = vadd.f32 0.0, %v2444
        %2446 = vmatprep.mubr.bf16.mxu0 0
        %2447 = vmatmul.mubr.bf16.gmra.mxu0 %v491
        %v2448 = vpop.f32.mrf.mxu0
        %v2449 = vadd.f32 0.0, %v2448
        %v2450 = vpop.f32.mrf.mxu0
        %v2451 = vadd.f32 0.0, %v2450
        %v2452 = vpop.f32.mrf.mxu0
        %v2453 = vadd.f32 0.0, %v2452
        %v2454 = vpop.f32.mrf.mxu0
        %v2455 = vadd.f32 0.0, %v2454
        %2456 = vmatprep.mubr.bf16.mxu0 0
        %2457 = vmatmul.mubr.bf16.gmra.mxu0 %v492
        %v2458 = vpop.f32.mrf.mxu0
        %v2459 = vadd.f32 0.0, %v2458
        %v2460 = vpop.f32.mrf.mxu0
        %v2461 = vadd.f32 0.0, %v2460
        %v2462 = vpop.f32.mrf.mxu0
        %v2463 = vadd.f32 0.0, %v2462
        %v2464 = vpop.f32.mrf.mxu0
        %v2465 = vadd.f32 0.0, %v2464
        %2466 = vmatprep.mubr.bf16.mxu0 0
        %2467 = vmatmul.mubr.bf16.gmra.mxu0 %v493
        %v2468 = vpop.f32.mrf.mxu0
        %v2469 = vadd.f32 0.0, %v2468
        %v2470 = vpop.f32.mrf.mxu0
        %v2471 = vadd.f32 0.0, %v2470
        %v2472 = vpop.f32.mrf.mxu0
        %v2473 = vadd.f32 0.0, %v2472
        %v2474 = vpop.f32.mrf.mxu0
        %v2475 = vadd.f32 0.0, %v2474
        %2476 = vmatprep.mubr.bf16.mxu0 0
        %2477 = vmatmul.mubr.bf16.gmra.mxu0 %v494
        %v2478 = vpop.f32.mrf.mxu0
        %v2479 = vadd.f32 0.0, %v2478
        %v2480 = vpop.f32.mrf.mxu0
        %v2481 = vadd.f32 0.0, %v2480
        %v2482 = vpop.f32.mrf.mxu0
        %v2483 = vadd.f32 0.0, %v2482
        %v2484 = vpop.f32.mrf.mxu0
        %v2485 = vadd.f32 0.0, %v2484
        %2486 = vmatprep.mubr.bf16.mxu0 0
        %2487 = vmatmul.mubr.bf16.gmra.mxu0 %v495
        %v2488 = vpop.f32.mrf.mxu0
        %v2489 = vadd.f32 0.0, %v2488
        %v2490 = vpop.f32.mrf.mxu0
        %v2491 = vadd.f32 0.0, %v2490
        %v2492 = vpop.f32.mrf.mxu0
        %v2493 = vadd.f32 0.0, %v2492
        %v2494 = vpop.f32.mrf.mxu0
        %v2495 = vadd.f32 0.0, %v2494
        %2496 = vmatprep.mubr.bf16.mxu0 0
        %2497 = vmatmul.mubr.bf16.gmra.mxu0 %v496
        %v2498 = vpop.f32.mrf.mxu0
        %v2499 = vadd.f32 0.0, %v2498
        %v2500 = vpop.f32.mrf.mxu0
        %v2501 = vadd.f32 0.0, %v2500
        %v2502 = vpop.f32.mrf.mxu0
        %v2503 = vadd.f32 0.0, %v2502
        %v2504 = vpop.f32.mrf.mxu0
        %v2505 = vadd.f32 0.0, %v2504
        %2506 = vmatprep.mubr.bf16.mxu0 0
        %2507 = vmatmul.mubr.bf16.gmra.mxu0 %v497
        %v2508 = vpop.f32.mrf.mxu0
        %v2509 = vadd.f32 0.0, %v2508
        %v2510 = vpop.f32.mrf.mxu0
        %v2511 = vadd.f32 0.0, %v2510
        %v2512 = vpop.f32.mrf.mxu0
        %v2513 = vadd.f32 0.0, %v2512
        %v2514 = vpop.f32.mrf.mxu0
        %v2515 = vadd.f32 0.0, %v2514
        %2516 = vmatprep.mubr.bf16.mxu0 0
        %2517 = vmatmul.mubr.bf16.gmra.mxu0 %v498
        %v2518 = vpop.f32.mrf.mxu0
        %v2519 = vadd.f32 0.0, %v2518
        %v2520 = vpop.f32.mrf.mxu0
        %v2521 = vadd.f32 0.0, %v2520
        %v2522 = vpop.f32.mrf.mxu0
        %v2523 = vadd.f32 0.0, %v2522
        %v2524 = vpop.f32.mrf.mxu0
        %v2525 = vadd.f32 0.0, %v2524
        %2526 = vmatprep.mubr.bf16.mxu0 0
        %2527 = vmatmul.mubr.bf16.gmra.mxu0 %v499
        %v2528 = vpop.f32.mrf.mxu0
        %v2529 = vadd.f32 0.0, %v2528
        %v2530 = vpop.f32.mrf.mxu0
        %v2531 = vadd.f32 0.0, %v2530
        %v2532 = vpop.f32.mrf.mxu0
        %v2533 = vadd.f32 0.0, %v2532
        %v2534 = vpop.f32.mrf.mxu0
        %v2535 = vadd.f32 0.0, %v2534
        %2536 = vmatprep.mubr.bf16.mxu0 0
        %2537 = vmatmul.mubr.bf16.gmra.mxu0 %v500
        %v2538 = vpop.f32.mrf.mxu0
        %v2539 = vadd.f32 0.0, %v2538
        %v2540 = vpop.f32.mrf.mxu0
        %v2541 = vadd.f32 0.0, %v2540
        %v2542 = vpop.f32.mrf.mxu0
        %v2543 = vadd.f32 0.0, %v2542
        %v2544 = vpop.f32.mrf.mxu0
        %v2545 = vadd.f32 0.0, %v2544
        %2546 = vmatprep.mubr.bf16.mxu0 0
        %2547 = vmatmul.mubr.bf16.gmra.mxu0 %v501
        %v2548 = vpop.f32.mrf.mxu0
        %v2549 = vadd.f32 0.0, %v2548
        %v2550 = vpop.f32.mrf.mxu0
        %v2551 = vadd.f32 0.0, %v2550
        %v2552 = vpop.f32.mrf.mxu0
        %v2553 = vadd.f32 0.0, %v2552
        %v2554 = vpop.f32.mrf.mxu0
        %v2555 = vadd.f32 0.0, %v2554
        %2556 = vdwg.mxu0
        %2557 = vmatprep.subr.bf16.mxu0 %v1068
        %2558 = vmatpush1.bf16.msra.mxu0 %v1067
        %2559 = vmatprep.subr.bf16.mxu0 %v1051
        %2560 = vmatpush1.bf16.msra.mxu0 %v1050
        %2561 = vmatprep.subr.bf16.mxu0 %v1034
        %2562 = vmatpush1.bf16.msra.mxu0 %v1033
        %2563 = vmatprep.subr.bf16.mxu0 %v1017
        %2564 = vmatpush1.bf16.msra.mxu0 %v1016
        %2565 = vmatprep.subr.bf16.mxu0 %v1000
        %2566 = vmatpush1.bf16.msra.mxu0 %v999
        %2567 = vmatprep.subr.bf16.mxu0 %v983
        %2568 = vmatpush1.bf16.msra.mxu0 %v982
        %2569 = vmatprep.subr.bf16.mxu0 %v966
        %2570 = vmatpush1.bf16.msra.mxu0 %v965
        %2571 = vmatprep.subr.bf16.mxu0 %v949
        %2572 = vmatpush1.bf16.msra.mxu0 %v948
        %2573 = vmatprep.subr.bf16.mxu0 0
        %2574 = vmatpush2.bf16.msra.mxu0 0
        %2575 = vmatprep.subr.bf16.mxu0 0
        %2576 = vmatpush2.bf16.msra.mxu0 0
        %2577 = vmatprep.subr.bf16.mxu0 0
        %2578 = vmatpush2.bf16.msra.mxu0 0
        %2579 = vmatprep.subr.bf16.mxu0 0
        %2580 = vmatpush2.bf16.msra.mxu0 0
        %2581 = vmatprep.subr.bf16.mxu0 0
        %2582 = vmatpush2.bf16.msra.mxu0 0
        %2583 = vmatprep.subr.bf16.mxu0 0
        %2584 = vmatpush2.bf16.msra.mxu0 0
        %2585 = vmatprep.subr.bf16.mxu0 0
        %2586 = vmatpush2.bf16.msra.mxu0 0
        %2587 = vmatprep.subr.bf16.mxu0 0
        %2588 = vmatpush2.bf16.msra.mxu0 0
        %2589 = vmatprep.mubr.bf16.mxu0 0
        %2590 = vmatmul.mubr.bf16.gmra.mxu0 %v486
        %v2591 = vpop.f32.mrf.mxu0
        %v2592 = vadd.f32 0.0, %v2591
        %v2593 = vpop.f32.mrf.mxu0
        %v2594 = vadd.f32 0.0, %v2593
        %v2595 = vpop.f32.mrf.mxu0
        %v2596 = vadd.f32 0.0, %v2595
        %v2597 = vpop.f32.mrf.mxu0
        %v2598 = vadd.f32 0.0, %v2597
        %2599 = vmatprep.mubr.bf16.mxu0 0
        %2600 = vmatmul.mubr.bf16.gmra.mxu0 %v487
        %v2601 = vpop.f32.mrf.mxu0
        %v2602 = vadd.f32 0.0, %v2601
        %v2603 = vpop.f32.mrf.mxu0
        %v2604 = vadd.f32 0.0, %v2603
        %v2605 = vpop.f32.mrf.mxu0
        %v2606 = vadd.f32 0.0, %v2605
        %v2607 = vpop.f32.mrf.mxu0
        %v2608 = vadd.f32 0.0, %v2607
        %2609 = vmatprep.mubr.bf16.mxu0 0
        %2610 = vmatmul.mubr.bf16.gmra.mxu0 %v488
        %v2611 = vpop.f32.mrf.mxu0
        %v2612 = vadd.f32 0.0, %v2611
        %v2613 = vpop.f32.mrf.mxu0
        %v2614 = vadd.f32 0.0, %v2613
        %v2615 = vpop.f32.mrf.mxu0
        %v2616 = vadd.f32 0.0, %v2615
        %v2617 = vpop.f32.mrf.mxu0
        %v2618 = vadd.f32 0.0, %v2617
        %2619 = vmatprep.mubr.bf16.mxu0 0
        %2620 = vmatmul.mubr.bf16.gmra.mxu0 %v489
        %v2621 = vpop.f32.mrf.mxu0
        %v2622 = vadd.f32 0.0, %v2621
        %v2623 = vpop.f32.mrf.mxu0
        %v2624 = vadd.f32 0.0, %v2623
        %v2625 = vpop.f32.mrf.mxu0
        %v2626 = vadd.f32 0.0, %v2625
        %v2627 = vpop.f32.mrf.mxu0
        %v2628 = vadd.f32 0.0, %v2627
        %2629 = vmatprep.mubr.bf16.mxu0 0
        %2630 = vmatmul.mubr.bf16.gmra.mxu0 %v490
        %v2631 = vpop.f32.mrf.mxu0
        %v2632 = vadd.f32 0.0, %v2631
        %v2633 = vpop.f32.mrf.mxu0
        %v2634 = vadd.f32 0.0, %v2633
        %v2635 = vpop.f32.mrf.mxu0
        %v2636 = vadd.f32 0.0, %v2635
        %v2637 = vpop.f32.mrf.mxu0
        %v2638 = vadd.f32 0.0, %v2637
        %2639 = vmatprep.mubr.bf16.mxu0 0
        %2640 = vmatmul.mubr.bf16.gmra.mxu0 %v491
        %v2641 = vpop.f32.mrf.mxu0
        %v2642 = vadd.f32 0.0, %v2641
        %v2643 = vpop.f32.mrf.mxu0
        %v2644 = vadd.f32 0.0, %v2643
        %v2645 = vpop.f32.mrf.mxu0
        %v2646 = vadd.f32 0.0, %v2645
        %v2647 = vpop.f32.mrf.mxu0
        %v2648 = vadd.f32 0.0, %v2647
        %2649 = vmatprep.mubr.bf16.mxu0 0
        %2650 = vmatmul.mubr.bf16.gmra.mxu0 %v492
        %v2651 = vpop.f32.mrf.mxu0
        %v2652 = vadd.f32 0.0, %v2651
        %v2653 = vpop.f32.mrf.mxu0
        %v2654 = vadd.f32 0.0, %v2653
        %v2655 = vpop.f32.mrf.mxu0
        %v2656 = vadd.f32 0.0, %v2655
        %v2657 = vpop.f32.mrf.mxu0
        %v2658 = vadd.f32 0.0, %v2657
        %2659 = vmatprep.mubr.bf16.mxu0 0
        %2660 = vmatmul.mubr.bf16.gmra.mxu0 %v493
        %v2661 = vpop.f32.mrf.mxu0
        %v2662 = vadd.f32 0.0, %v2661
        %v2663 = vpop.f32.mrf.mxu0
        %v2664 = vadd.f32 0.0, %v2663
        %v2665 = vpop.f32.mrf.mxu0
        %v2666 = vadd.f32 0.0, %v2665
        %v2667 = vpop.f32.mrf.mxu0
        %v2668 = vadd.f32 0.0, %v2667
        %2669 = vmatprep.mubr.bf16.mxu0 0
        %2670 = vmatmul.mubr.bf16.gmra.mxu0 %v494
        %v2671 = vpop.f32.mrf.mxu0
        %v2672 = vadd.f32 0.0, %v2671
        %v2673 = vpop.f32.mrf.mxu0
        %v2674 = vadd.f32 0.0, %v2673
        %v2675 = vpop.f32.mrf.mxu0
        %v2676 = vadd.f32 0.0, %v2675
        %v2677 = vpop.f32.mrf.mxu0
        %v2678 = vadd.f32 0.0, %v2677
        %2679 = vmatprep.mubr.bf16.mxu0 0
        %2680 = vmatmul.mubr.bf16.gmra.mxu0 %v495
        %v2681 = vpop.f32.mrf.mxu0
        %v2682 = vadd.f32 0.0, %v2681
        %v2683 = vpop.f32.mrf.mxu0
        %v2684 = vadd.f32 0.0, %v2683
        %v2685 = vpop.f32.mrf.mxu0
        %v2686 = vadd.f32 0.0, %v2685
        %v2687 = vpop.f32.mrf.mxu0
        %v2688 = vadd.f32 0.0, %v2687
        %2689 = vmatprep.mubr.bf16.mxu0 0
        %2690 = vmatmul.mubr.bf16.gmra.mxu0 %v496
        %v2691 = vpop.f32.mrf.mxu0
        %v2692 = vadd.f32 0.0, %v2691
        %v2693 = vpop.f32.mrf.mxu0
        %v2694 = vadd.f32 0.0, %v2693
        %v2695 = vpop.f32.mrf.mxu0
        %v2696 = vadd.f32 0.0, %v2695
        %v2697 = vpop.f32.mrf.mxu0
        %v2698 = vadd.f32 0.0, %v2697
        %2699 = vmatprep.mubr.bf16.mxu0 0
        %2700 = vmatmul.mubr.bf16.gmra.mxu0 %v497
        %v2701 = vpop.f32.mrf.mxu0
        %v2702 = vadd.f32 0.0, %v2701
        %v2703 = vpop.f32.mrf.mxu0
        %v2704 = vadd.f32 0.0, %v2703
        %v2705 = vpop.f32.mrf.mxu0
        %v2706 = vadd.f32 0.0, %v2705
        %v2707 = vpop.f32.mrf.mxu0
        %v2708 = vadd.f32 0.0, %v2707
        %2709 = vmatprep.mubr.bf16.mxu0 0
        %2710 = vmatmul.mubr.bf16.gmra.mxu0 %v498
        %v2711 = vpop.f32.mrf.mxu0
        %v2712 = vadd.f32 0.0, %v2711
        %v2713 = vpop.f32.mrf.mxu0
        %v2714 = vadd.f32 0.0, %v2713
        %v2715 = vpop.f32.mrf.mxu0
        %v2716 = vadd.f32 0.0, %v2715
        %v2717 = vpop.f32.mrf.mxu0
        %v2718 = vadd.f32 0.0, %v2717
        %2719 = vmatprep.mubr.bf16.mxu0 0
        %2720 = vmatmul.mubr.bf16.gmra.mxu0 %v499
        %v2721 = vpop.f32.mrf.mxu0
        %v2722 = vadd.f32 0.0, %v2721
        %v2723 = vpop.f32.mrf.mxu0
        %v2724 = vadd.f32 0.0, %v2723
        %v2725 = vpop.f32.mrf.mxu0
        %v2726 = vadd.f32 0.0, %v2725
        %v2727 = vpop.f32.mrf.mxu0
        %v2728 = vadd.f32 0.0, %v2727
        %2729 = vmatprep.mubr.bf16.mxu0 0
        %2730 = vmatmul.mubr.bf16.gmra.mxu0 %v500
        %v2731 = vpop.f32.mrf.mxu0
        %v2732 = vadd.f32 0.0, %v2731
        %v2733 = vpop.f32.mrf.mxu0
        %v2734 = vadd.f32 0.0, %v2733
        %v2735 = vpop.f32.mrf.mxu0
        %v2736 = vadd.f32 0.0, %v2735
        %v2737 = vpop.f32.mrf.mxu0
        %v2738 = vadd.f32 0.0, %v2737
        %2739 = vmatprep.mubr.bf16.mxu0 0
        %2740 = vmatmul.mubr.bf16.gmra.mxu0 %v501
        %v2741 = vpop.f32.mrf.mxu0
        %v2742 = vadd.f32 0.0, %v2741
        %v2743 = vpop.f32.mrf.mxu0
        %v2744 = vadd.f32 0.0, %v2743
        %v2745 = vpop.f32.mrf.mxu0
        %v2746 = vadd.f32 0.0, %v2745
        %v2747 = vpop.f32.mrf.mxu0
        %v2748 = vadd.f32 0.0, %v2747
        %2749 = vdwg.mxu0
        %2750 = vmatprep.subr.bf16.mxu0 0
        %2751 = vmatpush1.bf16.msra.mxu0 %v1069
        %2752 = vmatprep.subr.bf16.mxu0 0
        %2753 = vmatpush1.bf16.msra.mxu0 %v1052
        %2754 = vmatprep.subr.bf16.mxu0 0
        %2755 = vmatpush1.bf16.msra.mxu0 %v1035
        %2756 = vmatprep.subr.bf16.mxu0 0
        %2757 = vmatpush1.bf16.msra.mxu0 %v1018
        %2758 = vmatprep.subr.bf16.mxu0 0
        %2759 = vmatpush1.bf16.msra.mxu0 %v1001
        %2760 = vmatprep.subr.bf16.mxu0 0
        %2761 = vmatpush1.bf16.msra.mxu0 %v984
        %2762 = vmatprep.subr.bf16.mxu0 0
        %2763 = vmatpush1.bf16.msra.mxu0 %v967
        %2764 = vmatprep.subr.bf16.mxu0 0
        %2765 = vmatpush1.bf16.msra.mxu0 %v950
        %2766 = vmatprep.subr.bf16.mxu0 0
        %2767 = vmatpush2.bf16.msra.mxu0 0
        %2768 = vmatprep.subr.bf16.mxu0 0
        %2769 = vmatpush2.bf16.msra.mxu0 0
        %2770 = vmatprep.subr.bf16.mxu0 0
        %2771 = vmatpush2.bf16.msra.mxu0 0
        %2772 = vmatprep.subr.bf16.mxu0 0
        %2773 = vmatpush2.bf16.msra.mxu0 0
        %2774 = vmatprep.subr.bf16.mxu0 0
        %2775 = vmatpush2.bf16.msra.mxu0 0
        %2776 = vmatprep.subr.bf16.mxu0 0
        %2777 = vmatpush2.bf16.msra.mxu0 0
        %2778 = vmatprep.subr.bf16.mxu0 0
        %2779 = vmatpush2.bf16.msra.mxu0 0
        %2780 = vmatprep.subr.bf16.mxu0 0
        %2781 = vmatpush2.bf16.msra.mxu0 0
        %2782 = vmatprep.mubr.bf16.mxu0 0
        %2783 = vmatmul.mubr.bf16.gmra.mxu0 %v486
        %v2784 = vpop.f32.mrf.mxu0
        %v2785 = vadd.f32 0.0, %v2784
        %v2786 = vpop.f32.mrf.mxu0
        %v2787 = vpop.f32.mrf.mxu0
        %v2788 = vadd.f32 0.0, %v2787
        %v2789 = vpop.f32.mrf.mxu0
        %2790 = vmatprep.mubr.bf16.mxu0 0
        %2791 = vmatmul.mubr.bf16.gmra.mxu0 %v487
        %v2792 = vpop.f32.mrf.mxu0
        %v2793 = vadd.f32 0.0, %v2792
        %v2794 = vpop.f32.mrf.mxu0
        %v2795 = vpop.f32.mrf.mxu0
        %v2796 = vadd.f32 0.0, %v2795
        %v2797 = vpop.f32.mrf.mxu0
        %2798 = vmatprep.mubr.bf16.mxu0 0
        %2799 = vmatmul.mubr.bf16.gmra.mxu0 %v488
        %v2800 = vpop.f32.mrf.mxu0
        %v2801 = vadd.f32 0.0, %v2800
        %v2802 = vpop.f32.mrf.mxu0
        %v2803 = vpop.f32.mrf.mxu0
        %v2804 = vadd.f32 0.0, %v2803
        %v2805 = vpop.f32.mrf.mxu0
        %2806 = vmatprep.mubr.bf16.mxu0 0
        %2807 = vmatmul.mubr.bf16.gmra.mxu0 %v489
        %v2808 = vpop.f32.mrf.mxu0
        %v2809 = vadd.f32 0.0, %v2808
        %v2810 = vpop.f32.mrf.mxu0
        %v2811 = vpop.f32.mrf.mxu0
        %v2812 = vadd.f32 0.0, %v2811
        %v2813 = vpop.f32.mrf.mxu0
        %2814 = vmatprep.mubr.bf16.mxu0 0
        %2815 = vmatmul.mubr.bf16.gmra.mxu0 %v490
        %v2816 = vpop.f32.mrf.mxu0
        %v2817 = vadd.f32 0.0, %v2816
        %v2818 = vpop.f32.mrf.mxu0
        %v2819 = vpop.f32.mrf.mxu0
        %v2820 = vadd.f32 0.0, %v2819
        %v2821 = vpop.f32.mrf.mxu0
        %2822 = vmatprep.mubr.bf16.mxu0 0
        %2823 = vmatmul.mubr.bf16.gmra.mxu0 %v491
        %v2824 = vpop.f32.mrf.mxu0
        %v2825 = vadd.f32 0.0, %v2824
        %v2826 = vpop.f32.mrf.mxu0
        %v2827 = vpop.f32.mrf.mxu0
        %v2828 = vadd.f32 0.0, %v2827
        %v2829 = vpop.f32.mrf.mxu0
        %2830 = vmatprep.mubr.bf16.mxu0 0
        %2831 = vmatmul.mubr.bf16.gmra.mxu0 %v492
        %v2832 = vpop.f32.mrf.mxu0
        %v2833 = vadd.f32 0.0, %v2832
        %v2834 = vpop.f32.mrf.mxu0
        %v2835 = vpop.f32.mrf.mxu0
        %v2836 = vadd.f32 0.0, %v2835
        %v2837 = vpop.f32.mrf.mxu0
        %2838 = vmatprep.mubr.bf16.mxu0 0
        %2839 = vmatmul.mubr.bf16.gmra.mxu0 %v493
        %v2840 = vpop.f32.mrf.mxu0
        %v2841 = vadd.f32 0.0, %v2840
        %v2842 = vpop.f32.mrf.mxu0
        %v2843 = vpop.f32.mrf.mxu0
        %v2844 = vadd.f32 0.0, %v2843
        %v2845 = vpop.f32.mrf.mxu0
        %2846 = vmatprep.mubr.bf16.mxu0 0
        %2847 = vmatmul.mubr.bf16.gmra.mxu0 %v494
        %v2848 = vpop.f32.mrf.mxu0
        %v2849 = vadd.f32 0.0, %v2848
        %v2850 = vpop.f32.mrf.mxu0
        %v2851 = vpop.f32.mrf.mxu0
        %v2852 = vadd.f32 0.0, %v2851
        %v2853 = vpop.f32.mrf.mxu0
        %2854 = vmatprep.mubr.bf16.mxu0 0
        %2855 = vmatmul.mubr.bf16.gmra.mxu0 %v495
        %v2856 = vpop.f32.mrf.mxu0
        %v2857 = vadd.f32 0.0, %v2856
        %v2858 = vpop.f32.mrf.mxu0
        %v2859 = vpop.f32.mrf.mxu0
        %v2860 = vadd.f32 0.0, %v2859
        %v2861 = vpop.f32.mrf.mxu0
        %2862 = vmatprep.mubr.bf16.mxu0 0
        %2863 = vmatmul.mubr.bf16.gmra.mxu0 %v496
        %v2864 = vpop.f32.mrf.mxu0
        %v2865 = vadd.f32 0.0, %v2864
        %v2866 = vpop.f32.mrf.mxu0
        %v2867 = vpop.f32.mrf.mxu0
        %v2868 = vadd.f32 0.0, %v2867
        %v2869 = vpop.f32.mrf.mxu0
        %2870 = vmatprep.mubr.bf16.mxu0 0
        %2871 = vmatmul.mubr.bf16.gmra.mxu0 %v497
        %v2872 = vpop.f32.mrf.mxu0
        %v2873 = vadd.f32 0.0, %v2872
        %v2874 = vpop.f32.mrf.mxu0
        %v2875 = vpop.f32.mrf.mxu0
        %v2876 = vadd.f32 0.0, %v2875
        %v2877 = vpop.f32.mrf.mxu0
        %2878 = vmatprep.mubr.bf16.mxu0 0
        %2879 = vmatmul.mubr.bf16.gmra.mxu0 %v498
        %v2880 = vpop.f32.mrf.mxu0
        %v2881 = vadd.f32 0.0, %v2880
        %v2882 = vpop.f32.mrf.mxu0
        %v2883 = vpop.f32.mrf.mxu0
        %v2884 = vadd.f32 0.0, %v2883
        %v2885 = vpop.f32.mrf.mxu0
        %2886 = vmatprep.mubr.bf16.mxu0 0
        %2887 = vmatmul.mubr.bf16.gmra.mxu0 %v499
        %v2888 = vpop.f32.mrf.mxu0
        %v2889 = vadd.f32 0.0, %v2888
        %v2890 = vpop.f32.mrf.mxu0
        %v2891 = vpop.f32.mrf.mxu0
        %v2892 = vadd.f32 0.0, %v2891
        %v2893 = vpop.f32.mrf.mxu0
        %2894 = vmatprep.mubr.bf16.mxu0 0
        %2895 = vmatmul.mubr.bf16.gmra.mxu0 %v500
        %v2896 = vpop.f32.mrf.mxu0
        %v2897 = vadd.f32 0.0, %v2896
        %v2898 = vpop.f32.mrf.mxu0
        %v2899 = vpop.f32.mrf.mxu0
        %v2900 = vadd.f32 0.0, %v2899
        %v2901 = vpop.f32.mrf.mxu0
        %2902 = vmatprep.mubr.bf16.mxu0 0
        %2903 = vmatmul.mubr.bf16.gmra.mxu0 %v501
        %v2904 = vpop.f32.mrf.mxu0
        %v2905 = vadd.f32 0.0, %v2904
        %v2906 = vpop.f32.mrf.mxu0
        %v2907 = vpop.f32.mrf.mxu0
        %v2908 = vadd.f32 0.0, %v2907
        %v2909 = vpop.f32.mrf.mxu0
        %2910 = vdwg.mxu0
        %v2911 = vlaneseq
        %v2912 = vshrl.u32 %v2911, 7
        %v2913 = vadd.s32 %v2912, 8
        %vm2914 = vcmp.ge.s32.totalorder %v2912, 0
        %vm2915 = vcmp.ge.s32.totalorder %v2913, 0
        %vm2916 = vcmp.lt.s32.totalorder %v2912, 16
        %vm2917 = vcmp.lt.s32.totalorder %v2913, 16
        %vm2918 = vmand %vm2914, %vm2916
        %vm2919 = vmand %vm2915, %vm2917
        %vm2920 = vcmp.ge.s32.totalorder %v2912, 4294967290
        %vm2921 = vcmp.ge.s32.totalorder %v2913, 4294967290
        %vm2922 = vcmp.lt.s32.totalorder %v2912, 10
        %vm2923 = vcmp.lt.s32.totalorder %v2913, 10
        %vm2924 = vmand %vm2920, %vm2922
        %vm2925 = vmand %vm2921, %vm2923
        %vm2926 = vcmp.ge.s32.totalorder %v2912, 4294967284
        %vm2927 = vcmp.ge.s32.totalorder %v2913, 4294967284
        %vm2928 = vcmp.lt.s32.totalorder %v2912, 4
        %vm2929 = vcmp.lt.s32.totalorder %v2913, 4
        %vm2930 = vmand %vm2926, %vm2928
        %vm2931 = vmand %vm2927, %vm2929
        %vm2932 = vcmp.ge.s32.totalorder %v2912, 12
        %vm2933 = vcmp.ge.s32.totalorder %v2913, 12
        %vm2934 = vcmp.lt.s32.totalorder %v2912, 28
        %vm2935 = vcmp.lt.s32.totalorder %v2913, 28
        %vm2936 = vmand %vm2932, %vm2934
        %vm2937 = vmand %vm2933, %vm2935
        %vm2938 = vcmp.ge.s32.totalorder %v2912, 6
        %vm2939 = vcmp.ge.s32.totalorder %v2913, 6
        %vm2940 = vcmp.lt.s32.totalorder %v2912, 22
        %vm2941 = vcmp.lt.s32.totalorder %v2913, 22
        %vm2942 = vmand %vm2938, %vm2940
        %vm2943 = vmand %vm2939, %vm2941
        %v2944 = vrot.slane %v1243, 2
        %v2945 = vrot.slane %v1247, 2
        %v2946 = vrot.slane %v1253, 2
        %v2947 = vrot.slane %v1257, 2
        %v2948 = vrot.slane %v1263, 2
        %v2949 = vrot.slane %v1267, 2
        %v2950 = vrot.slane %v1273, 2
        %v2951 = vrot.slane %v1277, 2
        %v2952 = vrot.slane %v1283, 2
        %v2953 = vrot.slane %v1287, 2
        %v2954 = vrot.slane %v1293, 2
        %v2955 = vrot.slane %v1297, 2
        %v2956 = vrot.slane %v1303, 2
        %v2957 = vrot.slane %v1307, 2
        %v2958 = vrot.slane %v1313, 2
        %v2959 = vrot.slane %v1317, 2
        %v2960 = vrot.slane %v1323, 2
        %v2961 = vrot.slane %v1327, 2
        %v2962 = vrot.slane %v1333, 2
        %v2963 = vrot.slane %v1337, 2
        %v2964 = vrot.slane %v1343, 2
        %v2965 = vrot.slane %v1347, 2
        %v2966 = vrot.slane %v1353, 2
        %v2967 = vrot.slane %v1357, 2
        %v2968 = vrot.slane %v1363, 2
        %v2969 = vrot.slane %v1367, 2
        %v2970 = vrot.slane %v1373, 2
        %v2971 = vrot.slane %v1377, 2
        %v2972 = vrot.slane %v1383, 2
        %v2973 = vrot.slane %v1387, 2
        %v2974 = vrot.slane %v1393, 2
        %v2975 = vrot.slane %v1397, 2
        %vm2976 = vcmp.lt.s32.totalorder %v2912, 6
        %v2977 = vsel %vm2976, %v2974, %v2975
        %v2978 = vsel %vm2976, %v2973, %v2974
        %v2979 = vsel %vm2976, %v2972, %v2973
        %v2980 = vsel %vm2976, %v2971, %v2972
        %v2981 = vsel %vm2976, %v2970, %v2971
        %v2982 = vsel %vm2976, %v2969, %v2970
        %v2983 = vsel %vm2976, %v2968, %v2969
        %v2984 = vsel %vm2976, %v2967, %v2968
        %v2985 = vsel %vm2976, %v2966, %v2967
        %v2986 = vsel %vm2976, %v2965, %v2966
        %v2987 = vsel %vm2976, %v2964, %v2965
        %v2988 = vsel %vm2976, %v2963, %v2964
        %v2989 = vsel %vm2976, %v2962, %v2963
        %v2990 = vsel %vm2976, %v2961, %v2962
        %v2991 = vsel %vm2976, %v2960, %v2961
        %v2992 = vsel %vm2976, %v2959, %v2960
        %v2993 = vsel %vm2976, %v2958, %v2959
        %v2994 = vsel %vm2976, %v2957, %v2958
        %v2995 = vsel %vm2976, %v2956, %v2957
        %v2996 = vsel %vm2976, %v2955, %v2956
        %v2997 = vsel %vm2976, %v2954, %v2955
        %v2998 = vsel %vm2976, %v2953, %v2954
        %v2999 = vsel %vm2976, %v2952, %v2953
        %v3000 = vsel %vm2976, %v2951, %v2952
        %v3001 = vsel %vm2976, %v2950, %v2951
        %v3002 = vsel %vm2976, %v2949, %v2950
        %v3003 = vsel %vm2976, %v2948, %v2949
        %v3004 = vsel %vm2976, %v2947, %v2948
        %v3005 = vsel %vm2976, %v2946, %v2947
        %v3006 = vsel %vm2976, %v2945, %v2946
        %v3007 = vsel %vm2976, %v2944, %v2945
        %v3008 = vsel %vm2976, %v2975, %v2944
        %vm3009 = vmand 0, %vm2942
        %vm3010 = vmand 0, %vm2943
        %vm3011 = vmand 1, %vm2942
        %vm3012 = vmand 1, %vm2943
        %v3013 = vsel %vm3009, %v2988, 0.0
        %v3014 = vsel %vm3010, %v2987, 0.0
        %v3015 = vsel %vm3009, %v2986, 0.0
        %v3016 = vsel %vm3010, %v2985, 0.0
        %v3017 = vsel %vm3009, %v2984, 0.0
        %v3018 = vsel %vm3010, %v2983, 0.0
        %v3019 = vsel %vm3009, %v2982, 0.0
        %v3020 = vsel %vm3010, %v2981, 0.0
        %v3021 = vsel %vm3009, %v2980, 0.0
        %v3022 = vsel %vm3010, %v2979, 0.0
        %v3023 = vsel %vm3009, %v2978, 0.0
        %v3024 = vsel %vm3010, %v2977, 0.0
        %v3025 = vsel %vm3011, %v3008, 0.0
        %v3026 = vsel %vm3012, %v3007, 0.0
        %v3027 = vsel %vm3011, %v3006, 0.0
        %v3028 = vsel %vm3012, %v3005, 0.0
        %v3029 = vsel %vm3011, %v3004, 0.0
        %v3030 = vsel %vm3012, %v3003, 0.0
        %v3031 = vsel %vm3011, %v3002, 0.0
        %v3032 = vsel %vm3012, %v3001, 0.0
        %v3033 = vsel %vm3011, %v3000, 0.0
        %v3034 = vsel %vm3012, %v2999, 0.0
        %v3035 = vsel %vm3011, %v2998, 0.0
        %v3036 = vsel %vm3012, %v2997, 0.0
        %v3037 = vsel %vm3011, %v2996, 0.0
        %v3038 = vsel %vm3012, %v2995, 0.0
        %v3039 = vsel %vm3011, %v2994, 0.0
        %v3040 = vsel %vm3012, %v2993, 0.0
        %v3041 = vsel %vm3011, %v2992, 0.0
        %v3042 = vsel %vm3012, %v2991, 0.0
        %v3043 = vsel %vm3011, %v2990, 0.0
        %v3044 = vsel %vm3012, %v2989, 0.0
        %v3045 = vadd.f32 %v1241, %v3013
        %v3046 = vadd.f32 %v1245, %v3014
        %v3047 = vadd.f32 %v1251, %v3015
        %v3048 = vadd.f32 %v1255, %v3016
        %v3049 = vadd.f32 %v1261, %v3017
        %v3050 = vadd.f32 %v1265, %v3018
        %v3051 = vadd.f32 %v1271, %v3019
        %v3052 = vadd.f32 %v1275, %v3020
        %v3053 = vadd.f32 %v1281, %v3021
        %v3054 = vadd.f32 %v1285, %v3022
        %v3055 = vadd.f32 %v1291, %v3023
        %v3056 = vadd.f32 %v1295, %v3024
        %v3057 = vadd.f32 %v1301, %v3025
        %v3058 = vadd.f32 %v1305, %v3026
        %v3059 = vadd.f32 %v1311, %v3027
        %v3060 = vadd.f32 %v1315, %v3028
        %v3061 = vadd.f32 %v1321, %v3029
        %v3062 = vadd.f32 %v1325, %v3030
        %v3063 = vadd.f32 %v1331, %v3031
        %v3064 = vadd.f32 %v1335, %v3032
        %v3065 = vadd.f32 %v1341, %v3033
        %v3066 = vadd.f32 %v1345, %v3034
        %v3067 = vadd.f32 %v1351, %v3035
        %v3068 = vadd.f32 %v1355, %v3036
        %v3069 = vadd.f32 %v1361, %v3037
        %v3070 = vadd.f32 %v1365, %v3038
        %v3071 = vadd.f32 %v1371, %v3039
        %v3072 = vadd.f32 %v1375, %v3040
        %v3073 = vadd.f32 %v1381, %v3041
        %v3074 = vadd.f32 %v1385, %v3042
        %v3075 = vadd.f32 %v1391, %v3043
        %v3076 = vadd.f32 %v1395, %v3044
        %vm3077 = vmand 0, %vm2918
        %vm3078 = vmand 0, %vm2919
        %vm3079 = vmand 1, %vm2918
        %vm3080 = vmand 1, %vm2919
        %v3081 = vsel %vm3077, %v1534, 0.0
        %v3082 = vsel %vm3078, %v1538, 0.0
        %v3083 = vsel %vm3077, %v1544, 0.0
        %v3084 = vsel %vm3078, %v1548, 0.0
        %v3085 = vsel %vm3077, %v1554, 0.0
        %v3086 = vsel %vm3078, %v1558, 0.0
        %v3087 = vsel %vm3077, %v1564, 0.0
        %v3088 = vsel %vm3078, %v1568, 0.0
        %v3089 = vsel %vm3077, %v1574, 0.0
        %v3090 = vsel %vm3078, %v1578, 0.0
        %v3091 = vsel %vm3077, %v1584, 0.0
        %v3092 = vsel %vm3078, %v1588, 0.0
        %v3093 = vsel %vm3079, %v1434, 0.0
        %v3094 = vsel %vm3080, %v1438, 0.0
        %v3095 = vsel %vm3079, %v1444, 0.0
        %v3096 = vsel %vm3080, %v1448, 0.0
        %v3097 = vsel %vm3079, %v1454, 0.0
        %v3098 = vsel %vm3080, %v1458, 0.0
        %v3099 = vsel %vm3079, %v1464, 0.0
        %v3100 = vsel %vm3080, %v1468, 0.0
        %v3101 = vsel %vm3079, %v1474, 0.0
        %v3102 = vsel %vm3080, %v1478, 0.0
        %v3103 = vsel %vm3079, %v1484, 0.0
        %v3104 = vsel %vm3080, %v1488, 0.0
        %v3105 = vsel %vm3079, %v1494, 0.0
        %v3106 = vsel %vm3080, %v1498, 0.0
        %v3107 = vsel %vm3079, %v1504, 0.0
        %v3108 = vsel %vm3080, %v1508, 0.0
        %v3109 = vsel %vm3079, %v1514, 0.0
        %v3110 = vsel %vm3080, %v1518, 0.0
        %v3111 = vsel %vm3079, %v1524, 0.0
        %v3112 = vsel %vm3080, %v1528, 0.0
        %v3113 = vadd.f32 %v3045, %v3081
        %v3114 = vadd.f32 %v3046, %v3082
        %v3115 = vadd.f32 %v3047, %v3083
        %v3116 = vadd.f32 %v3048, %v3084
        %v3117 = vadd.f32 %v3049, %v3085
        %v3118 = vadd.f32 %v3050, %v3086
        %v3119 = vadd.f32 %v3051, %v3087
        %v3120 = vadd.f32 %v3052, %v3088
        %v3121 = vadd.f32 %v3053, %v3089
        %v3122 = vadd.f32 %v3054, %v3090
        %v3123 = vadd.f32 %v3055, %v3091
        %v3124 = vadd.f32 %v3056, %v3092
        %v3125 = vadd.f32 %v3057, %v3093
        %v3126 = vadd.f32 %v3058, %v3094
        %v3127 = vadd.f32 %v3059, %v3095
        %v3128 = vadd.f32 %v3060, %v3096
        %v3129 = vadd.f32 %v3061, %v3097
        %v3130 = vadd.f32 %v3062, %v3098
        %v3131 = vadd.f32 %v3063, %v3099
        %v3132 = vadd.f32 %v3064, %v3100
        %v3133 = vadd.f32 %v3065, %v3101
        %v3134 = vadd.f32 %v3066, %v3102
        %v3135 = vadd.f32 %v3067, %v3103
        %v3136 = vadd.f32 %v3068, %v3104
        %v3137 = vadd.f32 %v3069, %v3105
        %v3138 = vadd.f32 %v3070, %v3106
        %v3139 = vadd.f32 %v3071, %v3107
        %v3140 = vadd.f32 %v3072, %v3108
        %v3141 = vadd.f32 %v3073, %v3109
        %v3142 = vadd.f32 %v3074, %v3110
        %v3143 = vadd.f32 %v3075, %v3111
        %v3144 = vadd.f32 %v3076, %v3112
        %v3145 = vrot.slane %v1436, 6
        %v3146 = vrot.slane %v1440, 6
        %v3147 = vrot.slane %v1446, 6
        %v3148 = vrot.slane %v1450, 6
        %v3149 = vrot.slane %v1456, 6
        %v3150 = vrot.slane %v1460, 6
        %v3151 = vrot.slane %v1466, 6
        %v3152 = vrot.slane %v1470, 6
        %v3153 = vrot.slane %v1476, 6
        %v3154 = vrot.slane %v1480, 6
        %v3155 = vrot.slane %v1486, 6
        %v3156 = vrot.slane %v1490, 6
        %v3157 = vrot.slane %v1496, 6
        %v3158 = vrot.slane %v1500, 6
        %v3159 = vrot.slane %v1506, 6
        %v3160 = vrot.slane %v1510, 6
        %v3161 = vrot.slane %v1516, 6
        %v3162 = vrot.slane %v1520, 6
        %v3163 = vrot.slane %v1526, 6
        %v3164 = vrot.slane %v1530, 6
        %v3165 = vrot.slane %v1536, 6
        %v3166 = vrot.slane %v1540, 6
        %v3167 = vrot.slane %v1546, 6
        %v3168 = vrot.slane %v1550, 6
        %v3169 = vrot.slane %v1556, 6
        %v3170 = vrot.slane %v1560, 6
        %v3171 = vrot.slane %v1566, 6
        %v3172 = vrot.slane %v1570, 6
        %v3173 = vrot.slane %v1576, 6
        %v3174 = vrot.slane %v1580, 6
        %v3175 = vrot.slane %v1586, 6
        %v3176 = vrot.slane %v1590, 6
        %vm3177 = vcmp.lt.s32.totalorder %v2912, 2
        %v3178 = vsel %vm3177, %v3175, %v3176
        %v3179 = vsel %vm3177, %v3174, %v3175
        %v3180 = vsel %vm3177, %v3173, %v3174
        %v3181 = vsel %vm3177, %v3172, %v3173
        %v3182 = vsel %vm3177, %v3171, %v3172
        %v3183 = vsel %vm3177, %v3170, %v3171
        %v3184 = vsel %vm3177, %v3169, %v3170
        %v3185 = vsel %vm3177, %v3168, %v3169
        %v3186 = vsel %vm3177, %v3167, %v3168
        %v3187 = vsel %vm3177, %v3166, %v3167
        %v3188 = vsel %vm3177, %v3165, %v3166
        %v3189 = vsel %vm3177, %v3164, %v3165
        %v3190 = vsel %vm3177, %v3163, %v3164
        %v3191 = vsel %vm3177, %v3162, %v3163
        %v3192 = vsel %vm3177, %v3161, %v3162
        %v3193 = vsel %vm3177, %v3160, %v3161
        %v3194 = vsel %vm3177, %v3159, %v3160
        %v3195 = vsel %vm3177, %v3158, %v3159
        %v3196 = vsel %vm3177, %v3157, %v3158
        %v3197 = vsel %vm3177, %v3156, %v3157
        %v3198 = vsel %vm3177, %v3155, %v3156
        %v3199 = vsel %vm3177, %v3154, %v3155
        %v3200 = vsel %vm3177, %v3153, %v3154
        %v3201 = vsel %vm3177, %v3152, %v3153
        %v3202 = vsel %vm3177, %v3151, %v3152
        %v3203 = vsel %vm3177, %v3150, %v3151
        %v3204 = vsel %vm3177, %v3149, %v3150
        %v3205 = vsel %vm3177, %v3148, %v3149
        %v3206 = vsel %vm3177, %v3147, %v3148
        %v3207 = vsel %vm3177, %v3146, %v3147
        %v3208 = vsel %vm3177, %v3145, %v3146
        %v3209 = vsel %vm3177, %v3176, %v3145
        %vm3210 = vmand 0, %vm2924
        %vm3211 = vmand 0, %vm2925
        %vm3212 = vmand 1, %vm2924
        %vm3213 = vmand 1, %vm2925
        %v3214 = vsel %vm3210, %v3188, 0.0
        %v3215 = vsel %vm3211, %v3187, 0.0
        %v3216 = vsel %vm3210, %v3186, 0.0
        %v3217 = vsel %vm3211, %v3185, 0.0
        %v3218 = vsel %vm3210, %v3184, 0.0
        %v3219 = vsel %vm3211, %v3183, 0.0
        %v3220 = vsel %vm3210, %v3182, 0.0
        %v3221 = vsel %vm3211, %v3181, 0.0
        %v3222 = vsel %vm3210, %v3180, 0.0
        %v3223 = vsel %vm3211, %v3179, 0.0
        %v3224 = vsel %vm3210, %v3178, 0.0
        %v3225 = vsel %vm3211, %v3209, 0.0
        %v3226 = vsel %vm3212, %v3208, 0.0
        %v3227 = vsel %vm3213, %v3207, 0.0
        %v3228 = vsel %vm3212, %v3206, 0.0
        %v3229 = vsel %vm3213, %v3205, 0.0
        %v3230 = vsel %vm3212, %v3204, 0.0
        %v3231 = vsel %vm3213, %v3203, 0.0
        %v3232 = vsel %vm3212, %v3202, 0.0
        %v3233 = vsel %vm3213, %v3201, 0.0
        %v3234 = vsel %vm3212, %v3200, 0.0
        %v3235 = vsel %vm3213, %v3199, 0.0
        %v3236 = vsel %vm3212, %v3198, 0.0
        %v3237 = vsel %vm3213, %v3197, 0.0
        %v3238 = vsel %vm3212, %v3196, 0.0
        %v3239 = vsel %vm3213, %v3195, 0.0
        %v3240 = vsel %vm3212, %v3194, 0.0
        %v3241 = vsel %vm3213, %v3193, 0.0
        %v3242 = vsel %vm3212, %v3192, 0.0
        %v3243 = vsel %vm3213, %v3191, 0.0
        %v3244 = vsel %vm3212, %v3190, 0.0
        %v3245 = vsel %vm3213, %v3189, 0.0
        %v3246 = vadd.f32 %v3113, %v3214
        %v3247 = vadd.f32 %v3114, %v3215
        %v3248 = vadd.f32 %v3115, %v3216
        %v3249 = vadd.f32 %v3116, %v3217
        %v3250 = vadd.f32 %v3117, %v3218
        %v3251 = vadd.f32 %v3118, %v3219
        %v3252 = vadd.f32 %v3119, %v3220
        %v3253 = vadd.f32 %v3120, %v3221
        %v3254 = vadd.f32 %v3121, %v3222
        %v3255 = vadd.f32 %v3122, %v3223
        %v3256 = vadd.f32 %v3123, %v3224
        %v3257 = vadd.f32 %v3124, %v3225
        %v3258 = vadd.f32 %v3125, %v3226
        %v3259 = vadd.f32 %v3126, %v3227
        %v3260 = vadd.f32 %v3127, %v3228
        %v3261 = vadd.f32 %v3128, %v3229
        %v3262 = vadd.f32 %v3129, %v3230
        %v3263 = vadd.f32 %v3130, %v3231
        %v3264 = vadd.f32 %v3131, %v3232
        %v3265 = vadd.f32 %v3132, %v3233
        %v3266 = vadd.f32 %v3133, %v3234
        %v3267 = vadd.f32 %v3134, %v3235
        %v3268 = vadd.f32 %v3135, %v3236
        %v3269 = vadd.f32 %v3136, %v3237
        %v3270 = vadd.f32 %v3137, %v3238
        %v3271 = vadd.f32 %v3138, %v3239
        %v3272 = vadd.f32 %v3139, %v3240
        %v3273 = vadd.f32 %v3140, %v3241
        %v3274 = vadd.f32 %v3141, %v3242
        %v3275 = vadd.f32 %v3142, %v3243
        %v3276 = vadd.f32 %v3143, %v3244
        %v3277 = vadd.f32 %v3144, %v3245
        %v3278 = vrot.slane %v1627, 2
        %v3279 = vrot.slane %v1631, 2
        %v3280 = vrot.slane %v1637, 2
        %v3281 = vrot.slane %v1641, 2
        %v3282 = vrot.slane %v1647, 2
        %v3283 = vrot.slane %v1651, 2
        %v3284 = vrot.slane %v1657, 2
        %v3285 = vrot.slane %v1661, 2
        %v3286 = vrot.slane %v1667, 2
        %v3287 = vrot.slane %v1671, 2
        %v3288 = vrot.slane %v1677, 2
        %v3289 = vrot.slane %v1681, 2
        %v3290 = vrot.slane %v1687, 2
        %v3291 = vrot.slane %v1691, 2
        %v3292 = vrot.slane %v1697, 2
        %v3293 = vrot.slane %v1701, 2
        %v3294 = vrot.slane %v1707, 2
        %v3295 = vrot.slane %v1711, 2
        %v3296 = vrot.slane %v1717, 2
        %v3297 = vrot.slane %v1721, 2
        %v3298 = vrot.slane %v1727, 2
        %v3299 = vrot.slane %v1731, 2
        %v3300 = vrot.slane %v1737, 2
        %v3301 = vrot.slane %v1741, 2
        %v3302 = vrot.slane %v1747, 2
        %v3303 = vrot.slane %v1751, 2
        %v3304 = vrot.slane %v1757, 2
        %v3305 = vrot.slane %v1761, 2
        %v3306 = vrot.slane %v1767, 2
        %v3307 = vrot.slane %v1771, 2
        %v3308 = vrot.slane %v1777, 2
        %v3309 = vrot.slane %v1781, 2
        %v3310 = vsel %vm2976, %v3308, %v3309
        %v3311 = vsel %vm2976, %v3307, %v3308
        %v3312 = vsel %vm2976, %v3306, %v3307
        %v3313 = vsel %vm2976, %v3305, %v3306
        %v3314 = vsel %vm2976, %v3304, %v3305
        %v3315 = vsel %vm2976, %v3303, %v3304
        %v3316 = vsel %vm2976, %v3302, %v3303
        %v3317 = vsel %vm2976, %v3301, %v3302
        %v3318 = vsel %vm2976, %v3300, %v3301
        %v3319 = vsel %vm2976, %v3299, %v3300
        %v3320 = vsel %vm2976, %v3298, %v3299
        %v3321 = vsel %vm2976, %v3297, %v3298
        %v3322 = vsel %vm2976, %v3296, %v3297
        %v3323 = vsel %vm2976, %v3295, %v3296
        %v3324 = vsel %vm2976, %v3294, %v3295
        %v3325 = vsel %vm2976, %v3293, %v3294
        %v3326 = vsel %vm2976, %v3292, %v3293
        %v3327 = vsel %vm2976, %v3291, %v3292
        %v3328 = vsel %vm2976, %v3290, %v3291
        %v3329 = vsel %vm2976, %v3289, %v3290
        %v3330 = vsel %vm2976, %v3288, %v3289
        %v3331 = vsel %vm2976, %v3287, %v3288
        %v3332 = vsel %vm2976, %v3286, %v3287
        %v3333 = vsel %vm2976, %v3285, %v3286
        %v3334 = vsel %vm2976, %v3284, %v3285
        %v3335 = vsel %vm2976, %v3283, %v3284
        %v3336 = vsel %vm2976, %v3282, %v3283
        %v3337 = vsel %vm2976, %v3281, %v3282
        %v3338 = vsel %vm2976, %v3280, %v3281
        %v3339 = vsel %vm2976, %v3279, %v3280
        %v3340 = vsel %vm2976, %v3278, %v3279
        %v3341 = vsel %vm2976, %v3309, %v3278
        %v3342 = vsel %vm3011, %v3341, 0.0
        %v3343 = vsel %vm3012, %v3340, 0.0
        %v3344 = vsel %vm3011, %v3339, 0.0
        %v3345 = vsel %vm3012, %v3338, 0.0
        %v3346 = vsel %vm3011, %v3337, 0.0
        %v3347 = vsel %vm3012, %v3336, 0.0
        %v3348 = vsel %vm3011, %v3335, 0.0
        %v3349 = vsel %vm3012, %v3334, 0.0
        %v3350 = vsel %vm3011, %v3333, 0.0
        %v3351 = vsel %vm3012, %v3332, 0.0
        %v3352 = vsel %vm3011, %v3331, 0.0
        %v3353 = vsel %vm3012, %v3330, 0.0
        %v3354 = vsel %vm3011, %v3329, 0.0
        %v3355 = vsel %vm3012, %v3328, 0.0
        %v3356 = vsel %vm3011, %v3327, 0.0
        %v3357 = vsel %vm3012, %v3326, 0.0
        %v3358 = vsel %vm3011, %v3325, 0.0
        %v3359 = vsel %vm3012, %v3324, 0.0
        %v3360 = vsel %vm3011, %v3323, 0.0
        %v3361 = vsel %vm3012, %v3322, 0.0
        %v3362 = vsel %vm3011, %v3321, 0.0
        %v3363 = vsel %vm3012, %v3320, 0.0
        %v3364 = vsel %vm3011, %v3319, 0.0
        %v3365 = vsel %vm3012, %v3318, 0.0
        %v3366 = vsel %vm3011, %v3317, 0.0
        %v3367 = vsel %vm3012, %v3316, 0.0
        %v3368 = vsel %vm3011, %v3315, 0.0
        %v3369 = vsel %vm3012, %v3314, 0.0
        %v3370 = vsel %vm3011, %v3313, 0.0
        %v3371 = vsel %vm3012, %v3312, 0.0
        %v3372 = vsel %vm3011, %v3311, 0.0
        %v3373 = vsel %vm3012, %v3310, 0.0
        %v3374 = vadd.f32 %v3246, %v3342
        %v3375 = vadd.f32 %v3247, %v3343
        %v3376 = vadd.f32 %v3248, %v3344
        %v3377 = vadd.f32 %v3249, %v3345
        %v3378 = vadd.f32 %v3250, %v3346
        %v3379 = vadd.f32 %v3251, %v3347
        %v3380 = vadd.f32 %v3252, %v3348
        %v3381 = vadd.f32 %v3253, %v3349
        %v3382 = vadd.f32 %v3254, %v3350
        %v3383 = vadd.f32 %v3255, %v3351
        %v3384 = vadd.f32 %v3256, %v3352
        %v3385 = vadd.f32 %v3257, %v3353
        %v3386 = vadd.f32 %v3258, %v3354
        %v3387 = vadd.f32 %v3259, %v3355
        %v3388 = vadd.f32 %v3260, %v3356
        %v3389 = vadd.f32 %v3261, %v3357
        %v3390 = vadd.f32 %v3262, %v3358
        %v3391 = vadd.f32 %v3263, %v3359
        %v3392 = vadd.f32 %v3264, %v3360
        %v3393 = vadd.f32 %v3265, %v3361
        %v3394 = vadd.f32 %v3266, %v3362
        %v3395 = vadd.f32 %v3267, %v3363
        %v3396 = vadd.f32 %v3268, %v3364
        %v3397 = vadd.f32 %v3269, %v3365
        %v3398 = vadd.f32 %v3270, %v3366
        %v3399 = vadd.f32 %v3271, %v3367
        %v3400 = vadd.f32 %v3272, %v3368
        %v3401 = vadd.f32 %v3273, %v3369
        %v3402 = vadd.f32 %v3274, %v3370
        %v3403 = vadd.f32 %v3275, %v3371
        %v3404 = vadd.f32 %v3276, %v3372
        %v3405 = vadd.f32 %v3277, %v3373
        %v3406 = vrot.slane %v1629, 6
        %v3407 = vrot.slane %v1633, 6
        %v3408 = vrot.slane %v1639, 6
        %v3409 = vrot.slane %v1643, 6
        %v3410 = vrot.slane %v1649, 6
        %v3411 = vrot.slane %v1653, 6
        %v3412 = vrot.slane %v1659, 6
        %v3413 = vrot.slane %v1663, 6
        %v3414 = vrot.slane %v1669, 6
        %v3415 = vrot.slane %v1673, 6
        %v3416 = vrot.slane %v1679, 6
        %v3417 = vrot.slane %v1683, 6
        %v3418 = vrot.slane %v1689, 6
        %v3419 = vrot.slane %v1693, 6
        %v3420 = vrot.slane %v1699, 6
        %v3421 = vrot.slane %v1703, 6
        %v3422 = vrot.slane %v1709, 6
        %v3423 = vrot.slane %v1713, 6
        %v3424 = vrot.slane %v1719, 6
        %v3425 = vrot.slane %v1723, 6
        %v3426 = vrot.slane %v1729, 6
        %v3427 = vrot.slane %v1733, 6
        %v3428 = vrot.slane %v1739, 6
        %v3429 = vrot.slane %v1743, 6
        %v3430 = vrot.slane %v1749, 6
        %v3431 = vrot.slane %v1753, 6
        %v3432 = vrot.slane %v1759, 6
        %v3433 = vrot.slane %v1763, 6
        %v3434 = vrot.slane %v1769, 6
        %v3435 = vrot.slane %v1773, 6
        %v3436 = vrot.slane %v1779, 6
        %v3437 = vrot.slane %v1783, 6
        %v3438 = vsel %vm3177, %v3436, %v3437
        %v3439 = vsel %vm3177, %v3435, %v3436
        %v3440 = vsel %vm3177, %v3434, %v3435
        %v3441 = vsel %vm3177, %v3433, %v3434
        %v3442 = vsel %vm3177, %v3432, %v3433
        %v3443 = vsel %vm3177, %v3431, %v3432
        %v3444 = vsel %vm3177, %v3430, %v3431
        %v3445 = vsel %vm3177, %v3429, %v3430
        %v3446 = vsel %vm3177, %v3428, %v3429
        %v3447 = vsel %vm3177, %v3427, %v3428
        %v3448 = vsel %vm3177, %v3426, %v3427
        %v3449 = vsel %vm3177, %v3425, %v3426
        %v3450 = vsel %vm3177, %v3424, %v3425
        %v3451 = vsel %vm3177, %v3423, %v3424
        %v3452 = vsel %vm3177, %v3422, %v3423
        %v3453 = vsel %vm3177, %v3421, %v3422
        %v3454 = vsel %vm3177, %v3420, %v3421
        %v3455 = vsel %vm3177, %v3419, %v3420
        %v3456 = vsel %vm3177, %v3418, %v3419
        %v3457 = vsel %vm3177, %v3417, %v3418
        %v3458 = vsel %vm3177, %v3416, %v3417
        %v3459 = vsel %vm3177, %v3415, %v3416
        %v3460 = vsel %vm3177, %v3414, %v3415
        %v3461 = vsel %vm3177, %v3413, %v3414
        %v3462 = vsel %vm3177, %v3412, %v3413
        %v3463 = vsel %vm3177, %v3411, %v3412
        %v3464 = vsel %vm3177, %v3410, %v3411
        %v3465 = vsel %vm3177, %v3409, %v3410
        %v3466 = vsel %vm3177, %v3408, %v3409
        %v3467 = vsel %vm3177, %v3407, %v3408
        %v3468 = vsel %vm3177, %v3406, %v3407
        %v3469 = vsel %vm3177, %v3437, %v3406
        %v3470 = vsel %vm3212, %v3468, 0.0
        %v3471 = vsel %vm3213, %v3467, 0.0
        %v3472 = vsel %vm3212, %v3466, 0.0
        %v3473 = vsel %vm3213, %v3465, 0.0
        %v3474 = vsel %vm3212, %v3464, 0.0
        %v3475 = vsel %vm3213, %v3463, 0.0
        %v3476 = vsel %vm3212, %v3462, 0.0
        %v3477 = vsel %vm3213, %v3461, 0.0
        %v3478 = vsel %vm3212, %v3460, 0.0
        %v3479 = vsel %vm3213, %v3459, 0.0
        %v3480 = vsel %vm3212, %v3458, 0.0
        %v3481 = vsel %vm3213, %v3457, 0.0
        %v3482 = vsel %vm3212, %v3456, 0.0
        %v3483 = vsel %vm3213, %v3455, 0.0
        %v3484 = vsel %vm3212, %v3454, 0.0
        %v3485 = vsel %vm3213, %v3453, 0.0
        %v3486 = vsel %vm3212, %v3452, 0.0
        %v3487 = vsel %vm3213, %v3451, 0.0
        %v3488 = vsel %vm3212, %v3450, 0.0
        %v3489 = vsel %vm3213, %v3449, 0.0
        %v3490 = vsel %vm3212, %v3448, 0.0
        %v3491 = vsel %vm3213, %v3447, 0.0
        %v3492 = vsel %vm3212, %v3446, 0.0
        %v3493 = vsel %vm3213, %v3445, 0.0
        %v3494 = vsel %vm3212, %v3444, 0.0
        %v3495 = vsel %vm3213, %v3443, 0.0
        %v3496 = vsel %vm3212, %v3442, 0.0
        %v3497 = vsel %vm3213, %v3441, 0.0
        %v3498 = vsel %vm3212, %v3440, 0.0
        %v3499 = vsel %vm3213, %v3439, 0.0
        %v3500 = vsel %vm3212, %v3438, 0.0
        %v3501 = vsel %vm3213, %v3469, 0.0
        %v3502 = vadd.f32 %v3374, %v3470
        %v3503 = vadd.f32 %v3375, %v3471
        %v3504 = vadd.f32 %v3376, %v3472
        %v3505 = vadd.f32 %v3377, %v3473
        %v3506 = vadd.f32 %v3378, %v3474
        %v3507 = vadd.f32 %v3379, %v3475
        %v3508 = vadd.f32 %v3380, %v3476
        %v3509 = vadd.f32 %v3381, %v3477
        %v3510 = vadd.f32 %v3382, %v3478
        %v3511 = vadd.f32 %v3383, %v3479
        %v3512 = vadd.f32 %v3384, %v3480
        %v3513 = vadd.f32 %v3385, %v3481
        %v3514 = vadd.f32 %v3386, %v3482
        %v3515 = vadd.f32 %v3387, %v3483
        %v3516 = vadd.f32 %v3388, %v3484
        %v3517 = vadd.f32 %v3389, %v3485
        %v3518 = vadd.f32 %v3390, %v3486
        %v3519 = vadd.f32 %v3391, %v3487
        %v3520 = vadd.f32 %v3392, %v3488
        %v3521 = vadd.f32 %v3393, %v3489
        %v3522 = vadd.f32 %v3394, %v3490
        %v3523 = vadd.f32 %v3395, %v3491
        %v3524 = vadd.f32 %v3396, %v3492
        %v3525 = vadd.f32 %v3397, %v3493
        %v3526 = vadd.f32 %v3398, %v3494
        %v3527 = vadd.f32 %v3399, %v3495
        %v3528 = vadd.f32 %v3400, %v3496
        %v3529 = vadd.f32 %v3401, %v3497
        %v3530 = vadd.f32 %v3402, %v3498
        %v3531 = vadd.f32 %v3403, %v3499
        %v3532 = vadd.f32 %v3404, %v3500
        %v3533 = vadd.f32 %v3405, %v3501
        %v3534 = vrot.slane %v1820, 2
        %v3535 = vrot.slane %v1824, 2
        %v3536 = vrot.slane %v1830, 2
        %v3537 = vrot.slane %v1834, 2
        %v3538 = vrot.slane %v1840, 2
        %v3539 = vrot.slane %v1844, 2
        %v3540 = vrot.slane %v1850, 2
        %v3541 = vrot.slane %v1854, 2
        %v3542 = vrot.slane %v1860, 2
        %v3543 = vrot.slane %v1864, 2
        %v3544 = vrot.slane %v1870, 2
        %v3545 = vrot.slane %v1874, 2
        %v3546 = vrot.slane %v1880, 2
        %v3547 = vrot.slane %v1884, 2
        %v3548 = vrot.slane %v1890, 2
        %v3549 = vrot.slane %v1894, 2
        %v3550 = vrot.slane %v1900, 2
        %v3551 = vrot.slane %v1904, 2
        %v3552 = vrot.slane %v1910, 2
        %v3553 = vrot.slane %v1914, 2
        %v3554 = vrot.slane %v1920, 2
        %v3555 = vrot.slane %v1924, 2
        %v3556 = vrot.slane %v1930, 2
        %v3557 = vrot.slane %v1934, 2
        %v3558 = vrot.slane %v1940, 2
        %v3559 = vrot.slane %v1944, 2
        %v3560 = vrot.slane %v1950, 2
        %v3561 = vrot.slane %v1954, 2
        %v3562 = vrot.slane %v1960, 2
        %v3563 = vrot.slane %v1964, 2
        %v3564 = vrot.slane %v1970, 2
        %v3565 = vrot.slane %v1974, 2
        %v3566 = vsel %vm2976, %v3564, %v3565
        %v3567 = vsel %vm2976, %v3563, %v3564
        %v3568 = vsel %vm2976, %v3562, %v3563
        %v3569 = vsel %vm2976, %v3561, %v3562
        %v3570 = vsel %vm2976, %v3560, %v3561
        %v3571 = vsel %vm2976, %v3559, %v3560
        %v3572 = vsel %vm2976, %v3558, %v3559
        %v3573 = vsel %vm2976, %v3557, %v3558
        %v3574 = vsel %vm2976, %v3556, %v3557
        %v3575 = vsel %vm2976, %v3555, %v3556
        %v3576 = vsel %vm2976, %v3554, %v3555
        %v3577 = vsel %vm2976, %v3553, %v3554
        %v3578 = vsel %vm2976, %v3552, %v3553
        %v3579 = vsel %vm2976, %v3551, %v3552
        %v3580 = vsel %vm2976, %v3550, %v3551
        %v3581 = vsel %vm2976, %v3549, %v3550
        %v3582 = vsel %vm2976, %v3548, %v3549
        %v3583 = vsel %vm2976, %v3547, %v3548
        %v3584 = vsel %vm2976, %v3546, %v3547
        %v3585 = vsel %vm2976, %v3545, %v3546
        %v3586 = vsel %vm2976, %v3544, %v3545
        %v3587 = vsel %vm2976, %v3543, %v3544
        %v3588 = vsel %vm2976, %v3542, %v3543
        %v3589 = vsel %vm2976, %v3541, %v3542
        %v3590 = vsel %vm2976, %v3540, %v3541
        %v3591 = vsel %vm2976, %v3539, %v3540
        %v3592 = vsel %vm2976, %v3538, %v3539
        %v3593 = vsel %vm2976, %v3537, %v3538
        %v3594 = vsel %vm2976, %v3536, %v3537
        %v3595 = vsel %vm2976, %v3535, %v3536
        %v3596 = vsel %vm2976, %v3534, %v3535
        %v3597 = vsel %vm2976, %v3565, %v3534
        %v3598 = vsel %vm3011, %v3585, 0.0
        %v3599 = vsel %vm3012, %v3584, 0.0
        %v3600 = vsel %vm3011, %v3583, 0.0
        %v3601 = vsel %vm3012, %v3582, 0.0
        %v3602 = vsel %vm3011, %v3581, 0.0
        %v3603 = vsel %vm3012, %v3580, 0.0
        %v3604 = vsel %vm3011, %v3579, 0.0
        %v3605 = vsel %vm3012, %v3578, 0.0
        %v3606 = vsel %vm3011, %v3577, 0.0
        %v3607 = vsel %vm3012, %v3576, 0.0
        %v3608 = vsel %vm3011, %v3575, 0.0
        %v3609 = vsel %vm3012, %v3574, 0.0
        %v3610 = vsel %vm3011, %v3573, 0.0
        %v3611 = vsel %vm3012, %v3572, 0.0
        %v3612 = vsel %vm3011, %v3571, 0.0
        %v3613 = vsel %vm3012, %v3570, 0.0
        %v3614 = vsel %vm3011, %v3569, 0.0
        %v3615 = vsel %vm3012, %v3568, 0.0
        %v3616 = vsel %vm3011, %v3567, 0.0
        %v3617 = vsel %vm3012, %v3566, 0.0
        %v3618 = vsel %vm3009, %v3597, 0.0
        %v3619 = vsel %vm3010, %v3596, 0.0
        %v3620 = vsel %vm3009, %v3595, 0.0
        %v3621 = vsel %vm3010, %v3594, 0.0
        %v3622 = vsel %vm3009, %v3593, 0.0
        %v3623 = vsel %vm3010, %v3592, 0.0
        %v3624 = vsel %vm3009, %v3591, 0.0
        %v3625 = vsel %vm3010, %v3590, 0.0
        %v3626 = vsel %vm3009, %v3589, 0.0
        %v3627 = vsel %vm3010, %v3588, 0.0
        %v3628 = vsel %vm3009, %v3587, 0.0
        %v3629 = vsel %vm3010, %v3586, 0.0
        %v3630 = vadd.f32 %v3502, %v3598
        %v3631 = vadd.f32 %v3503, %v3599
        %v3632 = vadd.f32 %v3504, %v3600
        %v3633 = vadd.f32 %v3505, %v3601
        %v3634 = vadd.f32 %v3506, %v3602
        %v3635 = vadd.f32 %v3507, %v3603
        %v3636 = vadd.f32 %v3508, %v3604
        %v3637 = vadd.f32 %v3509, %v3605
        %v3638 = vadd.f32 %v3510, %v3606
        %v3639 = vadd.f32 %v3511, %v3607
        %v3640 = vadd.f32 %v3512, %v3608
        %v3641 = vadd.f32 %v3513, %v3609
        %v3642 = vadd.f32 %v3514, %v3610
        %v3643 = vadd.f32 %v3515, %v3611
        %v3644 = vadd.f32 %v3516, %v3612
        %v3645 = vadd.f32 %v3517, %v3613
        %v3646 = vadd.f32 %v3518, %v3614
        %v3647 = vadd.f32 %v3519, %v3615
        %v3648 = vadd.f32 %v3520, %v3616
        %v3649 = vadd.f32 %v3521, %v3617
        %v3650 = vadd.f32 %v3522, %v3618
        %v3651 = vadd.f32 %v3523, %v3619
        %v3652 = vadd.f32 %v3524, %v3620
        %v3653 = vadd.f32 %v3525, %v3621
        %v3654 = vadd.f32 %v3526, %v3622
        %v3655 = vadd.f32 %v3527, %v3623
        %v3656 = vadd.f32 %v3528, %v3624
        %v3657 = vadd.f32 %v3529, %v3625
        %v3658 = vadd.f32 %v3530, %v3626
        %v3659 = vadd.f32 %v3531, %v3627
        %v3660 = vadd.f32 %v3532, %v3628
        %v3661 = vadd.f32 %v3533, %v3629
        %v3662 = vsel %vm3079, %v1882, 0.0
        %v3663 = vsel %vm3080, %v1886, 0.0
        %v3664 = vsel %vm3079, %v1892, 0.0
        %v3665 = vsel %vm3080, %v1896, 0.0
        %v3666 = vsel %vm3079, %v1902, 0.0
        %v3667 = vsel %vm3080, %v1906, 0.0
        %v3668 = vsel %vm3079, %v1912, 0.0
        %v3669 = vsel %vm3080, %v1916, 0.0
        %v3670 = vsel %vm3079, %v1922, 0.0
        %v3671 = vsel %vm3080, %v1926, 0.0
        %v3672 = vsel %vm3079, %v1932, 0.0
        %v3673 = vsel %vm3080, %v1936, 0.0
        %v3674 = vsel %vm3079, %v1942, 0.0
        %v3675 = vsel %vm3080, %v1946, 0.0
        %v3676 = vsel %vm3079, %v1952, 0.0
        %v3677 = vsel %vm3080, %v1956, 0.0
        %v3678 = vsel %vm3079, %v1962, 0.0
        %v3679 = vsel %vm3080, %v1966, 0.0
        %v3680 = vsel %vm3079, %v1972, 0.0
        %v3681 = vsel %vm3080, %v1976, 0.0
        %v3682 = vsel %vm3077, %v1822, 0.0
        %v3683 = vsel %vm3078, %v1826, 0.0
        %v3684 = vsel %vm3077, %v1832, 0.0
        %v3685 = vsel %vm3078, %v1836, 0.0
        %v3686 = vsel %vm3077, %v1842, 0.0
        %v3687 = vsel %vm3078, %v1846, 0.0
        %v3688 = vsel %vm3077, %v1852, 0.0
        %v3689 = vsel %vm3078, %v1856, 0.0
        %v3690 = vsel %vm3077, %v1862, 0.0
        %v3691 = vsel %vm3078, %v1866, 0.0
        %v3692 = vsel %vm3077, %v1872, 0.0
        %v3693 = vsel %vm3078, %v1876, 0.0
        %v3694 = vadd.f32 %v3630, %v3662
        %v3695 = vadd.f32 %v3631, %v3663
        %v3696 = vadd.f32 %v3632, %v3664
        %v3697 = vadd.f32 %v3633, %v3665
        %v3698 = vadd.f32 %v3634, %v3666
        %v3699 = vadd.f32 %v3635, %v3667
        %v3700 = vadd.f32 %v3636, %v3668
        %v3701 = vadd.f32 %v3637, %v3669
        %v3702 = vadd.f32 %v3638, %v3670
        %v3703 = vadd.f32 %v3639, %v3671
        %v3704 = vadd.f32 %v3640, %v3672
        %v3705 = vadd.f32 %v3641, %v3673
        %v3706 = vadd.f32 %v3642, %v3674
        %v3707 = vadd.f32 %v3643, %v3675
        %v3708 = vadd.f32 %v3644, %v3676
        %v3709 = vadd.f32 %v3645, %v3677
        %v3710 = vadd.f32 %v3646, %v3678
        %v3711 = vadd.f32 %v3647, %v3679
        %v3712 = vadd.f32 %v3648, %v3680
        %v3713 = vadd.f32 %v3649, %v3681
        %v3714 = vadd.f32 %v3650, %v3682
        %v3715 = vadd.f32 %v3651, %v3683
        %v3716 = vadd.f32 %v3652, %v3684
        %v3717 = vadd.f32 %v3653, %v3685
        %v3718 = vadd.f32 %v3654, %v3686
        %v3719 = vadd.f32 %v3655, %v3687
        %v3720 = vadd.f32 %v3656, %v3688
        %v3721 = vadd.f32 %v3657, %v3689
        %v3722 = vadd.f32 %v3658, %v3690
        %v3723 = vadd.f32 %v3659, %v3691
        %v3724 = vadd.f32 %v3660, %v3692
        %v3725 = vadd.f32 %v3661, %v3693
        %v3726 = vrot.slane %v2013, 6
        %v3727 = vrot.slane %v2017, 6
        %v3728 = vrot.slane %v2023, 6
        %v3729 = vrot.slane %v2027, 6
        %v3730 = vrot.slane %v2033, 6
        %v3731 = vrot.slane %v2037, 6
        %v3732 = vrot.slane %v2043, 6
        %v3733 = vrot.slane %v2047, 6
        %v3734 = vrot.slane %v2053, 6
        %v3735 = vrot.slane %v2057, 6
        %v3736 = vrot.slane %v2063, 6
        %v3737 = vrot.slane %v2067, 6
        %v3738 = vrot.slane %v2073, 6
        %v3739 = vrot.slane %v2077, 6
        %v3740 = vrot.slane %v2083, 6
        %v3741 = vrot.slane %v2087, 6
        %v3742 = vrot.slane %v2093, 6
        %v3743 = vrot.slane %v2097, 6
        %v3744 = vrot.slane %v2103, 6
        %v3745 = vrot.slane %v2107, 6
        %v3746 = vrot.slane %v2113, 6
        %v3747 = vrot.slane %v2117, 6
        %v3748 = vrot.slane %v2123, 6
        %v3749 = vrot.slane %v2127, 6
        %v3750 = vrot.slane %v2133, 6
        %v3751 = vrot.slane %v2137, 6
        %v3752 = vrot.slane %v2143, 6
        %v3753 = vrot.slane %v2147, 6
        %v3754 = vrot.slane %v2153, 6
        %v3755 = vrot.slane %v2157, 6
        %v3756 = vrot.slane %v2163, 6
        %v3757 = vrot.slane %v2167, 6
        %v3758 = vsel %vm3177, %v3756, %v3757
        %v3759 = vsel %vm3177, %v3755, %v3756
        %v3760 = vsel %vm3177, %v3754, %v3755
        %v3761 = vsel %vm3177, %v3753, %v3754
        %v3762 = vsel %vm3177, %v3752, %v3753
        %v3763 = vsel %vm3177, %v3751, %v3752
        %v3764 = vsel %vm3177, %v3750, %v3751
        %v3765 = vsel %vm3177, %v3749, %v3750
        %v3766 = vsel %vm3177, %v3748, %v3749
        %v3767 = vsel %vm3177, %v3747, %v3748
        %v3768 = vsel %vm3177, %v3746, %v3747
        %v3769 = vsel %vm3177, %v3745, %v3746
        %v3770 = vsel %vm3177, %v3744, %v3745
        %v3771 = vsel %vm3177, %v3743, %v3744
        %v3772 = vsel %vm3177, %v3742, %v3743
        %v3773 = vsel %vm3177, %v3741, %v3742
        %v3774 = vsel %vm3177, %v3740, %v3741
        %v3775 = vsel %vm3177, %v3739, %v3740
        %v3776 = vsel %vm3177, %v3738, %v3739
        %v3777 = vsel %vm3177, %v3737, %v3738
        %v3778 = vsel %vm3177, %v3736, %v3737
        %v3779 = vsel %vm3177, %v3735, %v3736
        %v3780 = vsel %vm3177, %v3734, %v3735
        %v3781 = vsel %vm3177, %v3733, %v3734
        %v3782 = vsel %vm3177, %v3732, %v3733
        %v3783 = vsel %vm3177, %v3731, %v3732
        %v3784 = vsel %vm3177, %v3730, %v3731
        %v3785 = vsel %vm3177, %v3729, %v3730
        %v3786 = vsel %vm3177, %v3728, %v3729
        %v3787 = vsel %vm3177, %v3727, %v3728
        %v3788 = vsel %vm3177, %v3726, %v3727
        %v3789 = vsel %vm3177, %v3757, %v3726
        %v3790 = vsel %vm3212, %v3776, 0.0
        %v3791 = vsel %vm3213, %v3775, 0.0
        %v3792 = vsel %vm3212, %v3774, 0.0
        %v3793 = vsel %vm3213, %v3773, 0.0
        %v3794 = vsel %vm3212, %v3772, 0.0
        %v3795 = vsel %vm3213, %v3771, 0.0
        %v3796 = vsel %vm3212, %v3770, 0.0
        %v3797 = vsel %vm3213, %v3769, 0.0
        %v3798 = vsel %vm3212, %v3768, 0.0
        %v3799 = vsel %vm3213, %v3767, 0.0
        %v3800 = vsel %vm3212, %v3766, 0.0
        %v3801 = vsel %vm3213, %v3765, 0.0
        %v3802 = vsel %vm3212, %v3764, 0.0
        %v3803 = vsel %vm3213, %v3763, 0.0
        %v3804 = vsel %vm3212, %v3762, 0.0
        %v3805 = vsel %vm3213, %v3761, 0.0
        %v3806 = vsel %vm3212, %v3760, 0.0
        %v3807 = vsel %vm3213, %v3759, 0.0
        %v3808 = vsel %vm3212, %v3758, 0.0
        %v3809 = vsel %vm3213, %v3789, 0.0
        %v3810 = vsel %vm3210, %v3788, 0.0
        %v3811 = vsel %vm3211, %v3787, 0.0
        %v3812 = vsel %vm3210, %v3786, 0.0
        %v3813 = vsel %vm3211, %v3785, 0.0
        %v3814 = vsel %vm3210, %v3784, 0.0
        %v3815 = vsel %vm3211, %v3783, 0.0
        %v3816 = vsel %vm3210, %v3782, 0.0
        %v3817 = vsel %vm3211, %v3781, 0.0
        %v3818 = vsel %vm3210, %v3780, 0.0
        %v3819 = vsel %vm3211, %v3779, 0.0
        %v3820 = vsel %vm3210, %v3778, 0.0
        %v3821 = vsel %vm3211, %v3777, 0.0
        %v3822 = vadd.f32 %v3694, %v3790
        %v3823 = vadd.f32 %v3695, %v3791
        %v3824 = vadd.f32 %v3696, %v3792
        %v3825 = vadd.f32 %v3697, %v3793
        %v3826 = vadd.f32 %v3698, %v3794
        %v3827 = vadd.f32 %v3699, %v3795
        %v3828 = vadd.f32 %v3700, %v3796
        %v3829 = vadd.f32 %v3701, %v3797
        %v3830 = vadd.f32 %v3702, %v3798
        %v3831 = vadd.f32 %v3703, %v3799
        %v3832 = vadd.f32 %v3704, %v3800
        %v3833 = vadd.f32 %v3705, %v3801
        %v3834 = vadd.f32 %v3706, %v3802
        %v3835 = vadd.f32 %v3707, %v3803
        %v3836 = vadd.f32 %v3708, %v3804
        %v3837 = vadd.f32 %v3709, %v3805
        %v3838 = vadd.f32 %v3710, %v3806
        %v3839 = vadd.f32 %v3711, %v3807
        %v3840 = vadd.f32 %v3712, %v3808
        %v3841 = vadd.f32 %v3713, %v3809
        %v3842 = vadd.f32 %v3714, %v3810
        %v3843 = vadd.f32 %v3715, %v3811
        %v3844 = vadd.f32 %v3716, %v3812
        %v3845 = vadd.f32 %v3717, %v3813
        %v3846 = vadd.f32 %v3718, %v3814
        %v3847 = vadd.f32 %v3719, %v3815
        %v3848 = vadd.f32 %v3720, %v3816
        %v3849 = vadd.f32 %v3721, %v3817
        %v3850 = vadd.f32 %v3722, %v3818
        %v3851 = vadd.f32 %v3723, %v3819
        %v3852 = vadd.f32 %v3724, %v3820
        %v3853 = vadd.f32 %v3725, %v3821
        %v3854 = vrot.slane %v2015, 4
        %v3855 = vrot.slane %v2019, 4
        %v3856 = vrot.slane %v2025, 4
        %v3857 = vrot.slane %v2029, 4
        %v3858 = vrot.slane %v2035, 4
        %v3859 = vrot.slane %v2039, 4
        %v3860 = vrot.slane %v2045, 4
        %v3861 = vrot.slane %v2049, 4
        %v3862 = vrot.slane %v2055, 4
        %v3863 = vrot.slane %v2059, 4
        %v3864 = vrot.slane %v2065, 4
        %v3865 = vrot.slane %v2069, 4
        %v3866 = vrot.slane %v2075, 4
        %v3867 = vrot.slane %v2079, 4
        %v3868 = vrot.slane %v2085, 4
        %v3869 = vrot.slane %v2089, 4
        %v3870 = vrot.slane %v2095, 4
        %v3871 = vrot.slane %v2099, 4
        %v3872 = vrot.slane %v2105, 4
        %v3873 = vrot.slane %v2109, 4
        %v3874 = vrot.slane %v2115, 4
        %v3875 = vrot.slane %v2119, 4
        %v3876 = vrot.slane %v2125, 4
        %v3877 = vrot.slane %v2129, 4
        %v3878 = vrot.slane %v2135, 4
        %v3879 = vrot.slane %v2139, 4
        %v3880 = vrot.slane %v2145, 4
        %v3881 = vrot.slane %v2149, 4
        %v3882 = vrot.slane %v2155, 4
        %v3883 = vrot.slane %v2159, 4
        %v3884 = vrot.slane %v2165, 4
        %v3885 = vrot.slane %v2169, 4
        %v3886 = vsel %vm2928, %v3884, %v3885
        %v3887 = vsel %vm2928, %v3883, %v3884
        %v3888 = vsel %vm2928, %v3882, %v3883
        %v3889 = vsel %vm2928, %v3881, %v3882
        %v3890 = vsel %vm2928, %v3880, %v3881
        %v3891 = vsel %vm2928, %v3879, %v3880
        %v3892 = vsel %vm2928, %v3878, %v3879
        %v3893 = vsel %vm2928, %v3877, %v3878
        %v3894 = vsel %vm2928, %v3876, %v3877
        %v3895 = vsel %vm2928, %v3875, %v3876
        %v3896 = vsel %vm2928, %v3874, %v3875
        %v3897 = vsel %vm2928, %v3873, %v3874
        %v3898 = vsel %vm2928, %v3872, %v3873
        %v3899 = vsel %vm2928, %v3871, %v3872
        %v3900 = vsel %vm2928, %v3870, %v3871
        %v3901 = vsel %vm2928, %v3869, %v3870
        %v3902 = vsel %vm2928, %v3868, %v3869
        %v3903 = vsel %vm2928, %v3867, %v3868
        %v3904 = vsel %vm2928, %v3866, %v3867
        %v3905 = vsel %vm2928, %v3865, %v3866
        %v3906 = vsel %vm2928, %v3864, %v3865
        %v3907 = vsel %vm2928, %v3863, %v3864
        %v3908 = vsel %vm2928, %v3862, %v3863
        %v3909 = vsel %vm2928, %v3861, %v3862
        %v3910 = vsel %vm2928, %v3860, %v3861
        %v3911 = vsel %vm2928, %v3859, %v3860
        %v3912 = vsel %vm2928, %v3858, %v3859
        %v3913 = vsel %vm2928, %v3857, %v3858
        %v3914 = vsel %vm2928, %v3856, %v3857
        %v3915 = vsel %vm2928, %v3855, %v3856
        %v3916 = vsel %vm2928, %v3854, %v3855
        %v3917 = vsel %vm2928, %v3885, %v3854
        %vm3918 = vmand 0, %vm2936
        %vm3919 = vmand 0, %vm2937
        %vm3920 = vmand 1, %vm2936
        %vm3921 = vmand 1, %vm2937
        %v3922 = vsel %vm3918, %v3910, 0.0
        %v3923 = vsel %vm3919, %v3909, 0.0
        %v3924 = vsel %vm3918, %v3908, 0.0
        %v3925 = vsel %vm3919, %v3907, 0.0
        %v3926 = vsel %vm3918, %v3906, 0.0
        %v3927 = vsel %vm3919, %v3905, 0.0
        %v3928 = vsel %vm3918, %v3904, 0.0
        %v3929 = vsel %vm3919, %v3903, 0.0
        %v3930 = vsel %vm3918, %v3902, 0.0
        %v3931 = vsel %vm3919, %v3901, 0.0
        %v3932 = vsel %vm3918, %v3900, 0.0
        %v3933 = vsel %vm3919, %v3899, 0.0
        %v3934 = vsel %vm3918, %v3898, 0.0
        %v3935 = vsel %vm3919, %v3897, 0.0
        %v3936 = vsel %vm3918, %v3896, 0.0
        %v3937 = vsel %vm3919, %v3895, 0.0
        %v3938 = vsel %vm3918, %v3894, 0.0
        %v3939 = vsel %vm3919, %v3893, 0.0
        %v3940 = vsel %vm3918, %v3892, 0.0
        %v3941 = vsel %vm3919, %v3891, 0.0
        %v3942 = vsel %vm3918, %v3890, 0.0
        %v3943 = vsel %vm3919, %v3889, 0.0
        %v3944 = vsel %vm3918, %v3888, 0.0
        %v3945 = vsel %vm3919, %v3887, 0.0
        %v3946 = vsel %vm3920, %v3886, 0.0
        %v3947 = vsel %vm3921, %v3917, 0.0
        %v3948 = vsel %vm3920, %v3916, 0.0
        %v3949 = vsel %vm3921, %v3915, 0.0
        %v3950 = vsel %vm3920, %v3914, 0.0
        %v3951 = vsel %vm3921, %v3913, 0.0
        %v3952 = vsel %vm3920, %v3912, 0.0
        %v3953 = vsel %vm3921, %v3911, 0.0
        %v3954 = vadd.f32 %v3822, %v3922
        %v3955 = vadd.f32 %v3823, %v3923
        %v3956 = vadd.f32 %v3824, %v3924
        %v3957 = vadd.f32 %v3825, %v3925
        %v3958 = vadd.f32 %v3826, %v3926
        %v3959 = vadd.f32 %v3827, %v3927
        %v3960 = vadd.f32 %v3828, %v3928
        %v3961 = vadd.f32 %v3829, %v3929
        %v3962 = vadd.f32 %v3830, %v3930
        %v3963 = vadd.f32 %v3831, %v3931
        %v3964 = vadd.f32 %v3832, %v3932
        %v3965 = vadd.f32 %v3833, %v3933
        %v3966 = vadd.f32 %v3834, %v3934
        %v3967 = vadd.f32 %v3835, %v3935
        %v3968 = vadd.f32 %v3836, %v3936
        %v3969 = vadd.f32 %v3837, %v3937
        %v3970 = vadd.f32 %v3838, %v3938
        %v3971 = vadd.f32 %v3839, %v3939
        %v3972 = vadd.f32 %v3840, %v3940
        %v3973 = vadd.f32 %v3841, %v3941
        %v3974 = vadd.f32 %v3842, %v3942
        %v3975 = vadd.f32 %v3843, %v3943
        %v3976 = vadd.f32 %v3844, %v3944
        %v3977 = vadd.f32 %v3845, %v3945
        %v3978 = vadd.f32 %v3846, %v3946
        %v3979 = vadd.f32 %v3847, %v3947
        %v3980 = vadd.f32 %v3848, %v3948
        %v3981 = vadd.f32 %v3849, %v3949
        %v3982 = vadd.f32 %v3850, %v3950
        %v3983 = vadd.f32 %v3851, %v3951
        %v3984 = vadd.f32 %v3852, %v3952
        %v3985 = vadd.f32 %v3853, %v3953
        %v3986 = vsel %vm3077, %v2246, 0.0
        %v3987 = vsel %vm3078, %v2250, 0.0
        %v3988 = vsel %vm3077, %v2256, 0.0
        %v3989 = vsel %vm3078, %v2260, 0.0
        %v3990 = vsel %vm3077, %v2266, 0.0
        %v3991 = vsel %vm3078, %v2270, 0.0
        %v3992 = vsel %vm3077, %v2276, 0.0
        %v3993 = vsel %vm3078, %v2280, 0.0
        %v3994 = vsel %vm3077, %v2286, 0.0
        %v3995 = vsel %vm3078, %v2290, 0.0
        %v3996 = vsel %vm3077, %v2296, 0.0
        %v3997 = vsel %vm3078, %v2300, 0.0
        %v3998 = vsel %vm3077, %v2306, 0.0
        %v3999 = vsel %vm3078, %v2310, 0.0
        %v4000 = vsel %vm3077, %v2316, 0.0
        %v4001 = vsel %vm3078, %v2320, 0.0
        %v4002 = vsel %vm3077, %v2326, 0.0
        %v4003 = vsel %vm3078, %v2330, 0.0
        %v4004 = vsel %vm3077, %v2336, 0.0
        %v4005 = vsel %vm3078, %v2340, 0.0
        %v4006 = vsel %vm3077, %v2346, 0.0
        %v4007 = vsel %vm3078, %v2350, 0.0
        %v4008 = vsel %vm3077, %v2356, 0.0
        %v4009 = vsel %vm3078, %v2360, 0.0
        %v4010 = vsel %vm3079, %v2206, 0.0
        %v4011 = vsel %vm3080, %v2210, 0.0
        %v4012 = vsel %vm3079, %v2216, 0.0
        %v4013 = vsel %vm3080, %v2220, 0.0
        %v4014 = vsel %vm3079, %v2226, 0.0
        %v4015 = vsel %vm3080, %v2230, 0.0
        %v4016 = vsel %vm3079, %v2236, 0.0
        %v4017 = vsel %vm3080, %v2240, 0.0
        %v4018 = vadd.f32 %v3954, %v3986
        %v4019 = vadd.f32 %v3955, %v3987
        %v4020 = vadd.f32 %v3956, %v3988
        %v4021 = vadd.f32 %v3957, %v3989
        %v4022 = vadd.f32 %v3958, %v3990
        %v4023 = vadd.f32 %v3959, %v3991
        %v4024 = vadd.f32 %v3960, %v3992
        %v4025 = vadd.f32 %v3961, %v3993
        %v4026 = vadd.f32 %v3962, %v3994
        %v4027 = vadd.f32 %v3963, %v3995
        %v4028 = vadd.f32 %v3964, %v3996
        %v4029 = vadd.f32 %v3965, %v3997
        %v4030 = vadd.f32 %v3966, %v3998
        %v4031 = vadd.f32 %v3967, %v3999
        %v4032 = vadd.f32 %v3968, %v4000
        %v4033 = vadd.f32 %v3969, %v4001
        %v4034 = vadd.f32 %v3970, %v4002
        %v4035 = vadd.f32 %v3971, %v4003
        %v4036 = vadd.f32 %v3972, %v4004
        %v4037 = vadd.f32 %v3973, %v4005
        %v4038 = vadd.f32 %v3974, %v4006
        %v4039 = vadd.f32 %v3975, %v4007
        %v4040 = vadd.f32 %v3976, %v4008
        %v4041 = vadd.f32 %v3977, %v4009
        %v4042 = vadd.f32 %v3978, %v4010
        %v4043 = vadd.f32 %v3979, %v4011
        %v4044 = vadd.f32 %v3980, %v4012
        %v4045 = vadd.f32 %v3981, %v4013
        %v4046 = vadd.f32 %v3982, %v4014
        %v4047 = vadd.f32 %v3983, %v4015
        %v4048 = vadd.f32 %v3984, %v4016
        %v4049 = vadd.f32 %v3985, %v4017
        %v4050 = vrot.slane %v2208, 4
        %v4051 = vrot.slane %v2212, 4
        %v4052 = vrot.slane %v2218, 4
        %v4053 = vrot.slane %v2222, 4
        %v4054 = vrot.slane %v2228, 4
        %v4055 = vrot.slane %v2232, 4
        %v4056 = vrot.slane %v2238, 4
        %v4057 = vrot.slane %v2242, 4
        %v4058 = vrot.slane %v2248, 4
        %v4059 = vrot.slane %v2252, 4
        %v4060 = vrot.slane %v2258, 4
        %v4061 = vrot.slane %v2262, 4
        %v4062 = vrot.slane %v2268, 4
        %v4063 = vrot.slane %v2272, 4
        %v4064 = vrot.slane %v2278, 4
        %v4065 = vrot.slane %v2282, 4
        %v4066 = vrot.slane %v2288, 4
        %v4067 = vrot.slane %v2292, 4
        %v4068 = vrot.slane %v2298, 4
        %v4069 = vrot.slane %v2302, 4
        %v4070 = vrot.slane %v2308, 4
        %v4071 = vrot.slane %v2312, 4
        %v4072 = vrot.slane %v2318, 4
        %v4073 = vrot.slane %v2322, 4
        %v4074 = vrot.slane %v2328, 4
        %v4075 = vrot.slane %v2332, 4
        %v4076 = vrot.slane %v2338, 4
        %v4077 = vrot.slane %v2342, 4
        %v4078 = vrot.slane %v2348, 4
        %v4079 = vrot.slane %v2352, 4
        %v4080 = vrot.slane %v2358, 4
        %v4081 = vrot.slane %v2362, 4
        %v4082 = vsel %vm2928, %v4080, %v4081
        %v4083 = vsel %vm2928, %v4079, %v4080
        %v4084 = vsel %vm2928, %v4078, %v4079
        %v4085 = vsel %vm2928, %v4077, %v4078
        %v4086 = vsel %vm2928, %v4076, %v4077
        %v4087 = vsel %vm2928, %v4075, %v4076
        %v4088 = vsel %vm2928, %v4074, %v4075
        %v4089 = vsel %vm2928, %v4073, %v4074
        %v4090 = vsel %vm2928, %v4072, %v4073
        %v4091 = vsel %vm2928, %v4071, %v4072
        %v4092 = vsel %vm2928, %v4070, %v4071
        %v4093 = vsel %vm2928, %v4069, %v4070
        %v4094 = vsel %vm2928, %v4068, %v4069
        %v4095 = vsel %vm2928, %v4067, %v4068
        %v4096 = vsel %vm2928, %v4066, %v4067
        %v4097 = vsel %vm2928, %v4065, %v4066
        %v4098 = vsel %vm2928, %v4064, %v4065
        %v4099 = vsel %vm2928, %v4063, %v4064
        %v4100 = vsel %vm2928, %v4062, %v4063
        %v4101 = vsel %vm2928, %v4061, %v4062
        %v4102 = vsel %vm2928, %v4060, %v4061
        %v4103 = vsel %vm2928, %v4059, %v4060
        %v4104 = vsel %vm2928, %v4058, %v4059
        %v4105 = vsel %vm2928, %v4057, %v4058
        %v4106 = vsel %vm2928, %v4056, %v4057
        %v4107 = vsel %vm2928, %v4055, %v4056
        %v4108 = vsel %vm2928, %v4054, %v4055
        %v4109 = vsel %vm2928, %v4053, %v4054
        %v4110 = vsel %vm2928, %v4052, %v4053
        %v4111 = vsel %vm2928, %v4051, %v4052
        %v4112 = vsel %vm2928, %v4050, %v4051
        %v4113 = vsel %vm2928, %v4081, %v4050
        %vm4114 = vmand 0, %vm2930
        %vm4115 = vmand 0, %vm2931
        %vm4116 = vmand 1, %vm2930
        %vm4117 = vmand 1, %vm2931
        %v4118 = vsel %vm4114, %v4103, 0.0
        %v4119 = vsel %vm4115, %v4102, 0.0
        %v4120 = vsel %vm4114, %v4101, 0.0
        %v4121 = vsel %vm4115, %v4100, 0.0
        %v4122 = vsel %vm4114, %v4099, 0.0
        %v4123 = vsel %vm4115, %v4098, 0.0
        %v4124 = vsel %vm4114, %v4097, 0.0
        %v4125 = vsel %vm4115, %v4096, 0.0
        %v4126 = vsel %vm4114, %v4095, 0.0
        %v4127 = vsel %vm4115, %v4094, 0.0
        %v4128 = vsel %vm4114, %v4093, 0.0
        %v4129 = vsel %vm4115, %v4092, 0.0
        %v4130 = vsel %vm4114, %v4091, 0.0
        %v4131 = vsel %vm4115, %v4090, 0.0
        %v4132 = vsel %vm4114, %v4089, 0.0
        %v4133 = vsel %vm4115, %v4088, 0.0
        %v4134 = vsel %vm4114, %v4087, 0.0
        %v4135 = vsel %vm4115, %v4086, 0.0
        %v4136 = vsel %vm4114, %v4085, 0.0
        %v4137 = vsel %vm4115, %v4084, 0.0
        %v4138 = vsel %vm4114, %v4083, 0.0
        %v4139 = vsel %vm4115, %v4082, 0.0
        %v4140 = vsel %vm4114, %v4113, 0.0
        %v4141 = vsel %vm4115, %v4112, 0.0
        %v4142 = vsel %vm4116, %v4111, 0.0
        %v4143 = vsel %vm4117, %v4110, 0.0
        %v4144 = vsel %vm4116, %v4109, 0.0
        %v4145 = vsel %vm4117, %v4108, 0.0
        %v4146 = vsel %vm4116, %v4107, 0.0
        %v4147 = vsel %vm4117, %v4106, 0.0
        %v4148 = vsel %vm4116, %v4105, 0.0
        %v4149 = vsel %vm4117, %v4104, 0.0
        %v4150 = vadd.f32 %v4018, %v4118
        %v4151 = vadd.f32 %v4019, %v4119
        %v4152 = vadd.f32 %v4020, %v4120
        %v4153 = vadd.f32 %v4021, %v4121
        %v4154 = vadd.f32 %v4022, %v4122
        %v4155 = vadd.f32 %v4023, %v4123
        %v4156 = vadd.f32 %v4024, %v4124
        %v4157 = vadd.f32 %v4025, %v4125
        %v4158 = vadd.f32 %v4026, %v4126
        %v4159 = vadd.f32 %v4027, %v4127
        %v4160 = vadd.f32 %v4028, %v4128
        %v4161 = vadd.f32 %v4029, %v4129
        %v4162 = vadd.f32 %v4030, %v4130
        %v4163 = vadd.f32 %v4031, %v4131
        %v4164 = vadd.f32 %v4032, %v4132
        %v4165 = vadd.f32 %v4033, %v4133
        %v4166 = vadd.f32 %v4034, %v4134
        %v4167 = vadd.f32 %v4035, %v4135
        %v4168 = vadd.f32 %v4036, %v4136
        %v4169 = vadd.f32 %v4037, %v4137
        %v4170 = vadd.f32 %v4038, %v4138
        %v4171 = vadd.f32 %v4039, %v4139
        %v4172 = vadd.f32 %v4040, %v4140
        %v4173 = vadd.f32 %v4041, %v4141
        %v4174 = vadd.f32 %v4042, %v4142
        %v4175 = vadd.f32 %v4043, %v4143
        %v4176 = vadd.f32 %v4044, %v4144
        %v4177 = vadd.f32 %v4045, %v4145
        %v4178 = vadd.f32 %v4046, %v4146
        %v4179 = vadd.f32 %v4047, %v4147
        %v4180 = vadd.f32 %v4048, %v4148
        %v4181 = vadd.f32 %v4049, %v4149
        %v4182 = vrot.slane %v2399, 4
        %v4183 = vrot.slane %v2403, 4
        %v4184 = vrot.slane %v2409, 4
        %v4185 = vrot.slane %v2413, 4
        %v4186 = vrot.slane %v2419, 4
        %v4187 = vrot.slane %v2423, 4
        %v4188 = vrot.slane %v2429, 4
        %v4189 = vrot.slane %v2433, 4
        %v4190 = vrot.slane %v2439, 4
        %v4191 = vrot.slane %v2443, 4
        %v4192 = vrot.slane %v2449, 4
        %v4193 = vrot.slane %v2453, 4
        %v4194 = vrot.slane %v2459, 4
        %v4195 = vrot.slane %v2463, 4
        %v4196 = vrot.slane %v2469, 4
        %v4197 = vrot.slane %v2473, 4
        %v4198 = vrot.slane %v2479, 4
        %v4199 = vrot.slane %v2483, 4
        %v4200 = vrot.slane %v2489, 4
        %v4201 = vrot.slane %v2493, 4
        %v4202 = vrot.slane %v2499, 4
        %v4203 = vrot.slane %v2503, 4
        %v4204 = vrot.slane %v2509, 4
        %v4205 = vrot.slane %v2513, 4
        %v4206 = vrot.slane %v2519, 4
        %v4207 = vrot.slane %v2523, 4
        %v4208 = vrot.slane %v2529, 4
        %v4209 = vrot.slane %v2533, 4
        %v4210 = vrot.slane %v2539, 4
        %v4211 = vrot.slane %v2543, 4
        %v4212 = vrot.slane %v2549, 4
        %v4213 = vrot.slane %v2553, 4
        %v4214 = vsel %vm2928, %v4212, %v4213
        %v4215 = vsel %vm2928, %v4211, %v4212
        %v4216 = vsel %vm2928, %v4210, %v4211
        %v4217 = vsel %vm2928, %v4209, %v4210
        %v4218 = vsel %vm2928, %v4208, %v4209
        %v4219 = vsel %vm2928, %v4207, %v4208
        %v4220 = vsel %vm2928, %v4206, %v4207
        %v4221 = vsel %vm2928, %v4205, %v4206
        %v4222 = vsel %vm2928, %v4204, %v4205
        %v4223 = vsel %vm2928, %v4203, %v4204
        %v4224 = vsel %vm2928, %v4202, %v4203
        %v4225 = vsel %vm2928, %v4201, %v4202
        %v4226 = vsel %vm2928, %v4200, %v4201
        %v4227 = vsel %vm2928, %v4199, %v4200
        %v4228 = vsel %vm2928, %v4198, %v4199
        %v4229 = vsel %vm2928, %v4197, %v4198
        %v4230 = vsel %vm2928, %v4196, %v4197
        %v4231 = vsel %vm2928, %v4195, %v4196
        %v4232 = vsel %vm2928, %v4194, %v4195
        %v4233 = vsel %vm2928, %v4193, %v4194
        %v4234 = vsel %vm2928, %v4192, %v4193
        %v4235 = vsel %vm2928, %v4191, %v4192
        %v4236 = vsel %vm2928, %v4190, %v4191
        %v4237 = vsel %vm2928, %v4189, %v4190
        %v4238 = vsel %vm2928, %v4188, %v4189
        %v4239 = vsel %vm2928, %v4187, %v4188
        %v4240 = vsel %vm2928, %v4186, %v4187
        %v4241 = vsel %vm2928, %v4185, %v4186
        %v4242 = vsel %vm2928, %v4184, %v4185
        %v4243 = vsel %vm2928, %v4183, %v4184
        %v4244 = vsel %vm2928, %v4182, %v4183
        %v4245 = vsel %vm2928, %v4213, %v4182
        %v4246 = vsel %vm3920, %v4214, 0.0
        %v4247 = vsel %vm3921, %v4245, 0.0
        %v4248 = vsel %vm3920, %v4244, 0.0
        %v4249 = vsel %vm3921, %v4243, 0.0
        %v4250 = vsel %vm3920, %v4242, 0.0
        %v4251 = vsel %vm3921, %v4241, 0.0
        %v4252 = vsel %vm3920, %v4240, 0.0
        %v4253 = vsel %vm3921, %v4239, 0.0
        %v4254 = vsel %vm3920, %v4238, 0.0
        %v4255 = vsel %vm3921, %v4237, 0.0
        %v4256 = vsel %vm3920, %v4236, 0.0
        %v4257 = vsel %vm3921, %v4235, 0.0
        %v4258 = vsel %vm3920, %v4234, 0.0
        %v4259 = vsel %vm3921, %v4233, 0.0
        %v4260 = vsel %vm3920, %v4232, 0.0
        %v4261 = vsel %vm3921, %v4231, 0.0
        %v4262 = vsel %vm3920, %v4230, 0.0
        %v4263 = vsel %vm3921, %v4229, 0.0
        %v4264 = vsel %vm3920, %v4228, 0.0
        %v4265 = vsel %vm3921, %v4227, 0.0
        %v4266 = vsel %vm3920, %v4226, 0.0
        %v4267 = vsel %vm3921, %v4225, 0.0
        %v4268 = vsel %vm3920, %v4224, 0.0
        %v4269 = vsel %vm3921, %v4223, 0.0
        %v4270 = vsel %vm3920, %v4222, 0.0
        %v4271 = vsel %vm3921, %v4221, 0.0
        %v4272 = vsel %vm3920, %v4220, 0.0
        %v4273 = vsel %vm3921, %v4219, 0.0
        %v4274 = vsel %vm3920, %v4218, 0.0
        %v4275 = vsel %vm3921, %v4217, 0.0
        %v4276 = vsel %vm3920, %v4216, 0.0
        %v4277 = vsel %vm3921, %v4215, 0.0
        %v4278 = vadd.f32 %v4150, %v4246
        %v4279 = vadd.f32 %v4151, %v4247
        %v4280 = vadd.f32 %v4152, %v4248
        %v4281 = vadd.f32 %v4153, %v4249
        %v4282 = vadd.f32 %v4154, %v4250
        %v4283 = vadd.f32 %v4155, %v4251
        %v4284 = vadd.f32 %v4156, %v4252
        %v4285 = vadd.f32 %v4157, %v4253
        %v4286 = vadd.f32 %v4158, %v4254
        %v4287 = vadd.f32 %v4159, %v4255
        %v4288 = vadd.f32 %v4160, %v4256
        %v4289 = vadd.f32 %v4161, %v4257
        %v4290 = vadd.f32 %v4162, %v4258
        %v4291 = vadd.f32 %v4163, %v4259
        %v4292 = vadd.f32 %v4164, %v4260
        %v4293 = vadd.f32 %v4165, %v4261
        %v4294 = vadd.f32 %v4166, %v4262
        %v4295 = vadd.f32 %v4167, %v4263
        %v4296 = vadd.f32 %v4168, %v4264
        %v4297 = vadd.f32 %v4169, %v4265
        %v4298 = vadd.f32 %v4170, %v4266
        %v4299 = vadd.f32 %v4171, %v4267
        %v4300 = vadd.f32 %v4172, %v4268
        %v4301 = vadd.f32 %v4173, %v4269
        %v4302 = vadd.f32 %v4174, %v4270
        %v4303 = vadd.f32 %v4175, %v4271
        %v4304 = vadd.f32 %v4176, %v4272
        %v4305 = vadd.f32 %v4177, %v4273
        %v4306 = vadd.f32 %v4178, %v4274
        %v4307 = vadd.f32 %v4179, %v4275
        %v4308 = vadd.f32 %v4180, %v4276
        %v4309 = vadd.f32 %v4181, %v4277
        %v4310 = vrot.slane %v2401, 4
        %v4311 = vrot.slane %v2405, 4
        %v4312 = vrot.slane %v2411, 4
        %v4313 = vrot.slane %v2415, 4
        %v4314 = vrot.slane %v2421, 4
        %v4315 = vrot.slane %v2425, 4
        %v4316 = vrot.slane %v2431, 4
        %v4317 = vrot.slane %v2435, 4
        %v4318 = vrot.slane %v2441, 4
        %v4319 = vrot.slane %v2445, 4
        %v4320 = vrot.slane %v2451, 4
        %v4321 = vrot.slane %v2455, 4
        %v4322 = vrot.slane %v2461, 4
        %v4323 = vrot.slane %v2465, 4
        %v4324 = vrot.slane %v2471, 4
        %v4325 = vrot.slane %v2475, 4
        %v4326 = vrot.slane %v2481, 4
        %v4327 = vrot.slane %v2485, 4
        %v4328 = vrot.slane %v2491, 4
        %v4329 = vrot.slane %v2495, 4
        %v4330 = vrot.slane %v2501, 4
        %v4331 = vrot.slane %v2505, 4
        %v4332 = vrot.slane %v2511, 4
        %v4333 = vrot.slane %v2515, 4
        %v4334 = vrot.slane %v2521, 4
        %v4335 = vrot.slane %v2525, 4
        %v4336 = vrot.slane %v2531, 4
        %v4337 = vrot.slane %v2535, 4
        %v4338 = vrot.slane %v2541, 4
        %v4339 = vrot.slane %v2545, 4
        %v4340 = vrot.slane %v2551, 4
        %v4341 = vrot.slane %v2555, 4
        %v4342 = vsel %vm2928, %v4340, %v4341
        %v4343 = vsel %vm2928, %v4339, %v4340
        %v4344 = vsel %vm2928, %v4338, %v4339
        %v4345 = vsel %vm2928, %v4337, %v4338
        %v4346 = vsel %vm2928, %v4336, %v4337
        %v4347 = vsel %vm2928, %v4335, %v4336
        %v4348 = vsel %vm2928, %v4334, %v4335
        %v4349 = vsel %vm2928, %v4333, %v4334
        %v4350 = vsel %vm2928, %v4332, %v4333
        %v4351 = vsel %vm2928, %v4331, %v4332
        %v4352 = vsel %vm2928, %v4330, %v4331
        %v4353 = vsel %vm2928, %v4329, %v4330
        %v4354 = vsel %vm2928, %v4328, %v4329
        %v4355 = vsel %vm2928, %v4327, %v4328
        %v4356 = vsel %vm2928, %v4326, %v4327
        %v4357 = vsel %vm2928, %v4325, %v4326
        %v4358 = vsel %vm2928, %v4324, %v4325
        %v4359 = vsel %vm2928, %v4323, %v4324
        %v4360 = vsel %vm2928, %v4322, %v4323
        %v4361 = vsel %vm2928, %v4321, %v4322
        %v4362 = vsel %vm2928, %v4320, %v4321
        %v4363 = vsel %vm2928, %v4319, %v4320
        %v4364 = vsel %vm2928, %v4318, %v4319
        %v4365 = vsel %vm2928, %v4317, %v4318
        %v4366 = vsel %vm2928, %v4316, %v4317
        %v4367 = vsel %vm2928, %v4315, %v4316
        %v4368 = vsel %vm2928, %v4314, %v4315
        %v4369 = vsel %vm2928, %v4313, %v4314
        %v4370 = vsel %vm2928, %v4312, %v4313
        %v4371 = vsel %vm2928, %v4311, %v4312
        %v4372 = vsel %vm2928, %v4310, %v4311
        %v4373 = vsel %vm2928, %v4341, %v4310
        %v4374 = vsel %vm4116, %v4371, 0.0
        %v4375 = vsel %vm4117, %v4370, 0.0
        %v4376 = vsel %vm4116, %v4369, 0.0
        %v4377 = vsel %vm4117, %v4368, 0.0
        %v4378 = vsel %vm4116, %v4367, 0.0
        %v4379 = vsel %vm4117, %v4366, 0.0
        %v4380 = vsel %vm4116, %v4365, 0.0
        %v4381 = vsel %vm4117, %v4364, 0.0
        %v4382 = vsel %vm4116, %v4363, 0.0
        %v4383 = vsel %vm4117, %v4362, 0.0
        %v4384 = vsel %vm4116, %v4361, 0.0
        %v4385 = vsel %vm4117, %v4360, 0.0
        %v4386 = vsel %vm4116, %v4359, 0.0
        %v4387 = vsel %vm4117, %v4358, 0.0
        %v4388 = vsel %vm4116, %v4357, 0.0
        %v4389 = vsel %vm4117, %v4356, 0.0
        %v4390 = vsel %vm4116, %v4355, 0.0
        %v4391 = vsel %vm4117, %v4354, 0.0
        %v4392 = vsel %vm4116, %v4353, 0.0
        %v4393 = vsel %vm4117, %v4352, 0.0
        %v4394 = vsel %vm4116, %v4351, 0.0
        %v4395 = vsel %vm4117, %v4350, 0.0
        %v4396 = vsel %vm4116, %v4349, 0.0
        %v4397 = vsel %vm4117, %v4348, 0.0
        %v4398 = vsel %vm4116, %v4347, 0.0
        %v4399 = vsel %vm4117, %v4346, 0.0
        %v4400 = vsel %vm4116, %v4345, 0.0
        %v4401 = vsel %vm4117, %v4344, 0.0
        %v4402 = vsel %vm4116, %v4343, 0.0
        %v4403 = vsel %vm4117, %v4342, 0.0
        %v4404 = vsel %vm4116, %v4373, 0.0
        %v4405 = vsel %vm4117, %v4372, 0.0
        %v4406 = vadd.f32 %v4278, %v4374
        %v4407 = vadd.f32 %v4279, %v4375
        %v4408 = vadd.f32 %v4280, %v4376
        %v4409 = vadd.f32 %v4281, %v4377
        %v4410 = vadd.f32 %v4282, %v4378
        %v4411 = vadd.f32 %v4283, %v4379
        %v4412 = vadd.f32 %v4284, %v4380
        %v4413 = vadd.f32 %v4285, %v4381
        %v4414 = vadd.f32 %v4286, %v4382
        %v4415 = vadd.f32 %v4287, %v4383
        %v4416 = vadd.f32 %v4288, %v4384
        %v4417 = vadd.f32 %v4289, %v4385
        %v4418 = vadd.f32 %v4290, %v4386
        %v4419 = vadd.f32 %v4291, %v4387
        %v4420 = vadd.f32 %v4292, %v4388
        %v4421 = vadd.f32 %v4293, %v4389
        %v4422 = vadd.f32 %v4294, %v4390
        %v4423 = vadd.f32 %v4295, %v4391
        %v4424 = vadd.f32 %v4296, %v4392
        %v4425 = vadd.f32 %v4297, %v4393
        %v4426 = vadd.f32 %v4298, %v4394
        %v4427 = vadd.f32 %v4299, %v4395
        %v4428 = vadd.f32 %v4300, %v4396
        %v4429 = vadd.f32 %v4301, %v4397
        %v4430 = vadd.f32 %v4302, %v4398
        %v4431 = vadd.f32 %v4303, %v4399
        %v4432 = vadd.f32 %v4304, %v4400
        %v4433 = vadd.f32 %v4305, %v4401
        %v4434 = vadd.f32 %v4306, %v4402
        %v4435 = vadd.f32 %v4307, %v4403
        %v4436 = vadd.f32 %v4308, %v4404
        %v4437 = vadd.f32 %v4309, %v4405
        %v4438 = vrot.slane %v2592, 4
        %v4439 = vrot.slane %v2596, 4
        %v4440 = vrot.slane %v2602, 4
        %v4441 = vrot.slane %v2606, 4
        %v4442 = vrot.slane %v2612, 4
        %v4443 = vrot.slane %v2616, 4
        %v4444 = vrot.slane %v2622, 4
        %v4445 = vrot.slane %v2626, 4
        %v4446 = vrot.slane %v2632, 4
        %v4447 = vrot.slane %v2636, 4
        %v4448 = vrot.slane %v2642, 4
        %v4449 = vrot.slane %v2646, 4
        %v4450 = vrot.slane %v2652, 4
        %v4451 = vrot.slane %v2656, 4
        %v4452 = vrot.slane %v2662, 4
        %v4453 = vrot.slane %v2666, 4
        %v4454 = vrot.slane %v2672, 4
        %v4455 = vrot.slane %v2676, 4
        %v4456 = vrot.slane %v2682, 4
        %v4457 = vrot.slane %v2686, 4
        %v4458 = vrot.slane %v2692, 4
        %v4459 = vrot.slane %v2696, 4
        %v4460 = vrot.slane %v2702, 4
        %v4461 = vrot.slane %v2706, 4
        %v4462 = vrot.slane %v2712, 4
        %v4463 = vrot.slane %v2716, 4
        %v4464 = vrot.slane %v2722, 4
        %v4465 = vrot.slane %v2726, 4
        %v4466 = vrot.slane %v2732, 4
        %v4467 = vrot.slane %v2736, 4
        %v4468 = vrot.slane %v2742, 4
        %v4469 = vrot.slane %v2746, 4
        %v4470 = vsel %vm2928, %v4468, %v4469
        %v4471 = vsel %vm2928, %v4467, %v4468
        %v4472 = vsel %vm2928, %v4466, %v4467
        %v4473 = vsel %vm2928, %v4465, %v4466
        %v4474 = vsel %vm2928, %v4464, %v4465
        %v4475 = vsel %vm2928, %v4463, %v4464
        %v4476 = vsel %vm2928, %v4462, %v4463
        %v4477 = vsel %vm2928, %v4461, %v4462
        %v4478 = vsel %vm2928, %v4460, %v4461
        %v4479 = vsel %vm2928, %v4459, %v4460
        %v4480 = vsel %vm2928, %v4458, %v4459
        %v4481 = vsel %vm2928, %v4457, %v4458
        %v4482 = vsel %vm2928, %v4456, %v4457
        %v4483 = vsel %vm2928, %v4455, %v4456
        %v4484 = vsel %vm2928, %v4454, %v4455
        %v4485 = vsel %vm2928, %v4453, %v4454
        %v4486 = vsel %vm2928, %v4452, %v4453
        %v4487 = vsel %vm2928, %v4451, %v4452
        %v4488 = vsel %vm2928, %v4450, %v4451
        %v4489 = vsel %vm2928, %v4449, %v4450
        %v4490 = vsel %vm2928, %v4448, %v4449
        %v4491 = vsel %vm2928, %v4447, %v4448
        %v4492 = vsel %vm2928, %v4446, %v4447
        %v4493 = vsel %vm2928, %v4445, %v4446
        %v4494 = vsel %vm2928, %v4444, %v4445
        %v4495 = vsel %vm2928, %v4443, %v4444
        %v4496 = vsel %vm2928, %v4442, %v4443
        %v4497 = vsel %vm2928, %v4441, %v4442
        %v4498 = vsel %vm2928, %v4440, %v4441
        %v4499 = vsel %vm2928, %v4439, %v4440
        %v4500 = vsel %vm2928, %v4438, %v4439
        %v4501 = vsel %vm2928, %v4469, %v4438
        %v4502 = vsel %vm3920, %v4478, 0.0
        %v4503 = vsel %vm3921, %v4477, 0.0
        %v4504 = vsel %vm3920, %v4476, 0.0
        %v4505 = vsel %vm3921, %v4475, 0.0
        %v4506 = vsel %vm3920, %v4474, 0.0
        %v4507 = vsel %vm3921, %v4473, 0.0
        %v4508 = vsel %vm3920, %v4472, 0.0
        %v4509 = vsel %vm3921, %v4471, 0.0
        %v4510 = vsel %vm3918, %v4470, 0.0
        %v4511 = vsel %vm3919, %v4501, 0.0
        %v4512 = vsel %vm3918, %v4500, 0.0
        %v4513 = vsel %vm3919, %v4499, 0.0
        %v4514 = vsel %vm3918, %v4498, 0.0
        %v4515 = vsel %vm3919, %v4497, 0.0
        %v4516 = vsel %vm3918, %v4496, 0.0
        %v4517 = vsel %vm3919, %v4495, 0.0
        %v4518 = vsel %vm3918, %v4494, 0.0
        %v4519 = vsel %vm3919, %v4493, 0.0
        %v4520 = vsel %vm3918, %v4492, 0.0
        %v4521 = vsel %vm3919, %v4491, 0.0
        %v4522 = vsel %vm3918, %v4490, 0.0
        %v4523 = vsel %vm3919, %v4489, 0.0
        %v4524 = vsel %vm3918, %v4488, 0.0
        %v4525 = vsel %vm3919, %v4487, 0.0
        %v4526 = vsel %vm3918, %v4486, 0.0
        %v4527 = vsel %vm3919, %v4485, 0.0
        %v4528 = vsel %vm3918, %v4484, 0.0
        %v4529 = vsel %vm3919, %v4483, 0.0
        %v4530 = vsel %vm3918, %v4482, 0.0
        %v4531 = vsel %vm3919, %v4481, 0.0
        %v4532 = vsel %vm3918, %v4480, 0.0
        %v4533 = vsel %vm3919, %v4479, 0.0
        %v4534 = vadd.f32 %v4406, %v4502
        %v4535 = vadd.f32 %v4407, %v4503
        %v4536 = vadd.f32 %v4408, %v4504
        %v4537 = vadd.f32 %v4409, %v4505
        %v4538 = vadd.f32 %v4410, %v4506
        %v4539 = vadd.f32 %v4411, %v4507
        %v4540 = vadd.f32 %v4412, %v4508
        %v4541 = vadd.f32 %v4413, %v4509
        %v4542 = vadd.f32 %v4414, %v4510
        %v4543 = vadd.f32 %v4415, %v4511
        %v4544 = vadd.f32 %v4416, %v4512
        %v4545 = vadd.f32 %v4417, %v4513
        %v4546 = vadd.f32 %v4418, %v4514
        %v4547 = vadd.f32 %v4419, %v4515
        %v4548 = vadd.f32 %v4420, %v4516
        %v4549 = vadd.f32 %v4421, %v4517
        %v4550 = vadd.f32 %v4422, %v4518
        %v4551 = vadd.f32 %v4423, %v4519
        %v4552 = vadd.f32 %v4424, %v4520
        %v4553 = vadd.f32 %v4425, %v4521
        %v4554 = vadd.f32 %v4426, %v4522
        %v4555 = vadd.f32 %v4427, %v4523
        %v4556 = vadd.f32 %v4428, %v4524
        %v4557 = vadd.f32 %v4429, %v4525
        %v4558 = vadd.f32 %v4430, %v4526
        %v4559 = vadd.f32 %v4431, %v4527
        %v4560 = vadd.f32 %v4432, %v4528
        %v4561 = vadd.f32 %v4433, %v4529
        %v4562 = vadd.f32 %v4434, %v4530
        %v4563 = vadd.f32 %v4435, %v4531
        %v4564 = vadd.f32 %v4436, %v4532
        %v4565 = vadd.f32 %v4437, %v4533
        %v4566 = vsel %vm3079, %v2714, 0.0
        %v4567 = vsel %vm3080, %v2718, 0.0
        %v4568 = vsel %vm3079, %v2724, 0.0
        %v4569 = vsel %vm3080, %v2728, 0.0
        %v4570 = vsel %vm3079, %v2734, 0.0
        %v4571 = vsel %vm3080, %v2738, 0.0
        %v4572 = vsel %vm3079, %v2744, 0.0
        %v4573 = vsel %vm3080, %v2748, 0.0
        %v4574 = vsel %vm3077, %v2594, 0.0
        %v4575 = vsel %vm3078, %v2598, 0.0
        %v4576 = vsel %vm3077, %v2604, 0.0
        %v4577 = vsel %vm3078, %v2608, 0.0
        %v4578 = vsel %vm3077, %v2614, 0.0
        %v4579 = vsel %vm3078, %v2618, 0.0
        %v4580 = vsel %vm3077, %v2624, 0.0
        %v4581 = vsel %vm3078, %v2628, 0.0
        %v4582 = vsel %vm3077, %v2634, 0.0
        %v4583 = vsel %vm3078, %v2638, 0.0
        %v4584 = vsel %vm3077, %v2644, 0.0
        %v4585 = vsel %vm3078, %v2648, 0.0
        %v4586 = vsel %vm3077, %v2654, 0.0
        %v4587 = vsel %vm3078, %v2658, 0.0
        %v4588 = vsel %vm3077, %v2664, 0.0
        %v4589 = vsel %vm3078, %v2668, 0.0
        %v4590 = vsel %vm3077, %v2674, 0.0
        %v4591 = vsel %vm3078, %v2678, 0.0
        %v4592 = vsel %vm3077, %v2684, 0.0
        %v4593 = vsel %vm3078, %v2688, 0.0
        %v4594 = vsel %vm3077, %v2694, 0.0
        %v4595 = vsel %vm3078, %v2698, 0.0
        %v4596 = vsel %vm3077, %v2704, 0.0
        %v4597 = vsel %vm3078, %v2708, 0.0
        %v4598 = vadd.f32 %v4534, %v4566
        %v4599 = vadd.f32 %v4535, %v4567
        %v4600 = vadd.f32 %v4536, %v4568
        %v4601 = vadd.f32 %v4537, %v4569
        %v4602 = vadd.f32 %v4538, %v4570
        %v4603 = vadd.f32 %v4539, %v4571
        %v4604 = vadd.f32 %v4540, %v4572
        %v4605 = vadd.f32 %v4541, %v4573
        %v4606 = vadd.f32 %v4542, %v4574
        %v4607 = vadd.f32 %v4543, %v4575
        %v4608 = vadd.f32 %v4544, %v4576
        %v4609 = vadd.f32 %v4545, %v4577
        %v4610 = vadd.f32 %v4546, %v4578
        %v4611 = vadd.f32 %v4547, %v4579
        %v4612 = vadd.f32 %v4548, %v4580
        %v4613 = vadd.f32 %v4549, %v4581
        %v4614 = vadd.f32 %v4550, %v4582
        %v4615 = vadd.f32 %v4551, %v4583
        %v4616 = vadd.f32 %v4552, %v4584
        %v4617 = vadd.f32 %v4553, %v4585
        %v4618 = vadd.f32 %v4554, %v4586
        %v4619 = vadd.f32 %v4555, %v4587
        %v4620 = vadd.f32 %v4556, %v4588
        %v4621 = vadd.f32 %v4557, %v4589
        %v4622 = vadd.f32 %v4558, %v4590
        %v4623 = vadd.f32 %v4559, %v4591
        %v4624 = vadd.f32 %v4560, %v4592
        %v4625 = vadd.f32 %v4561, %v4593
        %v4626 = vadd.f32 %v4562, %v4594
        %v4627 = vadd.f32 %v4563, %v4595
        %v4628 = vadd.f32 %v4564, %v4596
        %v4629 = vadd.f32 %v4565, %v4597
        %v4630 = vrot.slane %v2785, 4
        %v4631 = vrot.slane %v2788, 4
        %v4632 = vrot.slane %v2793, 4
        %v4633 = vrot.slane %v2796, 4
        %v4634 = vrot.slane %v2801, 4
        %v4635 = vrot.slane %v2804, 4
        %v4636 = vrot.slane %v2809, 4
        %v4637 = vrot.slane %v2812, 4
        %v4638 = vrot.slane %v2817, 4
        %v4639 = vrot.slane %v2820, 4
        %v4640 = vrot.slane %v2825, 4
        %v4641 = vrot.slane %v2828, 4
        %v4642 = vrot.slane %v2833, 4
        %v4643 = vrot.slane %v2836, 4
        %v4644 = vrot.slane %v2841, 4
        %v4645 = vrot.slane %v2844, 4
        %v4646 = vrot.slane %v2849, 4
        %v4647 = vrot.slane %v2852, 4
        %v4648 = vrot.slane %v2857, 4
        %v4649 = vrot.slane %v2860, 4
        %v4650 = vrot.slane %v2865, 4
        %v4651 = vrot.slane %v2868, 4
        %v4652 = vrot.slane %v2873, 4
        %v4653 = vrot.slane %v2876, 4
        %v4654 = vrot.slane %v2881, 4
        %v4655 = vrot.slane %v2884, 4
        %v4656 = vrot.slane %v2889, 4
        %v4657 = vrot.slane %v2892, 4
        %v4658 = vrot.slane %v2897, 4
        %v4659 = vrot.slane %v2900, 4
        %v4660 = vrot.slane %v2905, 4
        %v4661 = vrot.slane %v2908, 4
        %v4662 = vsel %vm2928, %v4660, %v4661
        %v4663 = vsel %vm2928, %v4659, %v4660
        %v4664 = vsel %vm2928, %v4658, %v4659
        %v4665 = vsel %vm2928, %v4657, %v4658
        %v4666 = vsel %vm2928, %v4656, %v4657
        %v4667 = vsel %vm2928, %v4655, %v4656
        %v4668 = vsel %vm2928, %v4654, %v4655
        %v4669 = vsel %vm2928, %v4653, %v4654
        %v4670 = vsel %vm2928, %v4652, %v4653
        %v4671 = vsel %vm2928, %v4651, %v4652
        %v4672 = vsel %vm2928, %v4650, %v4651
        %v4673 = vsel %vm2928, %v4649, %v4650
        %v4674 = vsel %vm2928, %v4648, %v4649
        %v4675 = vsel %vm2928, %v4647, %v4648
        %v4676 = vsel %vm2928, %v4646, %v4647
        %v4677 = vsel %vm2928, %v4645, %v4646
        %v4678 = vsel %vm2928, %v4644, %v4645
        %v4679 = vsel %vm2928, %v4643, %v4644
        %v4680 = vsel %vm2928, %v4642, %v4643
        %v4681 = vsel %vm2928, %v4641, %v4642
        %v4682 = vsel %vm2928, %v4640, %v4641
        %v4683 = vsel %vm2928, %v4639, %v4640
        %v4684 = vsel %vm2928, %v4638, %v4639
        %v4685 = vsel %vm2928, %v4637, %v4638
        %v4686 = vsel %vm2928, %v4636, %v4637
        %v4687 = vsel %vm2928, %v4635, %v4636
        %v4688 = vsel %vm2928, %v4634, %v4635
        %v4689 = vsel %vm2928, %v4633, %v4634
        %v4690 = vsel %vm2928, %v4632, %v4633
        %v4691 = vsel %vm2928, %v4631, %v4632
        %v4692 = vsel %vm2928, %v4630, %v4631
        %v4693 = vsel %vm2928, %v4661, %v4630
        %v4694 = vsel %vm4116, %v4667, 0.0
        %v4695 = vsel %vm4117, %v4666, 0.0
        %v4696 = vsel %vm4116, %v4665, 0.0
        %v4697 = vsel %vm4117, %v4664, 0.0
        %v4698 = vsel %vm4116, %v4663, 0.0
        %v4699 = vsel %vm4117, %v4662, 0.0
        %v4700 = vsel %vm4116, %v4693, 0.0
        %v4701 = vsel %vm4117, %v4692, 0.0
        %v4702 = vsel %vm4114, %v4691, 0.0
        %v4703 = vsel %vm4115, %v4690, 0.0
        %v4704 = vsel %vm4114, %v4689, 0.0
        %v4705 = vsel %vm4115, %v4688, 0.0
        %v4706 = vsel %vm4114, %v4687, 0.0
        %v4707 = vsel %vm4115, %v4686, 0.0
        %v4708 = vsel %vm4114, %v4685, 0.0
        %v4709 = vsel %vm4115, %v4684, 0.0
        %v4710 = vsel %vm4114, %v4683, 0.0
        %v4711 = vsel %vm4115, %v4682, 0.0
        %v4712 = vsel %vm4114, %v4681, 0.0
        %v4713 = vsel %vm4115, %v4680, 0.0
        %v4714 = vsel %vm4114, %v4679, 0.0
        %v4715 = vsel %vm4115, %v4678, 0.0
        %v4716 = vsel %vm4114, %v4677, 0.0
        %v4717 = vsel %vm4115, %v4676, 0.0
        %v4718 = vsel %vm4114, %v4675, 0.0
        %v4719 = vsel %vm4115, %v4674, 0.0
        %v4720 = vsel %vm4114, %v4673, 0.0
        %v4721 = vsel %vm4115, %v4672, 0.0
        %v4722 = vsel %vm4114, %v4671, 0.0
        %v4723 = vsel %vm4115, %v4670, 0.0
        %v4724 = vsel %vm4114, %v4669, 0.0
        %v4725 = vsel %vm4115, %v4668, 0.0
        %v4726 = vadd.f32 %v4598, %v4694
        %v4727 = vadd.f32 %v4599, %v4695
        %v4728 = vadd.f32 %v4600, %v4696
        %v4729 = vadd.f32 %v4601, %v4697
        %v4730 = vadd.f32 %v4602, %v4698
        %v4731 = vadd.f32 %v4603, %v4699
        %v4732 = vadd.f32 %v4604, %v4700
        %v4733 = vadd.f32 %v4605, %v4701
        %v4734 = vadd.f32 %v4606, %v4702
        %v4735 = vadd.f32 %v4607, %v4703
        %v4736 = vadd.f32 %v4608, %v4704
        %v4737 = vadd.f32 %v4609, %v4705
        %v4738 = vadd.f32 %v4610, %v4706
        %v4739 = vadd.f32 %v4611, %v4707
        %v4740 = vadd.f32 %v4612, %v4708
        %v4741 = vadd.f32 %v4613, %v4709
        %v4742 = vadd.f32 %v4614, %v4710
        %v4743 = vadd.f32 %v4615, %v4711
        %v4744 = vadd.f32 %v4616, %v4712
        %v4745 = vadd.f32 %v4617, %v4713
        %v4746 = vadd.f32 %v4618, %v4714
        %v4747 = vadd.f32 %v4619, %v4715
        %v4748 = vadd.f32 %v4620, %v4716
        %v4749 = vadd.f32 %v4621, %v4717
        %v4750 = vadd.f32 %v4622, %v4718
        %v4751 = vadd.f32 %v4623, %v4719
        %v4752 = vadd.f32 %v4624, %v4720
        %v4753 = vadd.f32 %v4625, %v4721
        %v4754 = vadd.f32 %v4626, %v4722
        %v4755 = vadd.f32 %v4627, %v4723
        %v4756 = vadd.f32 %v4628, %v4724
        %v4757 = vadd.f32 %v4629, %v4725
        %v4758 = vunpack.c.l.bf16 %v246
        %v4759 = vunpack.c.l.bf16 %v247
        %v4760 = vunpack.c.l.bf16 %v248
        %v4761 = vunpack.c.l.bf16 %v249
        %v4762 = vunpack.c.l.bf16 %v250
        %v4763 = vunpack.c.l.bf16 %v251
        %v4764 = vunpack.c.l.bf16 %v252
        %v4765 = vunpack.c.l.bf16 %v253
        %v4766 = vunpack.c.l.bf16 %v254
        %v4767 = vunpack.c.l.bf16 %v255
        %v4768 = vunpack.c.l.bf16 %v256
        %v4769 = vunpack.c.l.bf16 %v257
        %v4770 = vunpack.c.l.bf16 %v258
        %v4771 = vunpack.c.l.bf16 %v259
        %v4772 = vunpack.c.l.bf16 %v260
        %v4773 = vunpack.c.l.bf16 %v261
        %v4774 = vunpack.c.l.bf16 %v262
        %v4775 = vunpack.c.l.bf16 %v263
        %v4776 = vunpack.c.l.bf16 %v264
        %v4777 = vunpack.c.l.bf16 %v265
        %v4778 = vunpack.c.l.bf16 %v266
        %v4779 = vunpack.c.l.bf16 %v267
        %v4780 = vunpack.c.l.bf16 %v268
        %v4781 = vunpack.c.l.bf16 %v269
        %v4782 = vunpack.c.l.bf16 %v270
        %v4783 = vunpack.c.l.bf16 %v271
        %v4784 = vunpack.c.l.bf16 %v272
        %v4785 = vunpack.c.l.bf16 %v273
        %v4786 = vunpack.c.l.bf16 %v274
        %v4787 = vunpack.c.l.bf16 %v275
        %v4788 = vunpack.c.l.bf16 %v276
        %v4789 = vunpack.c.l.bf16 %v277
        %v4790 = vadd.f32 %v4758, %v4759
        %v4791 = vadd.f32 %v4790, %v4760
        %v4792 = vadd.f32 %v4791, %v4761
        %v4793 = vadd.f32 %v4792, %v4762
        %v4794 = vadd.f32 %v4793, %v4763
        %v4795 = vadd.f32 %v4794, %v4764
        %v4796 = vadd.f32 %v4795, %v4765
        %v4797 = vadd.f32 %v4796, %v4766
        %v4798 = vadd.f32 %v4797, %v4767
        %v4799 = vadd.f32 %v4798, %v4768
        %v4800 = vadd.f32 %v4799, %v4769
        %v4801 = vadd.f32 %v4800, %v4770
        %v4802 = vadd.f32 %v4801, %v4771
        %v4803 = vadd.f32 %v4802, %v4772
        %v4804 = vadd.f32 %v4803, %v4773
        %v4805 = vadd.f32 %v4804, %v4774
        %v4806 = vadd.f32 %v4805, %v4775
        %v4807 = vadd.f32 %v4806, %v4776
        %v4808 = vadd.f32 %v4807, %v4777
        %v4809 = vadd.f32 %v4808, %v4778
        %v4810 = vadd.f32 %v4809, %v4779
        %v4811 = vadd.f32 %v4810, %v4780
        %v4812 = vadd.f32 %v4811, %v4781
        %v4813 = vadd.f32 %v4812, %v4782
        %v4814 = vadd.f32 %v4813, %v4783
        %v4815 = vadd.f32 %v4814, %v4784
        %v4816 = vadd.f32 %v4815, %v4785
        %v4817 = vadd.f32 %v4816, %v4786
        %v4818 = vadd.f32 %v4817, %v4787
        %v4819 = vadd.f32 %v4818, %v4788
        %v4820 = vadd.f32 %v4819, %v4789
        %v4821 = vrot.slane %v4820, 4
        %v4822 = vadd.f32 %v4820, %v4821
        %v4823 = vrot.slane %v4822, 2
        %v4824 = vadd.f32 %v4822, %v4823
        %v4825 = vrot.slane %v4824, 1
        %v4826 = vadd.f32 %v4824, %v4825
        %v4827 = vrcp.pop 256.0
        %v4828 = vmul.f32 %v4826, %v4827
        %v4829 = vld [vmem:[#allocation7] sm:$0xff]
        %v4830 = vld [vmem:[#allocation7 + $0x8] sm:$0xff]
        %v4831 = vld [vmem:[#allocation7 + $0x10] sm:$0xff]
        %v4832 = vld [vmem:[#allocation7 + $0x18] sm:$0xff]
        %v4833 = vld [vmem:[#allocation7 + $0x20] sm:$0xff]
        %v4834 = vld [vmem:[#allocation7 + $0x28] sm:$0xff]
        %v4835 = vld [vmem:[#allocation7 + $0x30] sm:$0xff]
        %v4836 = vld [vmem:[#allocation7 + $0x38] sm:$0xff]
        %v4837 = vld [vmem:[#allocation7 + $0x40] sm:$0xff]
        %v4838 = vld [vmem:[#allocation7 + $0x48] sm:$0xff]
        %v4839 = vld [vmem:[#allocation7 + $0x50] sm:$0xff]
        %v4840 = vld [vmem:[#allocation7 + $0x58] sm:$0xff]
        %v4841 = vld [vmem:[#allocation7 + $0x60] sm:$0xff]
        %v4842 = vld [vmem:[#allocation7 + $0x68] sm:$0xff]
        %v4843 = vld [vmem:[#allocation7 + $0x70] sm:$0xff]
        %v4844 = vld [vmem:[#allocation7 + $0x78] sm:$0xff]
        %v4845 = vld [vmem:[%s3] sm:$0x1]
        %4846 = vmatprep.subr.mxu0 0.0
        %4847 = vmatpush1.msra.mxu0 %v4844
        %4848 = vmatprep.subr.mxu0 0.0
        %4849 = vmatpush1.msra.mxu0 %v4843
        %4850 = vmatprep.subr.mxu0 0.0
        %4851 = vmatpush1.msra.mxu0 %v4842
        %4852 = vmatprep.subr.mxu0 0.0
        %4853 = vmatpush1.msra.mxu0 %v4841
        %4854 = vmatprep.subr.mxu0 0.0
        %4855 = vmatpush1.msra.mxu0 %v4840
        %4856 = vmatprep.subr.mxu0 0.0
        %4857 = vmatpush1.msra.mxu0 %v4839
        %4858 = vmatprep.subr.mxu0 0.0
        %4859 = vmatpush1.msra.mxu0 %v4838
        %4860 = vmatprep.subr.mxu0 0.0
        %4861 = vmatpush1.msra.mxu0 %v4837
        %4862 = vmatprep.subr.mxu0 0.0
        %4863 = vmatpush1.msra.mxu0 %v4836
        %4864 = vmatprep.subr.mxu0 0.0
        %4865 = vmatpush1.msra.mxu0 %v4835
        %4866 = vmatprep.subr.mxu0 0.0
        %4867 = vmatpush1.msra.mxu0 %v4834
        %4868 = vmatprep.subr.mxu0 0.0
        %4869 = vmatpush1.msra.mxu0 %v4833
        %4870 = vmatprep.subr.mxu0 0.0
        %4871 = vmatpush1.msra.mxu0 %v4832
        %4872 = vmatprep.subr.mxu0 0.0
        %4873 = vmatpush1.msra.mxu0 %v4831
        %4874 = vmatprep.subr.mxu0 0.0
        %4875 = vmatpush1.msra.mxu0 %v4830
        %4876 = vmatprep.subr.mxu0 0.0
        %4877 = vmatpush1.msra.mxu0 %v4829
        %4878 = vmatprep.subr.mxu0 0.0
        %4879 = vmatpush2.msra.mxu0 0.0
        %4880 = vmatprep.subr.mxu0 0.0
        %4881 = vmatpush2.msra.mxu0 0.0
        %4882 = vmatprep.subr.mxu0 0.0
        %4883 = vmatpush2.msra.mxu0 0.0
        %4884 = vmatprep.subr.mxu0 0.0
        %4885 = vmatpush2.msra.mxu0 0.0
        %4886 = vmatprep.subr.mxu0 0.0
        %4887 = vmatpush2.msra.mxu0 0.0
        %4888 = vmatprep.subr.mxu0 0.0
        %4889 = vmatpush2.msra.mxu0 0.0
        %4890 = vmatprep.subr.mxu0 0.0
        %4891 = vmatpush2.msra.mxu0 0.0
        %4892 = vmatprep.subr.mxu0 0.0
        %4893 = vmatpush2.msra.mxu0 0.0
        %4894 = vmatprep.subr.mxu0 0.0
        %4895 = vmatpush2.msra.mxu0 0.0
        %4896 = vmatprep.subr.mxu0 0.0
        %4897 = vmatpush2.msra.mxu0 0.0
        %4898 = vmatprep.subr.mxu0 0.0
        %4899 = vmatpush2.msra.mxu0 0.0
        %4900 = vmatprep.subr.mxu0 0.0
        %4901 = vmatpush2.msra.mxu0 0.0
        %4902 = vmatprep.subr.mxu0 0.0
        %4903 = vmatpush2.msra.mxu0 0.0
        %4904 = vmatprep.subr.mxu0 0.0
        %4905 = vmatpush2.msra.mxu0 0.0
        %4906 = vmatprep.subr.mxu0 0.0
        %4907 = vmatpush2.msra.mxu0 0.0
        %4908 = vmatprep.subr.mxu0 0.0
        %4909 = vmatpush2.msra.mxu0 0.0
        %4910 = vmatprep.mubr.f32.mxu0 0.0
        %4911 = vmatmul.mubr.f32.gmra.mxu0 %v4828
        %v4912 = vpop.f32.mrf.mxu0
        %v4913 = vadd.f32 %v4845, %v4912
        %v4914 = vpop.f32.mrf.mxu0
        %4915 = vdwg.mxu0
        %v4916 = vlaneseq
        %v4917 = vshrl.u32 %v4916, 7
        %v4918 = vsub.s32 0, %v4917
        %v4919 = vrot.slane %v4913, %v4918
        %v4920 = vadd.f32 %v4726, %v4919
        %v4921 = vadd.f32 %v4727, %v4919
        %v4922 = vadd.f32 %v4728, %v4919
        %v4923 = vadd.f32 %v4729, %v4919
        %v4924 = vadd.f32 %v4730, %v4919
        %v4925 = vadd.f32 %v4731, %v4919
        %v4926 = vadd.f32 %v4732, %v4919
        %v4927 = vadd.f32 %v4733, %v4919
        %v4928 = vadd.f32 %v4734, %v4919
        %v4929 = vadd.f32 %v4735, %v4919
        %v4930 = vadd.f32 %v4736, %v4919
        %v4931 = vadd.f32 %v4737, %v4919
        %v4932 = vadd.f32 %v4738, %v4919
        %v4933 = vadd.f32 %v4739, %v4919
        %v4934 = vadd.f32 %v4740, %v4919
        %v4935 = vadd.f32 %v4741, %v4919
        %v4936 = vadd.f32 %v4742, %v4919
        %v4937 = vadd.f32 %v4743, %v4919
        %v4938 = vadd.f32 %v4744, %v4919
        %v4939 = vadd.f32 %v4745, %v4919
        %v4940 = vadd.f32 %v4746, %v4919
        %v4941 = vadd.f32 %v4747, %v4919
        %v4942 = vadd.f32 %v4748, %v4919
        %v4943 = vadd.f32 %v4749, %v4919
        %v4944 = vadd.f32 %v4750, %v4919
        %v4945 = vadd.f32 %v4751, %v4919
        %v4946 = vadd.f32 %v4752, %v4919
        %v4947 = vadd.f32 %v4753, %v4919
        %v4948 = vadd.f32 %v4754, %v4919
        %v4949 = vadd.f32 %v4755, %v4919
        %v4950 = vadd.f32 %v4756, %v4919
        %v4951 = vadd.f32 %v4757, %v4919
        %4952 = vst [vmem:[%s244] sm:$0xff] %v4920
        %4953 = vst [vmem:[%s244 + $0x8] sm:$0xff] %v4921
        %4954 = vst [vmem:[%s244 + $0x10] sm:$0xff] %v4922
        %4955 = vst [vmem:[%s244 + $0x18] sm:$0xff] %v4923
        %4956 = vst [vmem:[%s244 + $0x20] sm:$0xff] %v4924
        %4957 = vst [vmem:[%s244 + $0x28] sm:$0xff] %v4925
        %4958 = vst [vmem:[%s244 + $0x30] sm:$0xff] %v4926
        %4959 = vst [vmem:[%s244 + $0x38] sm:$0xff] %v4927
        %4960 = vst [vmem:[%s244 + $0x40] sm:$0xff] %v4928
        %4961 = vst [vmem:[%s244 + $0x48] sm:$0xff] %v4929
        %4962 = vst [vmem:[%s244 + $0x50] sm:$0xff] %v4930
        %4963 = vst [vmem:[%s244 + $0x58] sm:$0xff] %v4931
        %4964 = vst [vmem:[%s244 + $0x60] sm:$0xff] %v4932
        %4965 = vst [vmem:[%s244 + $0x68] sm:$0xff] %v4933
        %4966 = vst [vmem:[%s244 + $0x70] sm:$0xff] %v4934
        %4967 = vst [vmem:[%s244 + $0x78] sm:$0xff] %v4935
        %4968 = vst [vmem:[%s244 + $0x80] sm:$0xff] %v4936
        %4969 = vst [vmem:[%s244 + $0x88] sm:$0xff] %v4937
        %4970 = vst [vmem:[%s244 + $0x90] sm:$0xff] %v4938
        %4971 = vst [vmem:[%s244 + $0x98] sm:$0xff] %v4939
        %4972 = vst [vmem:[%s244 + $0xa0] sm:$0xff] %v4940
        %4973 = vst [vmem:[%s244 + $0xa8] sm:$0xff] %v4941
        %4974 = vst [vmem:[%s244 + $0xb0] sm:$0xff] %v4942
        %4975 = vst [vmem:[%s244 + $0xb8] sm:$0xff] %v4943
        %4976 = vst [vmem:[%s244 + $0xc0] sm:$0xff] %v4944
        %4977 = vst [vmem:[%s244 + $0xc8] sm:$0xff] %v4945
        %4978 = vst [vmem:[%s244 + $0xd0] sm:$0xff] %v4946
        %4979 = vst [vmem:[%s244 + $0xd8] sm:$0xff] %v4947
        %4980 = vst [vmem:[%s244 + $0xe0] sm:$0xff] %v4948
        %4981 = vst [vmem:[%s244 + $0xe8] sm:$0xff] %v4949
        %4982 = vst [vmem:[%s244 + $0xf0] sm:$0xff] %v4950
        %4983 = vst [vmem:[%s244 + $0xf8] sm:$0xff] %v4951
        %s4984 = sand.u32 %s119, 1
        %s4985 = scalar_lea.sflag [#allocation4], %s4984
        %s4986 = sand.u32 %s119, 1
        %s4987 = smul.addr %s4986, 256
        %s4988 = scalar_lea.vmem [#allocation8], %s4987
        // Predicated region
        $region49: #{tpu_custom_call.1} parent=35 // pred_check
          %p4989 = pneg %p129
        $region50: #{tpu_custom_call.1} parent=35 // pred_check_branch
          %4991 = sbr.rel (%p4989) target = $region52
        $region51: #{tpu_custom_call.1} parent=35 // pred_region
          %s4993 = ssub.s32 4096, 4096
          %4994 = vsyncadd %s4985, %s4993
          %s4995 = smul.addr %s22, 32
          %s4996 = smul.addr %s4995, 128
          %s4997 = scalar_lea.hbm %s4, %s4996
          %s4998 = sshll.u32 %s4988, 4
          %s4999 = int_to_ptr.vmem [resolvable:$true] %s4998
          %5004 = dma.vmem_to_hbm [thread:$0]  %s4999, 4096, %s4997, %s4985, 128, 128, 8
        $region52: #{tpu_custom_call.1} parent=35 // pred_fallthru
          _
      $region36: #{tpu_custom_call.1} parent=5 // pred_fallthru
        _
      %p5005 = scmp.le.s32.totalorder 2, %s17
      // Predicated region
      $region53: #{tpu_custom_call.1} parent=5 // pred_check
        %p5006 = pneg %p5005
      $region54: #{tpu_custom_call.1} parent=5 // pred_check_branch
        %5008 = sbr.rel (%p5006) target = $region56
      $region55: #{tpu_custom_call.1} parent=5 // pred_region
        %s5009 = ssub.s32 %s17, 2
        // Predicated region
        $region57: #{tpu_custom_call.1} parent=55 // pred_check
          %p5010 = pneg %p135
        $region58: #{tpu_custom_call.1} parent=55 // pred_check_branch
          %5012 = sbr.rel (%p5010) target = $region60
        $region59: #{tpu_custom_call.1} parent=55 // pred_region
          %s5013 = sand.u32 %s120, 1
          %s5014 = scalar_lea.sflag [#allocation4], %s5013
          %s5015 = sand.u32 %s120, 1
          %s5016 = smul.addr %s5015, 256
          %s5017 = scalar_lea.vmem [#allocation8], %s5016
          %5018 = dma.done %s5014, 4096
        $region60: #{tpu_custom_call.1} parent=55 // pred_fallthru
          _
      $region56: #{tpu_custom_call.1} parent=5 // pred_fallthru
        _
    $region6: #{tpu_custom_call.1} parent=1 // loop_footer
      %s21 = sadd.s32 1, %s17
    $region7: #{tpu_custom_call.1} parent=1 // loop_footer_branch
      %16 = sbr.rel target = $region3
    $region8: #{tpu_custom_call.1} parent=1 // loop_exit
      _
    %5019 = vsyncpa [#allocation3], 1
    %s5020 = scalar_lea.sflag [#allocation3], 1
    %5021 = vsyncpa %s5020, 1
    %5022 = vsyncpa [#allocation6], 1
    %5023 = vsyncpa [#allocation4], 1
    %s5024 = scalar_lea.sflag [#allocation4], 1
    %5025 = vsyncpa %s5024, 1

</llo_original>
